<compile_context>
chip_gen: v5e
topology: v5e:2x2
jax: 0.10.0
libtpu: 0.0.40
codegen_flags: <defaults>
</compile_context>

<pallas_src>
import jax
import jax.numpy as jnp
from jax.experimental import pallas as pl
from jax.experimental.pallas import tpu as pltpu

IN_FEATS = 28 * 28          # 784
IN_PAD = 896                # 7 * 128 (lane-aligned K for layer 1)
HID = 512
OUT_FEATS = 10
OUT_PAD = 128               # lane-dense output width
TM_MAX = 1024               # max batch tile (amortizes per-grid-step overhead)
VMEM_LIMIT_BYTES = 32 * 1024 * 1024


def _round_up(x, m):
    return ((x + m - 1) // m) * m


def _cdiv(a, b):
    return -(-a // b)


def _batch_tiling(n):
    """Pick (tm, n_pad, num_tiles) for the batch dimension.

    - tm is a multiple of 16 (safe for bf16 sublane packing) and <= TM_MAX.
    - Tiles are balanced so total row padding stays small for awkward n.
    - For n >= 16 we force an even number (>= 2) of tiles so the "parallel"
      batch grid keeps both TensorCores busy on v7x (no-op on v5e/v6e).
    """
    n16 = max(16, _round_up(n, 16))
    num_tiles = _cdiv(n16, TM_MAX)
    if n >= 16:
        num_tiles = max(num_tiles, 2)
        if num_tiles % 2:
            num_tiles += 1
    tm = _round_up(_cdiv(n16, num_tiles), 16)
    n_pad = tm * num_tiles
    return tm, n_pad, num_tiles


def mlp_kernel(x_ref, w1_ref, b1_ref, w2_ref, b2_ref, w3_ref, b3_ref, o_ref):
    # Layer 1: Linear(784 -> 512), K padded to 896. bf16 MXU, f32 accumulation.
    h1 = jnp.dot(x_ref[...], w1_ref[...], preferred_element_type=jnp.float32)
    # ReLU epilogue; store intermediate at bf16 (halves VMEM / ld-st traffic).
    h1 = jnp.maximum(h1 + b1_ref[...], 0.0).astype(jnp.bfloat16)

    # Layer 2: Linear(512 -> 512) + ReLU.
    h2 = jnp.dot(h1, w2_ref[...], preferred_element_type=jnp.float32)
    h2 = jnp.maximum(h2 + b2_ref[...], 0.0).astype(jnp.bfloat16)

    # Layer 3: Linear(512 -> 10), N padded to 128 for unmasked lane-dense stores.
    logits = jnp.dot(h2, w3_ref[...], preferred_element_type=jnp.float32)
    o_ref[...] = (logits + b3_ref[...]).astype(o_ref.dtype)


def _make_call(tm, n_pad, single_buffer_weights):
    const = lambda i: (0, 0)

    if single_buffer_weights:
        def const_spec(shape):
            # Constant index_map -> block never changes; one buffer is enough.
            return pl.BlockSpec(shape, const, pipeline_mode=pl.Buffered(1))
    else:
        def const_spec(shape):
            return pl.BlockSpec(shape, const)

    return pl.pallas_call(
        mlp_kernel,
        out_shape=jax.ShapeDtypeStruct((n_pad, OUT_PAD), jnp.float32),
        grid=(n_pad // tm,),
        in_specs=[
            # x tile streams with the grid (double-buffered by Pallas).
            pl.BlockSpec((tm, IN_PAD), lambda i: (i, 0)),
            # Weights / biases: fetched once, VMEM-resident across the grid.
            const_spec((IN_PAD, HID)),    # w1
            const_spec((1, HID)),         # b1
            const_spec((HID, HID)),       # w2
            const_spec((1, HID)),         # b2
            const_spec((HID, OUT_PAD)),   # w3
            const_spec((1, OUT_PAD)),     # b3
        ],
        out_specs=pl.BlockSpec((tm, OUT_PAD), lambda i: (i, 0)),
        compiler_params=pltpu.CompilerParams(
            dimension_semantics=("parallel",),   # batch grid -> both TCs on v7x
            vmem_limit_bytes=VMEM_LIMIT_BYTES,
        ),
    )


def neural_network_forward(x_nchw, params):
    """x_nchw: (N, 1, 28, 28) f32. Returns (N, 10) f32 logits."""
    w1, b1, w2, b2, w3, b3 = params
    n = x_nchw.shape[0]
    x = x_nchw.reshape(n, -1).astype(jnp.float32)  # nn.Flatten(): (N, 784)

    # --- wrapper-side layout plumbing (free) -------------------------------
    # Pad K: 784 -> 896 (zero cols in x / zero rows in w1), last-layer N: 10 -> 128.
    x_p = jnp.pad(x, ((0, 0), (0, IN_PAD - IN_FEATS)))
    w1_p = jnp.pad(w1, ((0, IN_PAD - IN_FEATS), (0, 0)))
    w3_p = jnp.pad(w3, ((0, 0), (0, OUT_PAD - OUT_FEATS)))
    b3_p = jnp.pad(b3, ((0, 0), (0, OUT_PAD - OUT_FEATS)))

    # bf16 weights/activations (native MXU dtype, halves HBM traffic); f32 biases.
    x_b = x_p.astype(jnp.bfloat16)
    w1_b = w1_p.astype(jnp.bfloat16)
    w2_b = w2.astype(jnp.bfloat16)
    w3_b = w3_p.astype(jnp.bfloat16)
    b1_f = b1.astype(jnp.float32)
    b2_f = b2.astype(jnp.float32)
    b3_f = b3_p.astype(jnp.float32)

    tm, n_pad, _ = _batch_tiling(n)
    if n_pad != n:
        x_b = jnp.pad(x_b, ((0, n_pad - n), (0, 0)))

    args = (x_b, w1_b, b1_f, w2_b, b2_f, w3_b, b3_f)
    try:
        out = _make_call(tm, n_pad, single_buffer_weights=True)(*args)
    except Exception:
        # Fallback if this Pallas build rejects pl.Buffered(1) on pallas_call;
        # only costs an extra (unused) second buffer for the constant blocks.
        out = _make_call(tm, n_pad, single_buffer_weights=False)(*args)

    return out[:n, :OUT_FEATS]


def init_params(key):
    """Deterministic init matching nn.Linear shapes (Kaiming-uniform-like)."""
    k1, k2, k3, k4, k5, k6 = jax.random.split(key, 6)

    def linear_init(kw, kb, fan_in, fan_out):
        bound = 1.0 / jnp.sqrt(fan_in)
        # Stored as (in, out) so the kernel does x @ W (== torch x @ W.T).
        w = jax.random.uniform(kw, (fan_in, fan_out), jnp.float32, -bound, bound)
        b = jax.random.uniform(kb, (1, fan_out), jnp.float32, -bound, bound)
        return w, b

    w1, b1 = linear_init(k1, k2, IN_FEATS, HID)
    w2, b2 = linear_init(k3, k4, HID, HID)
    w3, b3 = linear_init(k5, k6, HID, OUT_FEATS)
    return (w1, b1, w2, b2, w3, b3)


if __name__ == "__main__":
    key = jax.random.PRNGKey(0)
    kp, kx = jax.random.split(key)

    params = init_params(kp)
    # Small batch of MNIST-shaped NCHW images: (N=8, C=1, H=28, W=28)
    x = jax.random.normal(kx, (8, 1, 28, 28), dtype=jnp.float32)

    logits = neural_network_forward(x, params)
    logits = jax.block_until_ready(logits)

    # Reference forward pass in pure JAX (f32). bf16 weights/activations in the
    # kernel introduce ~0.4% relative error, so compare with a loose tolerance.
    xf = x.reshape(x.shape[0], -1)
    w1, b1, w2, b2, w3, b3 = params
    h1 = jnp.maximum(xf @ w1 + b1, 0.0)
    h2 = jnp.maximum(h1 @ w2 + b2, 0.0)
    ref = h2 @ w3 + b3

    assert logits.shape == (8, 10)
    assert jnp.allclose(logits, ref, atol=5e-2, rtol=5e-2), (
        float(jnp.max(jnp.abs(logits - ref))))

    print("KERNEL_OK")
</pallas_src>

<mosaic_0001>
module attributes {stable_mosaic.version = 11 : i64} {
  func.func @mlp_kernel(%arg0: i32, %arg1: memref<16x896xbf16, #tpu.memory_space<vmem>>, %arg2: memref<896x512xbf16, #tpu.memory_space<vmem>>, %arg3: memref<1x512xf32, #tpu.memory_space<vmem>>, %arg4: memref<512x512xbf16, #tpu.memory_space<vmem>>, %arg5: memref<1x512xf32, #tpu.memory_space<vmem>>, %arg6: memref<512x128xbf16, #tpu.memory_space<vmem>>, %arg7: memref<1x128xf32, #tpu.memory_space<vmem>>, %arg8: memref<16x128xf32, #tpu.memory_space<vmem>>) attributes {dimension_semantics = [#tpu.dimension_semantics<parallel>], iteration_bounds = array<i64: 1>, scalar_prefetch = 0 : i64, scratch_operands = 0 : i64, tpu.core_type = #tpu.core_type<tc>, window_params = [{transform_indices = @transform_0, window_bounds = array<i64: 16, 896>}, {pipeline_mode = #tpu.pipeline_mode<synchronous>, transform_indices = @transform_1, window_bounds = array<i64: 896, 512>}, {pipeline_mode = #tpu.pipeline_mode<synchronous>, transform_indices = @transform_2, window_bounds = array<i64: 1, 512>}, {pipeline_mode = #tpu.pipeline_mode<synchronous>, transform_indices = @transform_3, window_bounds = array<i64: 512, 512>}, {pipeline_mode = #tpu.pipeline_mode<synchronous>, transform_indices = @transform_4, window_bounds = array<i64: 1, 512>}, {pipeline_mode = #tpu.pipeline_mode<synchronous>, transform_indices = @transform_5, window_bounds = array<i64: 512, 128>}, {pipeline_mode = #tpu.pipeline_mode<synchronous>, transform_indices = @transform_6, window_bounds = array<i64: 1, 128>}, {transform_indices = @transform_7, window_bounds = array<i64: 16, 128>}]} {
    %c0 = arith.constant 0 : index
    %c0_0 = arith.constant 0 : index
    %0 = vector.load %arg1[%c0, %c0_0] : memref<16x896xbf16, #tpu.memory_space<vmem>>, vector<16x896xbf16>
    %c0_1 = arith.constant 0 : index
    %c0_2 = arith.constant 0 : index
    %1 = vector.load %arg2[%c0_1, %c0_2] : memref<896x512xbf16, #tpu.memory_space<vmem>>, vector<896x512xbf16>
    %cst = arith.constant dense<0.000000e+00> : vector<16x512xf32>
    %2 = tpu.matmul %0, %1, %cst {dimension_numbers = #tpu.dot_dimension_numbers<[1], [0], [0], [1], [0, 0, 1, 1], [], []>} : vector<16x896xbf16>, vector<896x512xbf16>, vector<16x512xf32> -> vector<16x512xf32>
    %c0_3 = arith.constant 0 : index
    %c0_4 = arith.constant 0 : index
    %3 = vector.load %arg3[%c0_3, %c0_4] : memref<1x512xf32, #tpu.memory_space<vmem>>, vector<1x512xf32>
    %4 = vector.broadcast %3 : vector<1x512xf32> to vector<16x512xf32>
    %5 = arith.addf %2, %4 : vector<16x512xf32>
    %cst_5 = arith.constant 0.000000e+00 : f32
    %6 = vector.broadcast %cst_5 : f32 to vector<16x512xf32>
    %7 = arith.maximumf %5, %6 : vector<16x512xf32>
    %8 = arith.truncf %7 : vector<16x512xf32> to vector<16x512xbf16>
    %c0_6 = arith.constant 0 : index
    %c0_7 = arith.constant 0 : index
    %9 = vector.load %arg4[%c0_6, %c0_7] : memref<512x512xbf16, #tpu.memory_space<vmem>>, vector<512x512xbf16>
    %cst_8 = arith.constant dense<0.000000e+00> : vector<16x512xf32>
    %10 = tpu.matmul %8, %9, %cst_8 {dimension_numbers = #tpu.dot_dimension_numbers<[1], [0], [0], [1], [0, 0, 1, 1], [], []>} : vector<16x512xbf16>, vector<512x512xbf16>, vector<16x512xf32> -> vector<16x512xf32>
    %c0_9 = arith.constant 0 : index
    %c0_10 = arith.constant 0 : index
    %11 = vector.load %arg5[%c0_9, %c0_10] : memref<1x512xf32, #tpu.memory_space<vmem>>, vector<1x512xf32>
    %12 = vector.broadcast %11 : vector<1x512xf32> to vector<16x512xf32>
    %13 = arith.addf %10, %12 : vector<16x512xf32>
    %cst_11 = arith.constant 0.000000e+00 : f32
    %14 = vector.broadcast %cst_11 : f32 to vector<16x512xf32>
    %15 = arith.maximumf %13, %14 : vector<16x512xf32>
    %16 = arith.truncf %15 : vector<16x512xf32> to vector<16x512xbf16>
    %c0_12 = arith.constant 0 : index
    %c0_13 = arith.constant 0 : index
    %17 = vector.load %arg6[%c0_12, %c0_13] : memref<512x128xbf16, #tpu.memory_space<vmem>>, vector<512x128xbf16>
    %cst_14 = arith.constant dense<0.000000e+00> : vector<16x128xf32>
    %18 = tpu.matmul %16, %17, %cst_14 {dimension_numbers = #tpu.dot_dimension_numbers<[1], [0], [0], [1], [0, 0, 1, 1], [], []>} : vector<16x512xbf16>, vector<512x128xbf16>, vector<16x128xf32> -> vector<16x128xf32>
    %c0_15 = arith.constant 0 : index
    %c0_16 = arith.constant 0 : index
    %19 = vector.load %arg7[%c0_15, %c0_16] : memref<1x128xf32, #tpu.memory_space<vmem>>, vector<1x128xf32>
    %20 = vector.broadcast %19 : vector<1x128xf32> to vector<16x128xf32>
    %21 = arith.addf %18, %20 : vector<16x128xf32>
    %c0_17 = arith.constant 0 : index
    %c0_18 = arith.constant 0 : index
    %22 = vector.load %arg8[%c0_17, %c0_18] : memref<16x128xf32, #tpu.memory_space<vmem>>, vector<16x128xf32>
    tpu.vector_store %arg8[%c0_17, %c0_18], %21 {strides = array<i32>} : memref<16x128xf32, #tpu.memory_space<vmem>>, vector<16x128xf32>,
    return
  }
  func.func @transform_0(%arg0: i32) -> (i32, i32) {
    %c0_i32 = arith.constant 0 : i32
    %c0_i32_0 = arith.constant 0 : i32
    return %arg0, %c0_i32 : i32, i32
  }
  func.func @transform_1(%arg0: i32) -> (i32, i32) {
    %c0_i32 = arith.constant 0 : i32
    %c0_i32_0 = arith.constant 0 : i32
    %c0_i32_1 = arith.constant 0 : i32
    return %c0_i32, %c0_i32_0 : i32, i32
  }
  func.func @transform_2(%arg0: i32) -> (i32, i32) {
    %c0_i32 = arith.constant 0 : i32
    %c0_i32_0 = arith.constant 0 : i32
    %c0_i32_1 = arith.constant 0 : i32
    return %c0_i32, %c0_i32_0 : i32, i32
  }
  func.func @transform_3(%arg0: i32) -> (i32, i32) {
    %c0_i32 = arith.constant 0 : i32
    %c0_i32_0 = arith.constant 0 : i32
    %c0_i32_1 = arith.constant 0 : i32
    return %c0_i32, %c0_i32_0 : i32, i32
  }
  func.func @transform_4(%arg0: i32) -> (i32, i32) {
    %c0_i32 = arith.constant 0 : i32
    %c0_i32_0 = arith.constant 0 : i32
    %c0_i32_1 = arith.constant 0 : i32
    return %c0_i32, %c0_i32_0 : i32, i32
  }
  func.func @transform_5(%arg0: i32) -> (i32, i32) {
    %c0_i32 = arith.constant 0 : i32
    %c0_i32_0 = arith.constant 0 : i32
    %c0_i32_1 = arith.constant 0 : i32
    return %c0_i32, %c0_i32_0 : i32, i32
  }
  func.func @transform_6(%arg0: i32) -> (i32, i32) {
    %c0_i32 = arith.constant 0 : i32
    %c0_i32_0 = arith.constant 0 : i32
    %c0_i32_1 = arith.constant 0 : i32
    return %c0_i32, %c0_i32_0 : i32, i32
  }
  func.func @transform_7(%arg0: i32) -> (i32, i32) {
    %c0_i32 = arith.constant 0 : i32
    %c0_i32_0 = arith.constant 0 : i32
    return %arg0, %c0_i32 : i32, i32
  }
}

module attributes {stable_mosaic.version = 11 : i64} {
  func.func @mlp_kernel(%arg0: i32, %arg1: memref<16x896xbf16, #tpu.memory_space<vmem>>, %arg2: memref<896x512xbf16, #tpu.memory_space<vmem>>, %arg3: memref<1x512xf32, #tpu.memory_space<vmem>>, %arg4: memref<512x512xbf16, #tpu.memory_space<vmem>>, %arg5: memref<1x512xf32, #tpu.memory_space<vmem>>, %arg6: memref<512x128xbf16, #tpu.memory_space<vmem>>, %arg7: memref<1x128xf32, #tpu.memory_space<vmem>>, %arg8: memref<16x128xf32, #tpu.memory_space<vmem>>) attributes {dimension_semantics = [#tpu.dimension_semantics<parallel>], iteration_bounds = array<i64: 1>, scalar_prefetch = 0 : i64, scratch_operands = 0 : i64, tpu.core_type = #tpu.core_type<tc>, window_params = [{transform_indices = @transform_0, window_bounds = array<i64: 16, 896>}, {pipeline_mode = #tpu.pipeline_mode<synchronous>, transform_indices = @transform_1, window_bounds = array<i64: 896, 512>}, {pipeline_mode = #tpu.pipeline_mode<synchronous>, transform_indices = @transform_2, window_bounds = array<i64: 1, 512>}, {pipeline_mode = #tpu.pipeline_mode<synchronous>, transform_indices = @transform_3, window_bounds = array<i64: 512, 512>}, {pipeline_mode = #tpu.pipeline_mode<synchronous>, transform_indices = @transform_4, window_bounds = array<i64: 1, 512>}, {pipeline_mode = #tpu.pipeline_mode<synchronous>, transform_indices = @transform_5, window_bounds = array<i64: 512, 128>}, {pipeline_mode = #tpu.pipeline_mode<synchronous>, transform_indices = @transform_6, window_bounds = array<i64: 1, 128>}, {transform_indices = @transform_7, window_bounds = array<i64: 16, 128>}]} {
    %c0 = arith.constant 0 : index
    %c0_0 = arith.constant 0 : index
    %0 = vector.load %arg1[%c0, %c0_0] : memref<16x896xbf16, #tpu.memory_space<vmem>>, vector<16x896xbf16>
    %c0_1 = arith.constant 0 : index
    %c0_2 = arith.constant 0 : index
    %1 = vector.load %arg2[%c0_1, %c0_2] : memref<896x512xbf16, #tpu.memory_space<vmem>>, vector<896x512xbf16>
    %cst = arith.constant dense<0.000000e+00> : vector<16x512xf32>
    %2 = tpu.matmul %0, %1, %cst {dimension_numbers = #tpu.dot_dimension_numbers<[1], [0], [0], [1], [0, 0, 1, 1], [], []>} : vector<16x896xbf16>, vector<896x512xbf16>, vector<16x512xf32> -> vector<16x512xf32>
    %c0_3 = arith.constant 0 : index
    %c0_4 = arith.constant 0 : index
    %3 = vector.load %arg3[%c0_3, %c0_4] : memref<1x512xf32, #tpu.memory_space<vmem>>, vector<1x512xf32>
    %4 = vector.broadcast %3 : vector<1x512xf32> to vector<16x512xf32>
    %5 = arith.addf %2, %4 : vector<16x512xf32>
    %cst_5 = arith.constant 0.000000e+00 : f32
    %6 = vector.broadcast %cst_5 : f32 to vector<16x512xf32>
    %7 = arith.maximumf %5, %6 : vector<16x512xf32>
    %8 = arith.truncf %7 : vector<16x512xf32> to vector<16x512xbf16>
    %c0_6 = arith.constant 0 : index
    %c0_7 = arith.constant 0 : index
    %9 = vector.load %arg4[%c0_6, %c0_7] : memref<512x512xbf16, #tpu.memory_space<vmem>>, vector<512x512xbf16>
    %cst_8 = arith.constant dense<0.000000e+00> : vector<16x512xf32>
    %10 = tpu.matmul %8, %9, %cst_8 {dimension_numbers = #tpu.dot_dimension_numbers<[1], [0], [0], [1], [0, 0, 1, 1], [], []>} : vector<16x512xbf16>, vector<512x512xbf16>, vector<16x512xf32> -> vector<16x512xf32>
    %c0_9 = arith.constant 0 : index
    %c0_10 = arith.constant 0 : index
    %11 = vector.load %arg5[%c0_9, %c0_10] : memref<1x512xf32, #tpu.memory_space<vmem>>, vector<1x512xf32>
    %12 = vector.broadcast %11 : vector<1x512xf32> to vector<16x512xf32>
    %13 = arith.addf %10, %12 : vector<16x512xf32>
    %cst_11 = arith.constant 0.000000e+00 : f32
    %14 = vector.broadcast %cst_11 : f32 to vector<16x512xf32>
    %15 = arith.maximumf %13, %14 : vector<16x512xf32>
    %16 = arith.truncf %15 : vector<16x512xf32> to vector<16x512xbf16>
    %c0_12 = arith.constant 0 : index
    %c0_13 = arith.constant 0 : index
    %17 = vector.load %arg6[%c0_12, %c0_13] : memref<512x128xbf16, #tpu.memory_space<vmem>>, vector<512x128xbf16>
    %cst_14 = arith.constant dense<0.000000e+00> : vector<16x128xf32>
    %18 = tpu.matmul %16, %17, %cst_14 {dimension_numbers = #tpu.dot_dimension_numbers<[1], [0], [0], [1], [0, 0, 1, 1], [], []>} : vector<16x512xbf16>, vector<512x128xbf16>, vector<16x128xf32> -> vector<16x128xf32>
    %c0_15 = arith.constant 0 : index
    %c0_16 = arith.constant 0 : index
    %19 = vector.load %arg7[%c0_15, %c0_16] : memref<1x128xf32, #tpu.memory_space<vmem>>, vector<1x128xf32>
    %20 = vector.broadcast %19 : vector<1x128xf32> to vector<16x128xf32>
    %21 = arith.addf %18, %20 : vector<16x128xf32>
    %c0_17 = arith.constant 0 : index
    %c0_18 = arith.constant 0 : index
    %22 = vector.load %arg8[%c0_17, %c0_18] : memref<16x128xf32, #tpu.memory_space<vmem>>, vector<16x128xf32>
    tpu.vector_store %arg8[%c0_17, %c0_18], %21 {strides = array<i32>} : memref<16x128xf32, #tpu.memory_space<vmem>>, vector<16x128xf32>,
    return
  }
  func.func @transform_0(%arg0: i32) -> (i32, i32) {
    %c0_i32 = arith.constant 0 : i32
    %c0_i32_0 = arith.constant 0 : i32
    return %arg0, %c0_i32 : i32, i32
  }
  func.func @transform_1(%arg0: i32) -> (i32, i32) {
    %c0_i32 = arith.constant 0 : i32
    %c0_i32_0 = arith.constant 0 : i32
    %c0_i32_1 = arith.constant 0 : i32
    return %c0_i32, %c0_i32_0 : i32, i32
  }
  func.func @transform_2(%arg0: i32) -> (i32, i32) {
    %c0_i32 = arith.constant 0 : i32
    %c0_i32_0 = arith.constant 0 : i32
    %c0_i32_1 = arith.constant 0 : i32
    return %c0_i32, %c0_i32_0 : i32, i32
  }
  func.func @transform_3(%arg0: i32) -> (i32, i32) {
    %c0_i32 = arith.constant 0 : i32
    %c0_i32_0 = arith.constant 0 : i32
    %c0_i32_1 = arith.constant 0 : i32
    return %c0_i32, %c0_i32_0 : i32, i32
  }
  func.func @transform_4(%arg0: i32) -> (i32, i32) {
    %c0_i32 = arith.constant 0 : i32
    %c0_i32_0 = arith.constant 0 : i32
    %c0_i32_1 = arith.constant 0 : i32
    return %c0_i32, %c0_i32_0 : i32, i32
  }
  func.func @transform_5(%arg0: i32) -> (i32, i32) {
    %c0_i32 = arith.constant 0 : i32
    %c0_i32_0 = arith.constant 0 : i32
    %c0_i32_1 = arith.constant 0 : i32
    return %c0_i32, %c0_i32_0 : i32, i32
  }
  func.func @transform_6(%arg0: i32) -> (i32, i32) {
    %c0_i32 = arith.constant 0 : i32
    %c0_i32_0 = arith.constant 0 : i32
    %c0_i32_1 = arith.constant 0 : i32
    return %c0_i32, %c0_i32_0 : i32, i32
  }
  func.func @transform_7(%arg0: i32) -> (i32, i32) {
    %c0_i32 = arith.constant 0 : i32
    %c0_i32_0 = arith.constant 0 : i32
    return %arg0, %c0_i32 : i32, i32
  }
}

</mosaic_0001>

<llo_original>
// kernel: tpu_custom_call.1
$region0: #{tpu_custom_call.1}
  #allocation0 [shape = 'u32[]', space=smem, size = 0x4, offset = 0x4, fixed_abs, tag = 'smem constant byte address 0x4 - core index']
  #allocation1 [shape = 'u32[72,128]{1,0:T(1,128)}', space=vmem, size = 0x9000, scoped, tag = 'internal scratch']
  %s0 = inlined_call_operand.hbm [shape: bf16[16,896], index: 0, kind: input, shape index: {}]
  %s1 = inlined_call_operand.hbm [shape: bf16[896,512], index: 1, kind: input, shape index: {}]
  %s2 = inlined_call_operand.hbm [shape: f32[1,512], index: 2, kind: input, shape index: {}]
  %s3 = inlined_call_operand.hbm [shape: bf16[512,512], index: 3, kind: input, shape index: {}]
  %s4 = inlined_call_operand.hbm [shape: f32[1,512], index: 4, kind: input, shape index: {}]
  %s5 = inlined_call_operand.hbm [shape: bf16[512,128], index: 5, kind: input, shape index: {}]
  %s6 = inlined_call_operand.vmem [shape: f32[1,128], index: 6, kind: input, shape index: {}]
  %s7 = inlined_call_operand.hbm [shape: f32[16,128], index: 7, kind: output, shape index: {}]
  %s8 = sld [smem:[#allocation0]]
  $region62: #{tpu_custom_call.1} parent=0
    _
  %s10 = ssub.s32 1, %s8
  %s11 = scalar_select 0, %s10, %s8
  $region1: #{tpu_custom_call.1} parent=0
    #allocation2 [shape = 'u8[28672]{0}', space=vmem, size = 0x7000, scoped, tag = 'input window, operand 0, single buffered']
    #allocation3 [shape = 's32[1]{0}', space=sflag, size = 0x4, scoped, tag = 'scoped memory for tpu_custom_call.1']
    #allocation4 [shape = 's32[1]{0}', space=sflag, size = 0x4, scoped, tag = 'scoped memory for tpu_custom_call.1']
    #allocation5 [shape = 'u8[917504]{0}', space=vmem, size = 0xe0000, scoped, tag = 'input window, operand 1, single buffered']
    #allocation6 [shape = 's32[1]{0}', space=sflag, size = 0x4, scoped, tag = 'scoped memory for tpu_custom_call.1']
    #allocation7 [shape = 'u8[2048]{0}', space=vmem, size = 0x800, scoped, tag = 'input window, operand 2, single buffered']
    #allocation8 [shape = 'u8[524288]{0}', space=vmem, size = 0x80000, scoped, tag = 'input window, operand 3, single buffered']
    #allocation9 [shape = 's32[1]{0}', space=sflag, size = 0x4, scoped, tag = 'scoped memory for tpu_custom_call.1']
    #allocation10 [shape = 'u8[2048]{0}', space=vmem, size = 0x800, scoped, tag = 'input window, operand 4, single buffered']
    #allocation11 [shape = 'u8[131072]{0}', space=vmem, size = 0x20000, scoped, tag = 'input window, operand 5, single buffered']
    #allocation12 [shape = 's32[1]{0}', space=sflag, size = 0x4, scoped, tag = 'scoped memory for tpu_custom_call.1']
    #allocation13 [shape = 'u8[8192]{0}', space=vmem, size = 0x2000, scoped, tag = 'output window, operand 0, single buffered']
    %12 = vsyncpa [#allocation3], 0
    %13 = vsyncpa [#allocation6], 0
    %14 = vsyncpa [#allocation9], 0
    %15 = vsyncpa [#allocation12], 0
    %16 = vsyncpa [#allocation4], 0
    // Predicated region
    $region2: #{tpu_custom_call.1} parent=1 // pred_check
      _
    $region3: #{tpu_custom_call.1} parent=1 // pred_check_branch
      %18 = sbr.rel (0) target = $region5
    $region4: #{tpu_custom_call.1} parent=1 // pred_region
      %20 = vsyncadd [#allocation3], 0
      %s21 = sshll.u32 %s0, 4
      %s22 = int_to_ptr.hbm [resolvable:$true] %s21
      %s23 = sshll.u32 [#allocation2], 4
      %s24 = int_to_ptr.vmem [resolvable:$true] %s23
      %29 = dma.hbm_to_vmem [thread:$0]  %s22, 896, %s24, [#allocation3], 448, 448, 28
    $region5: #{tpu_custom_call.1} parent=1 // pred_fallthru
      _
    // Predicated region
    $region6: #{tpu_custom_call.1} parent=1 // pred_check
      _
    $region7: #{tpu_custom_call.1} parent=1 // pred_check_branch
      %31 = sbr.rel (0) target = $region9
    $region8: #{tpu_custom_call.1} parent=1 // pred_region
      %33 = vsyncadd [#allocation6], 0
      %s34 = sshll.u32 %s1, 4
      %s35 = int_to_ptr.hbm [resolvable:$true] %s34
      %s36 = sshll.u32 [#allocation5], 4
      %s37 = int_to_ptr.vmem [resolvable:$true] %s36
      %42 = dma.hbm_to_vmem [thread:$0]  %s35, 28672, %s37, [#allocation6], 256, 256, 16
    $region9: #{tpu_custom_call.1} parent=1 // pred_fallthru
      _
    // Predicated region
    $region10: #{tpu_custom_call.1} parent=1 // pred_check
      _
    $region11: #{tpu_custom_call.1} parent=1 // pred_check_branch
      %44 = sbr.rel (0) target = $region13
    $region12: #{tpu_custom_call.1} parent=1 // pred_region
      %46 = vsyncadd [#allocation6], 0
      %s48 = sshll.u32 %s2, 4
      %s49 = int_to_ptr.hbm [resolvable:$true] %s48
      %s50 = sshll.u32 [#allocation7], 4
      %s51 = int_to_ptr.vmem [resolvable:$true] %s50
      %53 = dma.hbm_to_vmem [thread:$0]  %s49, 64, %s51, [#allocation6]
    $region13: #{tpu_custom_call.1} parent=1 // pred_fallthru
      _
    // Predicated region
    $region14: #{tpu_custom_call.1} parent=1 // pred_check
      _
    $region15: #{tpu_custom_call.1} parent=1 // pred_check_branch
      %55 = sbr.rel (0) target = $region17
    $region16: #{tpu_custom_call.1} parent=1 // pred_region
      %57 = vsyncadd [#allocation9], 0
      %s58 = sshll.u32 %s3, 4
      %s59 = int_to_ptr.hbm [resolvable:$true] %s58
      %s60 = sshll.u32 [#allocation8], 4
      %s61 = int_to_ptr.vmem [resolvable:$true] %s60
      %66 = dma.hbm_to_vmem [thread:$0]  %s59, 16384, %s61, [#allocation9], 256, 256, 16
    $region17: #{tpu_custom_call.1} parent=1 // pred_fallthru
      _
    // Predicated region
    $region18: #{tpu_custom_call.1} parent=1 // pred_check
      _
    $region19: #{tpu_custom_call.1} parent=1 // pred_check_branch
      %68 = sbr.rel (0) target = $region21
    $region20: #{tpu_custom_call.1} parent=1 // pred_region
      %70 = vsyncadd [#allocation9], 0
      %s72 = sshll.u32 %s4, 4
      %s73 = int_to_ptr.hbm [resolvable:$true] %s72
      %s74 = sshll.u32 [#allocation10], 4
      %s75 = int_to_ptr.vmem [resolvable:$true] %s74
      %77 = dma.hbm_to_vmem [thread:$0]  %s73, 64, %s75, [#allocation9]
    $region21: #{tpu_custom_call.1} parent=1 // pred_fallthru
      _
    // Predicated region
    $region22: #{tpu_custom_call.1} parent=1 // pred_check
      _
    $region23: #{tpu_custom_call.1} parent=1 // pred_check_branch
      %79 = sbr.rel (0) target = $region25
    $region24: #{tpu_custom_call.1} parent=1 // pred_region
      %81 = vsyncadd [#allocation12], 0
      %s82 = sshll.u32 %s5, 4
      %s83 = int_to_ptr.hbm [resolvable:$true] %s82
      %s84 = sshll.u32 [#allocation11], 4
      %s85 = int_to_ptr.vmem [resolvable:$true] %s84
      %90 = dma.hbm_to_vmem [thread:$0]  %s83, 4096, %s85, [#allocation12], 64, 64, 4
    $region25: #{tpu_custom_call.1} parent=1 // pred_fallthru
      _
    // Predicated region
    $region26: #{tpu_custom_call.1} parent=1 // pred_check
      _
    $region27: #{tpu_custom_call.1} parent=1 // pred_check_branch
      %92 = sbr.rel (0) target = $region29
    $region28: #{tpu_custom_call.1} parent=1 // pred_region
      _
    $region29: #{tpu_custom_call.1} parent=1 // pred_fallthru
      _
    // Predicated region
    $region30: #{tpu_custom_call.1} parent=1 // pred_check
      _
    $region31: #{tpu_custom_call.1} parent=1 // pred_check_branch
      %94 = sbr.rel (0) target = $region33
    $region32: #{tpu_custom_call.1} parent=1 // pred_region
      %96 = dma.done [#allocation3], 896
    $region33: #{tpu_custom_call.1} parent=1 // pred_fallthru
      _
    // Predicated region
    $region34: #{tpu_custom_call.1} parent=1 // pred_check
      _
    $region35: #{tpu_custom_call.1} parent=1 // pred_check_branch
      %98 = sbr.rel (0) target = $region37
    $region36: #{tpu_custom_call.1} parent=1 // pred_region
      %100 = dma.done [#allocation6], 28672
    $region37: #{tpu_custom_call.1} parent=1 // pred_fallthru
      _
    // Predicated region
    $region38: #{tpu_custom_call.1} parent=1 // pred_check
      _
    $region39: #{tpu_custom_call.1} parent=1 // pred_check_branch
      %102 = sbr.rel (0) target = $region41
    $region40: #{tpu_custom_call.1} parent=1 // pred_region
      %104 = dma.done [#allocation6], 64
    $region41: #{tpu_custom_call.1} parent=1 // pred_fallthru
      _
    // Predicated region
    $region42: #{tpu_custom_call.1} parent=1 // pred_check
      _
    $region43: #{tpu_custom_call.1} parent=1 // pred_check_branch
      %106 = sbr.rel (0) target = $region45
    $region44: #{tpu_custom_call.1} parent=1 // pred_region
      %108 = dma.done [#allocation9], 16384
    $region45: #{tpu_custom_call.1} parent=1 // pred_fallthru
      _
    // Predicated region
    $region46: #{tpu_custom_call.1} parent=1 // pred_check
      _
    $region47: #{tpu_custom_call.1} parent=1 // pred_check_branch
      %110 = sbr.rel (0) target = $region49
    $region48: #{tpu_custom_call.1} parent=1 // pred_region
      %112 = dma.done [#allocation9], 64
    $region49: #{tpu_custom_call.1} parent=1 // pred_fallthru
      _
    // Predicated region
    $region50: #{tpu_custom_call.1} parent=1 // pred_check
      _
    $region51: #{tpu_custom_call.1} parent=1 // pred_check_branch
      %114 = sbr.rel (0) target = $region53
    $region52: #{tpu_custom_call.1} parent=1 // pred_region
      %116 = dma.done [#allocation12], 4096
    $region53: #{tpu_custom_call.1} parent=1 // pred_fallthru
      _
    %v117 = vld [vmem:[#allocation2] sm:$0xff]
    %v118 = vld [vmem:[#allocation2 + $0x8] sm:$0xff]
    %v119 = vld [vmem:[#allocation2 + $0x10] sm:$0xff]
    %v120 = vld [vmem:[#allocation2 + $0x18] sm:$0xf]
    %v121 = vld [vmem:[#allocation2 + $0x1c] sm:$0xff]
    %v122 = vld [vmem:[#allocation2 + $0x24] sm:$0xff]
    %v123 = vld [vmem:[#allocation2 + $0x2c] sm:$0xff]
    %v124 = vld [vmem:[#allocation2 + $0x34] sm:$0xf]
    %v125 = vld [vmem:[#allocation5] sm:$0xff]
    %v126 = vld [vmem:[#allocation5 + $0x8] sm:$0xff]
    %v127 = vld [vmem:[#allocation5 + $0x10] sm:$0xff]
    %v128 = vld [vmem:[#allocation5 + $0x18] sm:$0xff]
    %v129 = vld [vmem:[#allocation5 + $0x20] sm:$0xff]
    %v130 = vld [vmem:[#allocation5 + $0x28] sm:$0xff]
    %v131 = vld [vmem:[#allocation5 + $0x30] sm:$0xff]
    %v132 = vld [vmem:[#allocation5 + $0x38] sm:$0xff]
    %v133 = vld [vmem:[#allocation5 + $0x40] sm:$0xff]
    %v134 = vld [vmem:[#allocation5 + $0x48] sm:$0xff]
    %v135 = vld [vmem:[#allocation5 + $0x50] sm:$0xff]
    %v136 = vld [vmem:[#allocation5 + $0x58] sm:$0xff]
    %v137 = vld [vmem:[#allocation5 + $0x60] sm:$0xff]
    %v138 = vld [vmem:[#allocation5 + $0x68] sm:$0xff]
    %v139 = vld [vmem:[#allocation5 + $0x70] sm:$0xff]
    %v140 = vld [vmem:[#allocation5 + $0x78] sm:$0xff]
    %v141 = vld [vmem:[#allocation5 + $0x80] sm:$0xff]
    %v142 = vld [vmem:[#allocation5 + $0x88] sm:$0xff]
    %v143 = vld [vmem:[#allocation5 + $0x90] sm:$0xff]
    %v144 = vld [vmem:[#allocation5 + $0x98] sm:$0xff]
    %v145 = vld [vmem:[#allocation5 + $0xa0] sm:$0xff]
    %v146 = vld [vmem:[#allocation5 + $0xa8] sm:$0xff]
    %v147 = vld [vmem:[#allocation5 + $0xb0] sm:$0xff]
    %v148 = vld [vmem:[#allocation5 + $0xb8] sm:$0xff]
    %v149 = vld [vmem:[#allocation5 + $0xc0] sm:$0xff]
    %v150 = vld [vmem:[#allocation5 + $0xc8] sm:$0xff]
    %v151 = vld [vmem:[#allocation5 + $0xd0] sm:$0xff]
    %v152 = vld [vmem:[#allocation5 + $0xd8] sm:$0xff]
    %v153 = vld [vmem:[#allocation5 + $0xe0] sm:$0xff]
    %v154 = vld [vmem:[#allocation5 + $0xe8] sm:$0xff]
    %v155 = vld [vmem:[#allocation5 + $0xf0] sm:$0xff]
    %v156 = vld [vmem:[#allocation5 + $0xf8] sm:$0xff]
    %v157 = vld [vmem:[#allocation5 + $0x100] sm:$0xff]
    %v158 = vld [vmem:[#allocation5 + $0x108] sm:$0xff]
    %v159 = vld [vmem:[#allocation5 + $0x110] sm:$0xff]
    %v160 = vld [vmem:[#allocation5 + $0x118] sm:$0xff]
    %v161 = vld [vmem:[#allocation5 + $0x120] sm:$0xff]
    %v162 = vld [vmem:[#allocation5 + $0x128] sm:$0xff]
    %v163 = vld [vmem:[#allocation5 + $0x130] sm:$0xff]
    %v164 = vld [vmem:[#allocation5 + $0x138] sm:$0xff]
    %v165 = vld [vmem:[#allocation5 + $0x140] sm:$0xff]
    %v166 = vld [vmem:[#allocation5 + $0x148] sm:$0xff]
    %v167 = vld [vmem:[#allocation5 + $0x150] sm:$0xff]
    %v168 = vld [vmem:[#allocation5 + $0x158] sm:$0xff]
    %v169 = vld [vmem:[#allocation5 + $0x160] sm:$0xff]
    %v170 = vld [vmem:[#allocation5 + $0x168] sm:$0xff]
    %v171 = vld [vmem:[#allocation5 + $0x170] sm:$0xff]
    %v172 = vld [vmem:[#allocation5 + $0x178] sm:$0xff]
    %v173 = vld [vmem:[#allocation5 + $0x180] sm:$0xff]
    %v174 = vld [vmem:[#allocation5 + $0x188] sm:$0xff]
    %v175 = vld [vmem:[#allocation5 + $0x190] sm:$0xff]
    %v176 = vld [vmem:[#allocation5 + $0x198] sm:$0xff]
    %v177 = vld [vmem:[#allocation5 + $0x1a0] sm:$0xff]
    %v178 = vld [vmem:[#allocation5 + $0x1a8] sm:$0xff]
    %v179 = vld [vmem:[#allocation5 + $0x1b0] sm:$0xff]
    %v180 = vld [vmem:[#allocation5 + $0x1b8] sm:$0xff]
    %v181 = vld [vmem:[#allocation5 + $0x1c0] sm:$0xff]
    %v182 = vld [vmem:[#allocation5 + $0x1c8] sm:$0xff]
    %v183 = vld [vmem:[#allocation5 + $0x1d0] sm:$0xff]
    %v184 = vld [vmem:[#allocation5 + $0x1d8] sm:$0xff]
    %v185 = vld [vmem:[#allocation5 + $0x1e0] sm:$0xff]
    %v186 = vld [vmem:[#allocation5 + $0x1e8] sm:$0xff]
    %v187 = vld [vmem:[#allocation5 + $0x1f0] sm:$0xff]
    %v188 = vld [vmem:[#allocation5 + $0x1f8] sm:$0xff]
    %v189 = vld [vmem:[#allocation5 + $0x200] sm:$0xff]
    %v190 = vld [vmem:[#allocation5 + $0x208] sm:$0xff]
    %v191 = vld [vmem:[#allocation5 + $0x210] sm:$0xff]
    %v192 = vld [vmem:[#allocation5 + $0x218] sm:$0xff]
    %v193 = vld [vmem:[#allocation5 + $0x220] sm:$0xff]
    %v194 = vld [vmem:[#allocation5 + $0x228] sm:$0xff]
    %v195 = vld [vmem:[#allocation5 + $0x230] sm:$0xff]
    %v196 = vld [vmem:[#allocation5 + $0x238] sm:$0xff]
    %v197 = vld [vmem:[#allocation5 + $0x240] sm:$0xff]
    %v198 = vld [vmem:[#allocation5 + $0x248] sm:$0xff]
    %v199 = vld [vmem:[#allocation5 + $0x250] sm:$0xff]
    %v200 = vld [vmem:[#allocation5 + $0x258] sm:$0xff]
    %v201 = vld [vmem:[#allocation5 + $0x260] sm:$0xff]
    %v202 = vld [vmem:[#allocation5 + $0x268] sm:$0xff]
    %v203 = vld [vmem:[#allocation5 + $0x270] sm:$0xff]
    %v204 = vld [vmem:[#allocation5 + $0x278] sm:$0xff]
    %v205 = vld [vmem:[#allocation5 + $0x280] sm:$0xff]
    %v206 = vld [vmem:[#allocation5 + $0x288] sm:$0xff]
    %v207 = vld [vmem:[#allocation5 + $0x290] sm:$0xff]
    %v208 = vld [vmem:[#allocation5 + $0x298] sm:$0xff]
    %v209 = vld [vmem:[#allocation5 + $0x2a0] sm:$0xff]
    %v210 = vld [vmem:[#allocation5 + $0x2a8] sm:$0xff]
    %v211 = vld [vmem:[#allocation5 + $0x2b0] sm:$0xff]
    %v212 = vld [vmem:[#allocation5 + $0x2b8] sm:$0xff]
    %v213 = vld [vmem:[#allocation5 + $0x2c0] sm:$0xff]
    %v214 = vld [vmem:[#allocation5 + $0x2c8] sm:$0xff]
    %v215 = vld [vmem:[#allocation5 + $0x2d0] sm:$0xff]
    %v216 = vld [vmem:[#allocation5 + $0x2d8] sm:$0xff]
    %v217 = vld [vmem:[#allocation5 + $0x2e0] sm:$0xff]
    %v218 = vld [vmem:[#allocation5 + $0x2e8] sm:$0xff]
    %v219 = vld [vmem:[#allocation5 + $0x2f0] sm:$0xff]
    %v220 = vld [vmem:[#allocation5 + $0x2f8] sm:$0xff]
    %v221 = vld [vmem:[#allocation5 + $0x300] sm:$0xff]
    %v222 = vld [vmem:[#allocation5 + $0x308] sm:$0xff]
    %v223 = vld [vmem:[#allocation5 + $0x310] sm:$0xff]
    %v224 = vld [vmem:[#allocation5 + $0x318] sm:$0xff]
    %v225 = vld [vmem:[#allocation5 + $0x320] sm:$0xff]
    %v226 = vld [vmem:[#allocation5 + $0x328] sm:$0xff]
    %v227 = vld [vmem:[#allocation5 + $0x330] sm:$0xff]
    %v228 = vld [vmem:[#allocation5 + $0x338] sm:$0xff]
    %v229 = vld [vmem:[#allocation5 + $0x340] sm:$0xff]
    %v230 = vld [vmem:[#allocation5 + $0x348] sm:$0xff]
    %v231 = vld [vmem:[#allocation5 + $0x350] sm:$0xff]
    %v232 = vld [vmem:[#allocation5 + $0x358] sm:$0xff]
    %v233 = vld [vmem:[#allocation5 + $0x360] sm:$0xff]
    %v234 = vld [vmem:[#allocation5 + $0x368] sm:$0xff]
    %v235 = vld [vmem:[#allocation5 + $0x370] sm:$0xff]
    %v236 = vld [vmem:[#allocation5 + $0x378] sm:$0xff]
    %v237 = vld [vmem:[#allocation5 + $0x380] sm:$0xff]
    %v238 = vld [vmem:[#allocation5 + $0x388] sm:$0xff]
    %v239 = vld [vmem:[#allocation5 + $0x390] sm:$0xff]
    %v240 = vld [vmem:[#allocation5 + $0x398] sm:$0xff]
    %v241 = vld [vmem:[#allocation5 + $0x3a0] sm:$0xff]
    %v242 = vld [vmem:[#allocation5 + $0x3a8] sm:$0xff]
    %v243 = vld [vmem:[#allocation5 + $0x3b0] sm:$0xff]
    %v244 = vld [vmem:[#allocation5 + $0x3b8] sm:$0xff]
    %v245 = vld [vmem:[#allocation5 + $0x3c0] sm:$0xff]
    %v246 = vld [vmem:[#allocation5 + $0x3c8] sm:$0xff]
    %v247 = vld [vmem:[#allocation5 + $0x3d0] sm:$0xff]
    %v248 = vld [vmem:[#allocation5 + $0x3d8] sm:$0xff]
    %v249 = vld [vmem:[#allocation5 + $0x3e0] sm:$0xff]
    %v250 = vld [vmem:[#allocation5 + $0x3e8] sm:$0xff]
    %v251 = vld [vmem:[#allocation5 + $0x3f0] sm:$0xff]
    %v252 = vld [vmem:[#allocation5 + $0x3f8] sm:$0xff]
    %v253 = vld [vmem:[#allocation5 + $0x400] sm:$0xff]
    %v254 = vld [vmem:[#allocation5 + $0x408] sm:$0xff]
    %v255 = vld [vmem:[#allocation5 + $0x410] sm:$0xff]
    %v256 = vld [vmem:[#allocation5 + $0x418] sm:$0xff]
    %v257 = vld [vmem:[#allocation5 + $0x420] sm:$0xff]
    %v258 = vld [vmem:[#allocation5 + $0x428] sm:$0xff]
    %v259 = vld [vmem:[#allocation5 + $0x430] sm:$0xff]
    %v260 = vld [vmem:[#allocation5 + $0x438] sm:$0xff]
    %v261 = vld [vmem:[#allocation5 + $0x440] sm:$0xff]
    %v262 = vld [vmem:[#allocation5 + $0x448] sm:$0xff]
    %v263 = vld [vmem:[#allocation5 + $0x450] sm:$0xff]
    %v264 = vld [vmem:[#allocation5 + $0x458] sm:$0xff]
    %v265 = vld [vmem:[#allocation5 + $0x460] sm:$0xff]
    %v266 = vld [vmem:[#allocation5 + $0x468] sm:$0xff]
    %v267 = vld [vmem:[#allocation5 + $0x470] sm:$0xff]
    %v268 = vld [vmem:[#allocation5 + $0x478] sm:$0xff]
    %v269 = vld [vmem:[#allocation5 + $0x480] sm:$0xff]
    %v270 = vld [vmem:[#allocation5 + $0x488] sm:$0xff]
    %v271 = vld [vmem:[#allocation5 + $0x490] sm:$0xff]
    %v272 = vld [vmem:[#allocation5 + $0x498] sm:$0xff]
    %v273 = vld [vmem:[#allocation5 + $0x4a0] sm:$0xff]
    %v274 = vld [vmem:[#allocation5 + $0x4a8] sm:$0xff]
    %v275 = vld [vmem:[#allocation5 + $0x4b0] sm:$0xff]
    %v276 = vld [vmem:[#allocation5 + $0x4b8] sm:$0xff]
    %v277 = vld [vmem:[#allocation5 + $0x4c0] sm:$0xff]
    %v278 = vld [vmem:[#allocation5 + $0x4c8] sm:$0xff]
    %v279 = vld [vmem:[#allocation5 + $0x4d0] sm:$0xff]
    %v280 = vld [vmem:[#allocation5 + $0x4d8] sm:$0xff]
    %v281 = vld [vmem:[#allocation5 + $0x4e0] sm:$0xff]
    %v282 = vld [vmem:[#allocation5 + $0x4e8] sm:$0xff]
    %v283 = vld [vmem:[#allocation5 + $0x4f0] sm:$0xff]
    %v284 = vld [vmem:[#allocation5 + $0x4f8] sm:$0xff]
    %v285 = vld [vmem:[#allocation5 + $0x500] sm:$0xff]
    %v286 = vld [vmem:[#allocation5 + $0x508] sm:$0xff]
    %v287 = vld [vmem:[#allocation5 + $0x510] sm:$0xff]
    %v288 = vld [vmem:[#allocation5 + $0x518] sm:$0xff]
    %v289 = vld [vmem:[#allocation5 + $0x520] sm:$0xff]
    %v290 = vld [vmem:[#allocation5 + $0x528] sm:$0xff]
    %v291 = vld [vmem:[#allocation5 + $0x530] sm:$0xff]
    %v292 = vld [vmem:[#allocation5 + $0x538] sm:$0xff]
    %v293 = vld [vmem:[#allocation5 + $0x540] sm:$0xff]
    %v294 = vld [vmem:[#allocation5 + $0x548] sm:$0xff]
    %v295 = vld [vmem:[#allocation5 + $0x550] sm:$0xff]
    %v296 = vld [vmem:[#allocation5 + $0x558] sm:$0xff]
    %v297 = vld [vmem:[#allocation5 + $0x560] sm:$0xff]
    %v298 = vld [vmem:[#allocation5 + $0x568] sm:$0xff]
    %v299 = vld [vmem:[#allocation5 + $0x570] sm:$0xff]
    %v300 = vld [vmem:[#allocation5 + $0x578] sm:$0xff]
    %v301 = vld [vmem:[#allocation5 + $0x580] sm:$0xff]
    %v302 = vld [vmem:[#allocation5 + $0x588] sm:$0xff]
    %v303 = vld [vmem:[#allocation5 + $0x590] sm:$0xff]
    %v304 = vld [vmem:[#allocation5 + $0x598] sm:$0xff]
    %v305 = vld [vmem:[#allocation5 + $0x5a0] sm:$0xff]
    %v306 = vld [vmem:[#allocation5 + $0x5a8] sm:$0xff]
    %v307 = vld [vmem:[#allocation5 + $0x5b0] sm:$0xff]
    %v308 = vld [vmem:[#allocation5 + $0x5b8] sm:$0xff]
    %v309 = vld [vmem:[#allocation5 + $0x5c0] sm:$0xff]
    %v310 = vld [vmem:[#allocation5 + $0x5c8] sm:$0xff]
    %v311 = vld [vmem:[#allocation5 + $0x5d0] sm:$0xff]
    %v312 = vld [vmem:[#allocation5 + $0x5d8] sm:$0xff]
    %v313 = vld [vmem:[#allocation5 + $0x5e0] sm:$0xff]
    %v314 = vld [vmem:[#allocation5 + $0x5e8] sm:$0xff]
    %v315 = vld [vmem:[#allocation5 + $0x5f0] sm:$0xff]
    %v316 = vld [vmem:[#allocation5 + $0x5f8] sm:$0xff]
    %v317 = vld [vmem:[#allocation5 + $0x600] sm:$0xff]
    %v318 = vld [vmem:[#allocation5 + $0x608] sm:$0xff]
    %v319 = vld [vmem:[#allocation5 + $0x610] sm:$0xff]
    %v320 = vld [vmem:[#allocation5 + $0x618] sm:$0xff]
    %v321 = vld [vmem:[#allocation5 + $0x620] sm:$0xff]
    %v322 = vld [vmem:[#allocation5 + $0x628] sm:$0xff]
    %v323 = vld [vmem:[#allocation5 + $0x630] sm:$0xff]
    %v324 = vld [vmem:[#allocation5 + $0x638] sm:$0xff]
    %v325 = vld [vmem:[#allocation5 + $0x640] sm:$0xff]
    %v326 = vld [vmem:[#allocation5 + $0x648] sm:$0xff]
    %v327 = vld [vmem:[#allocation5 + $0x650] sm:$0xff]
    %v328 = vld [vmem:[#allocation5 + $0x658] sm:$0xff]
    %v329 = vld [vmem:[#allocation5 + $0x660] sm:$0xff]
    %v330 = vld [vmem:[#allocation5 + $0x668] sm:$0xff]
    %v331 = vld [vmem:[#allocation5 + $0x670] sm:$0xff]
    %v332 = vld [vmem:[#allocation5 + $0x678] sm:$0xff]
    %v333 = vld [vmem:[#allocation5 + $0x680] sm:$0xff]
    %v334 = vld [vmem:[#allocation5 + $0x688] sm:$0xff]
    %v335 = vld [vmem:[#allocation5 + $0x690] sm:$0xff]
    %v336 = vld [vmem:[#allocation5 + $0x698] sm:$0xff]
    %v337 = vld [vmem:[#allocation5 + $0x6a0] sm:$0xff]
    %v338 = vld [vmem:[#allocation5 + $0x6a8] sm:$0xff]
    %v339 = vld [vmem:[#allocation5 + $0x6b0] sm:$0xff]
    %v340 = vld [vmem:[#allocation5 + $0x6b8] sm:$0xff]
    %v341 = vld [vmem:[#allocation5 + $0x6c0] sm:$0xff]
    %v342 = vld [vmem:[#allocation5 + $0x6c8] sm:$0xff]
    %v343 = vld [vmem:[#allocation5 + $0x6d0] sm:$0xff]
    %v344 = vld [vmem:[#allocation5 + $0x6d8] sm:$0xff]
    %v345 = vld [vmem:[#allocation5 + $0x6e0] sm:$0xff]
    %v346 = vld [vmem:[#allocation5 + $0x6e8] sm:$0xff]
    %v347 = vld [vmem:[#allocation5 + $0x6f0] sm:$0xff]
    %v348 = vld [vmem:[#allocation5 + $0x6f8] sm:$0xff]
    %v349 = vld [vmem:[#allocation7] sm:$0xf]
    %v351 = vperm.slane %v349, 0
    %v352 = vperm.slane %v349, 1
    %v353 = vperm.slane %v349, 2
    %v354 = vperm.slane %v349, 3
    %v367 = vunpack.c.l.b16 %v117
    %v368 = vunpack.c.h.b16 %v117
    %v369 = vunpack.c.l.b16 %v118
    %v370 = vunpack.c.h.b16 %v118
    %v371 = vunpack.c.l.b16 %v119
    %v372 = vunpack.c.h.b16 %v119
    %v373 = vunpack.c.l.b16 %v120
    %v374 = vunpack.c.l.b16 %v121
    %v375 = vunpack.c.h.b16 %v121
    %v376 = vunpack.c.l.b16 %v122
    %v377 = vunpack.c.h.b16 %v122
    %v378 = vunpack.c.l.b16 %v123
    %v379 = vunpack.c.h.b16 %v123
    %v380 = vunpack.c.l.b16 %v124
    %v381 = vpack.c.b16 %v374, %v367
    %v382 = vpack.c.b16 %v375, %v368
    %v383 = vpack.c.b16 %v376, %v369
    %v384 = vpack.c.b16 %v377, %v370
    %v385 = vpack.c.b16 %v378, %v371
    %v386 = vpack.c.b16 %v379, %v372
    %v387 = vpack.c.b16 %v380, %v373
    %v619 = vunpack.c.l.b16 %v125
    %v620 = vunpack.c.h.b16 %v125
    %v621 = vunpack.c.l.b16 %v126
    %v622 = vunpack.c.h.b16 %v126
    %v623 = vunpack.c.l.b16 %v127
    %v624 = vunpack.c.h.b16 %v127
    %v625 = vunpack.c.l.b16 %v128
    %v626 = vunpack.c.h.b16 %v128
    %v627 = vunpack.c.l.b16 %v129
    %v628 = vunpack.c.h.b16 %v129
    %v629 = vunpack.c.l.b16 %v130
    %v630 = vunpack.c.h.b16 %v130
    %v631 = vunpack.c.l.b16 %v131
    %v632 = vunpack.c.h.b16 %v131
    %v633 = vunpack.c.l.b16 %v132
    %v634 = vunpack.c.h.b16 %v132
    %v635 = vunpack.c.l.b16 %v133
    %v636 = vunpack.c.h.b16 %v133
    %v637 = vunpack.c.l.b16 %v134
    %v638 = vunpack.c.h.b16 %v134
    %v639 = vunpack.c.l.b16 %v135
    %v640 = vunpack.c.h.b16 %v135
    %v641 = vunpack.c.l.b16 %v136
    %v642 = vunpack.c.h.b16 %v136
    %v643 = vunpack.c.l.b16 %v137
    %v644 = vunpack.c.h.b16 %v137
    %v645 = vunpack.c.l.b16 %v138
    %v646 = vunpack.c.h.b16 %v138
    %v647 = vunpack.c.l.b16 %v139
    %v648 = vunpack.c.h.b16 %v139
    %v649 = vunpack.c.l.b16 %v140
    %v650 = vunpack.c.h.b16 %v140
    %v651 = vunpack.c.l.b16 %v141
    %v652 = vunpack.c.h.b16 %v141
    %v653 = vunpack.c.l.b16 %v142
    %v654 = vunpack.c.h.b16 %v142
    %v655 = vunpack.c.l.b16 %v143
    %v656 = vunpack.c.h.b16 %v143
    %v657 = vunpack.c.l.b16 %v144
    %v658 = vunpack.c.h.b16 %v144
    %v659 = vunpack.c.l.b16 %v145
    %v660 = vunpack.c.h.b16 %v145
    %v661 = vunpack.c.l.b16 %v146
    %v662 = vunpack.c.h.b16 %v146
    %v663 = vunpack.c.l.b16 %v147
    %v664 = vunpack.c.h.b16 %v147
    %v665 = vunpack.c.l.b16 %v148
    %v666 = vunpack.c.h.b16 %v148
    %v667 = vunpack.c.l.b16 %v149
    %v668 = vunpack.c.h.b16 %v149
    %v669 = vunpack.c.l.b16 %v150
    %v670 = vunpack.c.h.b16 %v150
    %v671 = vunpack.c.l.b16 %v151
    %v672 = vunpack.c.h.b16 %v151
    %v673 = vunpack.c.l.b16 %v152
    %v674 = vunpack.c.h.b16 %v152
    %v675 = vunpack.c.l.b16 %v153
    %v676 = vunpack.c.h.b16 %v153
    %v677 = vunpack.c.l.b16 %v154
    %v678 = vunpack.c.h.b16 %v154
    %v679 = vunpack.c.l.b16 %v155
    %v680 = vunpack.c.h.b16 %v155
    %v681 = vunpack.c.l.b16 %v156
    %v682 = vunpack.c.h.b16 %v156
    %v683 = vunpack.c.l.b16 %v157
    %v684 = vunpack.c.h.b16 %v157
    %v685 = vunpack.c.l.b16 %v158
    %v686 = vunpack.c.h.b16 %v158
    %v687 = vunpack.c.l.b16 %v159
    %v688 = vunpack.c.h.b16 %v159
    %v689 = vunpack.c.l.b16 %v160
    %v690 = vunpack.c.h.b16 %v160
    %v691 = vunpack.c.l.b16 %v161
    %v692 = vunpack.c.h.b16 %v161
    %v693 = vunpack.c.l.b16 %v162
    %v694 = vunpack.c.h.b16 %v162
    %v695 = vunpack.c.l.b16 %v163
    %v696 = vunpack.c.h.b16 %v163
    %v697 = vunpack.c.l.b16 %v164
    %v698 = vunpack.c.h.b16 %v164
    %v699 = vunpack.c.l.b16 %v165
    %v700 = vunpack.c.h.b16 %v165
    %v701 = vunpack.c.l.b16 %v166
    %v702 = vunpack.c.h.b16 %v166
    %v703 = vunpack.c.l.b16 %v167
    %v704 = vunpack.c.h.b16 %v167
    %v705 = vunpack.c.l.b16 %v168
    %v706 = vunpack.c.h.b16 %v168
    %v707 = vunpack.c.l.b16 %v169
    %v708 = vunpack.c.h.b16 %v169
    %v709 = vunpack.c.l.b16 %v170
    %v710 = vunpack.c.h.b16 %v170
    %v711 = vunpack.c.l.b16 %v171
    %v712 = vunpack.c.h.b16 %v171
    %v713 = vunpack.c.l.b16 %v172
    %v714 = vunpack.c.h.b16 %v172
    %v715 = vunpack.c.l.b16 %v173
    %v716 = vunpack.c.h.b16 %v173
    %v717 = vunpack.c.l.b16 %v174
    %v718 = vunpack.c.h.b16 %v174
    %v719 = vunpack.c.l.b16 %v175
    %v720 = vunpack.c.h.b16 %v175
    %v721 = vunpack.c.l.b16 %v176
    %v722 = vunpack.c.h.b16 %v176
    %v723 = vunpack.c.l.b16 %v177
    %v724 = vunpack.c.h.b16 %v177
    %v725 = vunpack.c.l.b16 %v178
    %v726 = vunpack.c.h.b16 %v178
    %v727 = vunpack.c.l.b16 %v179
    %v728 = vunpack.c.h.b16 %v179
    %v729 = vunpack.c.l.b16 %v180
    %v730 = vunpack.c.h.b16 %v180
    %v731 = vunpack.c.l.b16 %v181
    %v732 = vunpack.c.h.b16 %v181
    %v733 = vunpack.c.l.b16 %v182
    %v734 = vunpack.c.h.b16 %v182
    %v735 = vunpack.c.l.b16 %v183
    %v736 = vunpack.c.h.b16 %v183
    %v737 = vunpack.c.l.b16 %v184
    %v738 = vunpack.c.h.b16 %v184
    %v739 = vunpack.c.l.b16 %v185
    %v740 = vunpack.c.h.b16 %v185
    %v741 = vunpack.c.l.b16 %v186
    %v742 = vunpack.c.h.b16 %v186
    %v743 = vunpack.c.l.b16 %v187
    %v744 = vunpack.c.h.b16 %v187
    %v745 = vunpack.c.l.b16 %v188
    %v746 = vunpack.c.h.b16 %v188
    %v747 = vunpack.c.l.b16 %v189
    %v748 = vunpack.c.h.b16 %v189
    %v749 = vunpack.c.l.b16 %v190
    %v750 = vunpack.c.h.b16 %v190
    %v751 = vunpack.c.l.b16 %v191
    %v752 = vunpack.c.h.b16 %v191
    %v753 = vunpack.c.l.b16 %v192
    %v754 = vunpack.c.h.b16 %v192
    %v755 = vunpack.c.l.b16 %v193
    %v756 = vunpack.c.h.b16 %v193
    %v757 = vunpack.c.l.b16 %v194
    %v758 = vunpack.c.h.b16 %v194
    %v759 = vunpack.c.l.b16 %v195
    %v760 = vunpack.c.h.b16 %v195
    %v761 = vunpack.c.l.b16 %v196
    %v762 = vunpack.c.h.b16 %v196
    %v763 = vunpack.c.l.b16 %v197
    %v764 = vunpack.c.h.b16 %v197
    %v765 = vunpack.c.l.b16 %v198
    %v766 = vunpack.c.h.b16 %v198
    %v767 = vunpack.c.l.b16 %v199
    %v768 = vunpack.c.h.b16 %v199
    %v769 = vunpack.c.l.b16 %v200
    %v770 = vunpack.c.h.b16 %v200
    %v771 = vunpack.c.l.b16 %v201
    %v772 = vunpack.c.h.b16 %v201
    %v773 = vunpack.c.l.b16 %v202
    %v774 = vunpack.c.h.b16 %v202
    %v775 = vunpack.c.l.b16 %v203
    %v776 = vunpack.c.h.b16 %v203
    %v777 = vunpack.c.l.b16 %v204
    %v778 = vunpack.c.h.b16 %v204
    %v779 = vunpack.c.l.b16 %v205
    %v780 = vunpack.c.h.b16 %v205
    %v781 = vunpack.c.l.b16 %v206
    %v782 = vunpack.c.h.b16 %v206
    %v783 = vunpack.c.l.b16 %v207
    %v784 = vunpack.c.h.b16 %v207
    %v785 = vunpack.c.l.b16 %v208
    %v786 = vunpack.c.h.b16 %v208
    %v787 = vunpack.c.l.b16 %v209
    %v788 = vunpack.c.h.b16 %v209
    %v789 = vunpack.c.l.b16 %v210
    %v790 = vunpack.c.h.b16 %v210
    %v791 = vunpack.c.l.b16 %v211
    %v792 = vunpack.c.h.b16 %v211
    %v793 = vunpack.c.l.b16 %v212
    %v794 = vunpack.c.h.b16 %v212
    %v795 = vunpack.c.l.b16 %v213
    %v796 = vunpack.c.h.b16 %v213
    %v797 = vunpack.c.l.b16 %v214
    %v798 = vunpack.c.h.b16 %v214
    %v799 = vunpack.c.l.b16 %v215
    %v800 = vunpack.c.h.b16 %v215
    %v801 = vunpack.c.l.b16 %v216
    %v802 = vunpack.c.h.b16 %v216
    %v803 = vunpack.c.l.b16 %v217
    %v804 = vunpack.c.h.b16 %v217
    %v805 = vunpack.c.l.b16 %v218
    %v806 = vunpack.c.h.b16 %v218
    %v807 = vunpack.c.l.b16 %v219
    %v808 = vunpack.c.h.b16 %v219
    %v809 = vunpack.c.l.b16 %v220
    %v810 = vunpack.c.h.b16 %v220
    %v811 = vunpack.c.l.b16 %v221
    %v812 = vunpack.c.h.b16 %v221
    %v813 = vunpack.c.l.b16 %v222
    %v814 = vunpack.c.h.b16 %v222
    %v815 = vunpack.c.l.b16 %v223
    %v816 = vunpack.c.h.b16 %v223
    %v817 = vunpack.c.l.b16 %v224
    %v818 = vunpack.c.h.b16 %v224
    %v819 = vunpack.c.l.b16 %v225
    %v820 = vunpack.c.h.b16 %v225
    %v821 = vunpack.c.l.b16 %v226
    %v822 = vunpack.c.h.b16 %v226
    %v823 = vunpack.c.l.b16 %v227
    %v824 = vunpack.c.h.b16 %v227
    %v825 = vunpack.c.l.b16 %v228
    %v826 = vunpack.c.h.b16 %v228
    %v827 = vunpack.c.l.b16 %v229
    %v828 = vunpack.c.h.b16 %v229
    %v829 = vunpack.c.l.b16 %v230
    %v830 = vunpack.c.h.b16 %v230
    %v831 = vunpack.c.l.b16 %v231
    %v832 = vunpack.c.h.b16 %v231
    %v833 = vunpack.c.l.b16 %v232
    %v834 = vunpack.c.h.b16 %v232
    %v835 = vunpack.c.l.b16 %v233
    %v836 = vunpack.c.h.b16 %v233
    %v837 = vunpack.c.l.b16 %v234
    %v838 = vunpack.c.h.b16 %v234
    %v839 = vunpack.c.l.b16 %v235
    %v840 = vunpack.c.h.b16 %v235
    %v841 = vunpack.c.l.b16 %v236
    %v842 = vunpack.c.h.b16 %v236
    %v843 = vunpack.c.l.b16 %v237
    %v844 = vunpack.c.h.b16 %v237
    %v845 = vunpack.c.l.b16 %v238
    %v846 = vunpack.c.h.b16 %v238
    %v847 = vunpack.c.l.b16 %v239
    %v848 = vunpack.c.h.b16 %v239
    %v849 = vunpack.c.l.b16 %v240
    %v850 = vunpack.c.h.b16 %v240
    %v851 = vunpack.c.l.b16 %v241
    %v852 = vunpack.c.h.b16 %v241
    %v853 = vunpack.c.l.b16 %v242
    %v854 = vunpack.c.h.b16 %v242
    %v855 = vunpack.c.l.b16 %v243
    %v856 = vunpack.c.h.b16 %v243
    %v857 = vunpack.c.l.b16 %v244
    %v858 = vunpack.c.h.b16 %v244
    %v859 = vunpack.c.l.b16 %v245
    %v860 = vunpack.c.h.b16 %v245
    %v861 = vunpack.c.l.b16 %v246
    %v862 = vunpack.c.h.b16 %v246
    %v863 = vunpack.c.l.b16 %v247
    %v864 = vunpack.c.h.b16 %v247
    %v865 = vunpack.c.l.b16 %v248
    %v866 = vunpack.c.h.b16 %v248
    %v867 = vunpack.c.l.b16 %v249
    %v868 = vunpack.c.h.b16 %v249
    %v869 = vunpack.c.l.b16 %v250
    %v870 = vunpack.c.h.b16 %v250
    %v871 = vunpack.c.l.b16 %v251
    %v872 = vunpack.c.h.b16 %v251
    %v873 = vunpack.c.l.b16 %v252
    %v874 = vunpack.c.h.b16 %v252
    %v875 = vunpack.c.l.b16 %v253
    %v876 = vunpack.c.h.b16 %v253
    %v877 = vunpack.c.l.b16 %v254
    %v878 = vunpack.c.h.b16 %v254
    %v879 = vunpack.c.l.b16 %v255
    %v880 = vunpack.c.h.b16 %v255
    %v881 = vunpack.c.l.b16 %v256
    %v882 = vunpack.c.h.b16 %v256
    %v883 = vunpack.c.l.b16 %v257
    %v884 = vunpack.c.h.b16 %v257
    %v885 = vunpack.c.l.b16 %v258
    %v886 = vunpack.c.h.b16 %v258
    %v887 = vunpack.c.l.b16 %v259
    %v888 = vunpack.c.h.b16 %v259
    %v889 = vunpack.c.l.b16 %v260
    %v890 = vunpack.c.h.b16 %v260
    %v891 = vunpack.c.l.b16 %v261
    %v892 = vunpack.c.h.b16 %v261
    %v893 = vunpack.c.l.b16 %v262
    %v894 = vunpack.c.h.b16 %v262
    %v895 = vunpack.c.l.b16 %v263
    %v896 = vunpack.c.h.b16 %v263
    %v897 = vunpack.c.l.b16 %v264
    %v898 = vunpack.c.h.b16 %v264
    %v899 = vunpack.c.l.b16 %v265
    %v900 = vunpack.c.h.b16 %v265
    %v901 = vunpack.c.l.b16 %v266
    %v902 = vunpack.c.h.b16 %v266
    %v903 = vunpack.c.l.b16 %v267
    %v904 = vunpack.c.h.b16 %v267
    %v905 = vunpack.c.l.b16 %v268
    %v906 = vunpack.c.h.b16 %v268
    %v907 = vunpack.c.l.b16 %v269
    %v908 = vunpack.c.h.b16 %v269
    %v909 = vunpack.c.l.b16 %v270
    %v910 = vunpack.c.h.b16 %v270
    %v911 = vunpack.c.l.b16 %v271
    %v912 = vunpack.c.h.b16 %v271
    %v913 = vunpack.c.l.b16 %v272
    %v914 = vunpack.c.h.b16 %v272
    %v915 = vunpack.c.l.b16 %v273
    %v916 = vunpack.c.h.b16 %v273
    %v917 = vunpack.c.l.b16 %v274
    %v918 = vunpack.c.h.b16 %v274
    %v919 = vunpack.c.l.b16 %v275
    %v920 = vunpack.c.h.b16 %v275
    %v921 = vunpack.c.l.b16 %v276
    %v922 = vunpack.c.h.b16 %v276
    %v923 = vunpack.c.l.b16 %v277
    %v924 = vunpack.c.h.b16 %v277
    %v925 = vunpack.c.l.b16 %v278
    %v926 = vunpack.c.h.b16 %v278
    %v927 = vunpack.c.l.b16 %v279
    %v928 = vunpack.c.h.b16 %v279
    %v929 = vunpack.c.l.b16 %v280
    %v930 = vunpack.c.h.b16 %v280
    %v931 = vunpack.c.l.b16 %v281
    %v932 = vunpack.c.h.b16 %v281
    %v933 = vunpack.c.l.b16 %v282
    %v934 = vunpack.c.h.b16 %v282
    %v935 = vunpack.c.l.b16 %v283
    %v936 = vunpack.c.h.b16 %v283
    %v937 = vunpack.c.l.b16 %v284
    %v938 = vunpack.c.h.b16 %v284
    %v939 = vunpack.c.l.b16 %v285
    %v940 = vunpack.c.h.b16 %v285
    %v941 = vunpack.c.l.b16 %v286
    %v942 = vunpack.c.h.b16 %v286
    %v943 = vunpack.c.l.b16 %v287
    %v944 = vunpack.c.h.b16 %v287
    %v945 = vunpack.c.l.b16 %v288
    %v946 = vunpack.c.h.b16 %v288
    %v947 = vunpack.c.l.b16 %v289
    %v948 = vunpack.c.h.b16 %v289
    %v949 = vunpack.c.l.b16 %v290
    %v950 = vunpack.c.h.b16 %v290
    %v951 = vunpack.c.l.b16 %v291
    %v952 = vunpack.c.h.b16 %v291
    %v953 = vunpack.c.l.b16 %v292
    %v954 = vunpack.c.h.b16 %v292
    %v955 = vunpack.c.l.b16 %v293
    %v956 = vunpack.c.h.b16 %v293
    %v957 = vunpack.c.l.b16 %v294
    %v958 = vunpack.c.h.b16 %v294
    %v959 = vunpack.c.l.b16 %v295
    %v960 = vunpack.c.h.b16 %v295
    %v961 = vunpack.c.l.b16 %v296
    %v962 = vunpack.c.h.b16 %v296
    %v963 = vunpack.c.l.b16 %v297
    %v964 = vunpack.c.h.b16 %v297
    %v965 = vunpack.c.l.b16 %v298
    %v966 = vunpack.c.h.b16 %v298
    %v967 = vunpack.c.l.b16 %v299
    %v968 = vunpack.c.h.b16 %v299
    %v969 = vunpack.c.l.b16 %v300
    %v970 = vunpack.c.h.b16 %v300
    %v971 = vunpack.c.l.b16 %v301
    %v972 = vunpack.c.h.b16 %v301
    %v973 = vunpack.c.l.b16 %v302
    %v974 = vunpack.c.h.b16 %v302
    %v975 = vunpack.c.l.b16 %v303
    %v976 = vunpack.c.h.b16 %v303
    %v977 = vunpack.c.l.b16 %v304
    %v978 = vunpack.c.h.b16 %v304
    %v979 = vunpack.c.l.b16 %v305
    %v980 = vunpack.c.h.b16 %v305
    %v981 = vunpack.c.l.b16 %v306
    %v982 = vunpack.c.h.b16 %v306
    %v983 = vunpack.c.l.b16 %v307
    %v984 = vunpack.c.h.b16 %v307
    %v985 = vunpack.c.l.b16 %v308
    %v986 = vunpack.c.h.b16 %v308
    %v987 = vunpack.c.l.b16 %v309
    %v988 = vunpack.c.h.b16 %v309
    %v989 = vunpack.c.l.b16 %v310
    %v990 = vunpack.c.h.b16 %v310
    %v991 = vunpack.c.l.b16 %v311
    %v992 = vunpack.c.h.b16 %v311
    %v993 = vunpack.c.l.b16 %v312
    %v994 = vunpack.c.h.b16 %v312
    %v995 = vunpack.c.l.b16 %v313
    %v996 = vunpack.c.h.b16 %v313
    %v997 = vunpack.c.l.b16 %v314
    %v998 = vunpack.c.h.b16 %v314
    %v999 = vunpack.c.l.b16 %v315
    %v1000 = vunpack.c.h.b16 %v315
    %v1001 = vunpack.c.l.b16 %v316
    %v1002 = vunpack.c.h.b16 %v316
    %v1003 = vunpack.c.l.b16 %v317
    %v1004 = vunpack.c.h.b16 %v317
    %v1005 = vunpack.c.l.b16 %v318
    %v1006 = vunpack.c.h.b16 %v318
    %v1007 = vunpack.c.l.b16 %v319
    %v1008 = vunpack.c.h.b16 %v319
    %v1009 = vunpack.c.l.b16 %v320
    %v1010 = vunpack.c.h.b16 %v320
    %v1011 = vunpack.c.l.b16 %v321
    %v1012 = vunpack.c.h.b16 %v321
    %v1013 = vunpack.c.l.b16 %v322
    %v1014 = vunpack.c.h.b16 %v322
    %v1015 = vunpack.c.l.b16 %v323
    %v1016 = vunpack.c.h.b16 %v323
    %v1017 = vunpack.c.l.b16 %v324
    %v1018 = vunpack.c.h.b16 %v324
    %v1019 = vunpack.c.l.b16 %v325
    %v1020 = vunpack.c.h.b16 %v325
    %v1021 = vunpack.c.l.b16 %v326
    %v1022 = vunpack.c.h.b16 %v326
    %v1023 = vunpack.c.l.b16 %v327
    %v1024 = vunpack.c.h.b16 %v327
    %v1025 = vunpack.c.l.b16 %v328
    %v1026 = vunpack.c.h.b16 %v328
    %v1027 = vunpack.c.l.b16 %v329
    %v1028 = vunpack.c.h.b16 %v329
    %v1029 = vunpack.c.l.b16 %v330
    %v1030 = vunpack.c.h.b16 %v330
    %v1031 = vunpack.c.l.b16 %v331
    %v1032 = vunpack.c.h.b16 %v331
    %v1033 = vunpack.c.l.b16 %v332
    %v1034 = vunpack.c.h.b16 %v332
    %v1035 = vunpack.c.l.b16 %v333
    %v1036 = vunpack.c.h.b16 %v333
    %v1037 = vunpack.c.l.b16 %v334
    %v1038 = vunpack.c.h.b16 %v334
    %v1039 = vunpack.c.l.b16 %v335
    %v1040 = vunpack.c.h.b16 %v335
    %v1041 = vunpack.c.l.b16 %v336
    %v1042 = vunpack.c.h.b16 %v336
    %v1043 = vunpack.c.l.b16 %v337
    %v1044 = vunpack.c.h.b16 %v337
    %v1045 = vunpack.c.l.b16 %v338
    %v1046 = vunpack.c.h.b16 %v338
    %v1047 = vunpack.c.l.b16 %v339
    %v1048 = vunpack.c.h.b16 %v339
    %v1049 = vunpack.c.l.b16 %v340
    %v1050 = vunpack.c.h.b16 %v340
    %v1051 = vunpack.c.l.b16 %v341
    %v1052 = vunpack.c.h.b16 %v341
    %v1053 = vunpack.c.l.b16 %v342
    %v1054 = vunpack.c.h.b16 %v342
    %v1055 = vunpack.c.l.b16 %v343
    %v1056 = vunpack.c.h.b16 %v343
    %v1057 = vunpack.c.l.b16 %v344
    %v1058 = vunpack.c.h.b16 %v344
    %v1059 = vunpack.c.l.b16 %v345
    %v1060 = vunpack.c.h.b16 %v345
    %v1061 = vunpack.c.l.b16 %v346
    %v1062 = vunpack.c.h.b16 %v346
    %v1063 = vunpack.c.l.b16 %v347
    %v1064 = vunpack.c.h.b16 %v347
    %v1065 = vunpack.c.l.b16 %v348
    %v1066 = vunpack.c.h.b16 %v348
    %v1067 = vpack.c.b16 %v623, %v619
    %v1068 = vpack.c.b16 %v624, %v620
    %v1069 = vpack.c.b16 %v625, %v621
    %v1070 = vpack.c.b16 %v626, %v622
    %v1071 = vpack.c.b16 %v631, %v627
    %v1072 = vpack.c.b16 %v632, %v628
    %v1073 = vpack.c.b16 %v633, %v629
    %v1074 = vpack.c.b16 %v634, %v630
    %v1075 = vpack.c.b16 %v639, %v635
    %v1076 = vpack.c.b16 %v640, %v636
    %v1077 = vpack.c.b16 %v641, %v637
    %v1078 = vpack.c.b16 %v642, %v638
    %v1079 = vpack.c.b16 %v647, %v643
    %v1080 = vpack.c.b16 %v648, %v644
    %v1081 = vpack.c.b16 %v649, %v645
    %v1082 = vpack.c.b16 %v650, %v646
    %v1083 = vpack.c.b16 %v655, %v651
    %v1084 = vpack.c.b16 %v656, %v652
    %v1085 = vpack.c.b16 %v657, %v653
    %v1086 = vpack.c.b16 %v658, %v654
    %v1087 = vpack.c.b16 %v663, %v659
    %v1088 = vpack.c.b16 %v664, %v660
    %v1089 = vpack.c.b16 %v665, %v661
    %v1090 = vpack.c.b16 %v666, %v662
    %v1091 = vpack.c.b16 %v671, %v667
    %v1092 = vpack.c.b16 %v672, %v668
    %v1093 = vpack.c.b16 %v673, %v669
    %v1094 = vpack.c.b16 %v674, %v670
    %v1095 = vpack.c.b16 %v679, %v675
    %v1096 = vpack.c.b16 %v680, %v676
    %v1097 = vpack.c.b16 %v681, %v677
    %v1098 = vpack.c.b16 %v682, %v678
    %v1099 = vpack.c.b16 %v687, %v683
    %v1100 = vpack.c.b16 %v688, %v684
    %v1101 = vpack.c.b16 %v689, %v685
    %v1102 = vpack.c.b16 %v690, %v686
    %v1103 = vpack.c.b16 %v695, %v691
    %v1104 = vpack.c.b16 %v696, %v692
    %v1105 = vpack.c.b16 %v697, %v693
    %v1106 = vpack.c.b16 %v698, %v694
    %v1107 = vpack.c.b16 %v703, %v699
    %v1108 = vpack.c.b16 %v704, %v700
    %v1109 = vpack.c.b16 %v705, %v701
    %v1110 = vpack.c.b16 %v706, %v702
    %v1111 = vpack.c.b16 %v711, %v707
    %v1112 = vpack.c.b16 %v712, %v708
    %v1113 = vpack.c.b16 %v713, %v709
    %v1114 = vpack.c.b16 %v714, %v710
    %v1115 = vpack.c.b16 %v719, %v715
    %v1116 = vpack.c.b16 %v720, %v716
    %v1117 = vpack.c.b16 %v721, %v717
    %v1118 = vpack.c.b16 %v722, %v718
    %v1119 = vpack.c.b16 %v727, %v723
    %v1120 = vpack.c.b16 %v728, %v724
    %v1121 = vpack.c.b16 %v729, %v725
    %v1122 = vpack.c.b16 %v730, %v726
    %v1123 = vpack.c.b16 %v735, %v731
    %v1124 = vpack.c.b16 %v736, %v732
    %v1125 = vpack.c.b16 %v737, %v733
    %v1126 = vpack.c.b16 %v738, %v734
    %v1127 = vpack.c.b16 %v743, %v739
    %v1128 = vpack.c.b16 %v744, %v740
    %v1129 = vpack.c.b16 %v745, %v741
    %v1130 = vpack.c.b16 %v746, %v742
    %v1131 = vpack.c.b16 %v751, %v747
    %v1132 = vpack.c.b16 %v752, %v748
    %v1133 = vpack.c.b16 %v753, %v749
    %v1134 = vpack.c.b16 %v754, %v750
    %v1135 = vpack.c.b16 %v759, %v755
    %v1136 = vpack.c.b16 %v760, %v756
    %v1137 = vpack.c.b16 %v761, %v757
    %v1138 = vpack.c.b16 %v762, %v758
    %v1139 = vpack.c.b16 %v767, %v763
    %v1140 = vpack.c.b16 %v768, %v764
    %v1141 = vpack.c.b16 %v769, %v765
    %v1142 = vpack.c.b16 %v770, %v766
    %v1143 = vpack.c.b16 %v775, %v771
    %v1144 = vpack.c.b16 %v776, %v772
    %v1145 = vpack.c.b16 %v777, %v773
    %v1146 = vpack.c.b16 %v778, %v774
    %v1147 = vpack.c.b16 %v783, %v779
    %v1148 = vpack.c.b16 %v784, %v780
    %v1149 = vpack.c.b16 %v785, %v781
    %v1150 = vpack.c.b16 %v786, %v782
    %v1151 = vpack.c.b16 %v791, %v787
    %v1152 = vpack.c.b16 %v792, %v788
    %v1153 = vpack.c.b16 %v793, %v789
    %v1154 = vpack.c.b16 %v794, %v790
    %v1155 = vpack.c.b16 %v799, %v795
    %v1156 = vpack.c.b16 %v800, %v796
    %v1157 = vpack.c.b16 %v801, %v797
    %v1158 = vpack.c.b16 %v802, %v798
    %v1159 = vpack.c.b16 %v807, %v803
    %v1160 = vpack.c.b16 %v808, %v804
    %v1161 = vpack.c.b16 %v809, %v805
    %v1162 = vpack.c.b16 %v810, %v806
    %v1163 = vpack.c.b16 %v815, %v811
    %v1164 = vpack.c.b16 %v816, %v812
    %v1165 = vpack.c.b16 %v817, %v813
    %v1166 = vpack.c.b16 %v818, %v814
    %v1167 = vpack.c.b16 %v823, %v819
    %v1168 = vpack.c.b16 %v824, %v820
    %v1169 = vpack.c.b16 %v825, %v821
    %v1170 = vpack.c.b16 %v826, %v822
    %v1171 = vpack.c.b16 %v831, %v827
    %v1172 = vpack.c.b16 %v832, %v828
    %v1173 = vpack.c.b16 %v833, %v829
    %v1174 = vpack.c.b16 %v834, %v830
    %v1175 = vpack.c.b16 %v839, %v835
    %v1176 = vpack.c.b16 %v840, %v836
    %v1177 = vpack.c.b16 %v841, %v837
    %v1178 = vpack.c.b16 %v842, %v838
    %v1179 = vpack.c.b16 %v847, %v843
    %v1180 = vpack.c.b16 %v848, %v844
    %v1181 = vpack.c.b16 %v849, %v845
    %v1182 = vpack.c.b16 %v850, %v846
    %v1183 = vpack.c.b16 %v855, %v851
    %v1184 = vpack.c.b16 %v856, %v852
    %v1185 = vpack.c.b16 %v857, %v853
    %v1186 = vpack.c.b16 %v858, %v854
    %v1187 = vpack.c.b16 %v863, %v859
    %v1188 = vpack.c.b16 %v864, %v860
    %v1189 = vpack.c.b16 %v865, %v861
    %v1190 = vpack.c.b16 %v866, %v862
    %v1191 = vpack.c.b16 %v871, %v867
    %v1192 = vpack.c.b16 %v872, %v868
    %v1193 = vpack.c.b16 %v873, %v869
    %v1194 = vpack.c.b16 %v874, %v870
    %v1195 = vpack.c.b16 %v879, %v875
    %v1196 = vpack.c.b16 %v880, %v876
    %v1197 = vpack.c.b16 %v881, %v877
    %v1198 = vpack.c.b16 %v882, %v878
    %v1199 = vpack.c.b16 %v887, %v883
    %v1200 = vpack.c.b16 %v888, %v884
    %v1201 = vpack.c.b16 %v889, %v885
    %v1202 = vpack.c.b16 %v890, %v886
    %v1203 = vpack.c.b16 %v895, %v891
    %v1204 = vpack.c.b16 %v896, %v892
    %v1205 = vpack.c.b16 %v897, %v893
    %v1206 = vpack.c.b16 %v898, %v894
    %v1207 = vpack.c.b16 %v903, %v899
    %v1208 = vpack.c.b16 %v904, %v900
    %v1209 = vpack.c.b16 %v905, %v901
    %v1210 = vpack.c.b16 %v906, %v902
    %v1211 = vpack.c.b16 %v911, %v907
    %v1212 = vpack.c.b16 %v912, %v908
    %v1213 = vpack.c.b16 %v913, %v909
    %v1214 = vpack.c.b16 %v914, %v910
    %v1215 = vpack.c.b16 %v919, %v915
    %v1216 = vpack.c.b16 %v920, %v916
    %v1217 = vpack.c.b16 %v921, %v917
    %v1218 = vpack.c.b16 %v922, %v918
    %v1219 = vpack.c.b16 %v927, %v923
    %v1220 = vpack.c.b16 %v928, %v924
    %v1221 = vpack.c.b16 %v929, %v925
    %v1222 = vpack.c.b16 %v930, %v926
    %v1223 = vpack.c.b16 %v935, %v931
    %v1224 = vpack.c.b16 %v936, %v932
    %v1225 = vpack.c.b16 %v937, %v933
    %v1226 = vpack.c.b16 %v938, %v934
    %v1227 = vpack.c.b16 %v943, %v939
    %v1228 = vpack.c.b16 %v944, %v940
    %v1229 = vpack.c.b16 %v945, %v941
    %v1230 = vpack.c.b16 %v946, %v942
    %v1231 = vpack.c.b16 %v951, %v947
    %v1232 = vpack.c.b16 %v952, %v948
    %v1233 = vpack.c.b16 %v953, %v949
    %v1234 = vpack.c.b16 %v954, %v950
    %v1235 = vpack.c.b16 %v959, %v955
    %v1236 = vpack.c.b16 %v960, %v956
    %v1237 = vpack.c.b16 %v961, %v957
    %v1238 = vpack.c.b16 %v962, %v958
    %v1239 = vpack.c.b16 %v967, %v963
    %v1240 = vpack.c.b16 %v968, %v964
    %v1241 = vpack.c.b16 %v969, %v965
    %v1242 = vpack.c.b16 %v970, %v966
    %v1243 = vpack.c.b16 %v975, %v971
    %v1244 = vpack.c.b16 %v976, %v972
    %v1245 = vpack.c.b16 %v977, %v973
    %v1246 = vpack.c.b16 %v978, %v974
    %v1247 = vpack.c.b16 %v983, %v979
    %v1248 = vpack.c.b16 %v984, %v980
    %v1249 = vpack.c.b16 %v985, %v981
    %v1250 = vpack.c.b16 %v986, %v982
    %v1251 = vpack.c.b16 %v991, %v987
    %v1252 = vpack.c.b16 %v992, %v988
    %v1253 = vpack.c.b16 %v993, %v989
    %v1254 = vpack.c.b16 %v994, %v990
    %v1255 = vpack.c.b16 %v999, %v995
    %v1256 = vpack.c.b16 %v1000, %v996
    %v1257 = vpack.c.b16 %v1001, %v997
    %v1258 = vpack.c.b16 %v1002, %v998
    %v1259 = vpack.c.b16 %v1007, %v1003
    %v1260 = vpack.c.b16 %v1008, %v1004
    %v1261 = vpack.c.b16 %v1009, %v1005
    %v1262 = vpack.c.b16 %v1010, %v1006
    %v1263 = vpack.c.b16 %v1015, %v1011
    %v1264 = vpack.c.b16 %v1016, %v1012
    %v1265 = vpack.c.b16 %v1017, %v1013
    %v1266 = vpack.c.b16 %v1018, %v1014
    %v1267 = vpack.c.b16 %v1023, %v1019
    %v1268 = vpack.c.b16 %v1024, %v1020
    %v1269 = vpack.c.b16 %v1025, %v1021
    %v1270 = vpack.c.b16 %v1026, %v1022
    %v1271 = vpack.c.b16 %v1031, %v1027
    %v1272 = vpack.c.b16 %v1032, %v1028
    %v1273 = vpack.c.b16 %v1033, %v1029
    %v1274 = vpack.c.b16 %v1034, %v1030
    %v1275 = vpack.c.b16 %v1039, %v1035
    %v1276 = vpack.c.b16 %v1040, %v1036
    %v1277 = vpack.c.b16 %v1041, %v1037
    %v1278 = vpack.c.b16 %v1042, %v1038
    %v1279 = vpack.c.b16 %v1047, %v1043
    %v1280 = vpack.c.b16 %v1048, %v1044
    %v1281 = vpack.c.b16 %v1049, %v1045
    %v1282 = vpack.c.b16 %v1050, %v1046
    %v1283 = vpack.c.b16 %v1055, %v1051
    %v1284 = vpack.c.b16 %v1056, %v1052
    %v1285 = vpack.c.b16 %v1057, %v1053
    %v1286 = vpack.c.b16 %v1058, %v1054
    %v1287 = vpack.c.b16 %v1063, %v1059
    %v1288 = vpack.c.b16 %v1064, %v1060
    %v1289 = vpack.c.b16 %v1065, %v1061
    %v1290 = vpack.c.b16 %v1066, %v1062
    %1515 = vmatpush.bf16.msra.mxu0 %v1095
    %1516 = vmatpush.bf16.msra.mxu0 %v1091
    %1517 = vmatpush.bf16.msra.mxu0 %v1087
    %1518 = vmatpush.bf16.msra.mxu0 %v1083
    %1519 = vmatpush.bf16.msra.mxu0 %v1079
    %1520 = vmatpush.bf16.msra.mxu0 %v1075
    %1521 = vmatpush.bf16.msra.mxu0 %v1071
    %1522 = vmatpush.bf16.msra.mxu0 %v1067
    %1523 = vmatmul.bf16.gmra.mxu0 %v381
    %v1524 = vpop.f32.mrf.mxu0
    %v1525 = vadd.f32 %v351, %v1524
    %v1526 = vpop.f32.mrf.mxu0
    %v1527 = vadd.f32 %v351, %v1526
    %1528 = vdwg.mxu0
    %1529 = vmatpush.bf16.msra.mxu0 %v1127
    %1530 = vmatpush.bf16.msra.mxu0 %v1123
    %1531 = vmatpush.bf16.msra.mxu0 %v1119
    %1532 = vmatpush.bf16.msra.mxu0 %v1115
    %1533 = vmatpush.bf16.msra.mxu0 %v1111
    %1534 = vmatpush.bf16.msra.mxu0 %v1107
    %1535 = vmatpush.bf16.msra.mxu0 %v1103
    %1536 = vmatpush.bf16.msra.mxu0 %v1099
    %1537 = vmatmul.bf16.gmra.mxu0 %v382
    %v1538 = vpop.f32.mrf.mxu0
    %v1539 = vadd.f32 %v1525, %v1538
    %v1540 = vpop.f32.mrf.mxu0
    %v1541 = vadd.f32 %v1527, %v1540
    %1542 = vdwg.mxu0
    %1543 = vmatpush.bf16.msra.mxu0 %v1159
    %1544 = vmatpush.bf16.msra.mxu0 %v1155
    %1545 = vmatpush.bf16.msra.mxu0 %v1151
    %1546 = vmatpush.bf16.msra.mxu0 %v1147
    %1547 = vmatpush.bf16.msra.mxu0 %v1143
    %1548 = vmatpush.bf16.msra.mxu0 %v1139
    %1549 = vmatpush.bf16.msra.mxu0 %v1135
    %1550 = vmatpush.bf16.msra.mxu0 %v1131
    %1551 = vmatmul.bf16.gmra.mxu0 %v383
    %v1552 = vpop.f32.mrf.mxu0
    %v1553 = vadd.f32 %v1539, %v1552
    %v1554 = vpop.f32.mrf.mxu0
    %v1555 = vadd.f32 %v1541, %v1554
    %1556 = vdwg.mxu0
    %1557 = vmatpush.bf16.msra.mxu0 %v1191
    %1558 = vmatpush.bf16.msra.mxu0 %v1187
    %1559 = vmatpush.bf16.msra.mxu0 %v1183
    %1560 = vmatpush.bf16.msra.mxu0 %v1179
    %1561 = vmatpush.bf16.msra.mxu0 %v1175
    %1562 = vmatpush.bf16.msra.mxu0 %v1171
    %1563 = vmatpush.bf16.msra.mxu0 %v1167
    %1564 = vmatpush.bf16.msra.mxu0 %v1163
    %1565 = vmatmul.bf16.gmra.mxu0 %v384
    %v1566 = vpop.f32.mrf.mxu0
    %v1567 = vadd.f32 %v1553, %v1566
    %v1568 = vpop.f32.mrf.mxu0
    %v1569 = vadd.f32 %v1555, %v1568
    %1570 = vdwg.mxu0
    %1571 = vmatpush.bf16.msra.mxu0 %v1223
    %1572 = vmatpush.bf16.msra.mxu0 %v1219
    %1573 = vmatpush.bf16.msra.mxu0 %v1215
    %1574 = vmatpush.bf16.msra.mxu0 %v1211
    %1575 = vmatpush.bf16.msra.mxu0 %v1207
    %1576 = vmatpush.bf16.msra.mxu0 %v1203
    %1577 = vmatpush.bf16.msra.mxu0 %v1199
    %1578 = vmatpush.bf16.msra.mxu0 %v1195
    %1579 = vmatmul.bf16.gmra.mxu0 %v385
    %v1580 = vpop.f32.mrf.mxu0
    %v1581 = vadd.f32 %v1567, %v1580
    %v1582 = vpop.f32.mrf.mxu0
    %v1583 = vadd.f32 %v1569, %v1582
    %1584 = vdwg.mxu0
    %1585 = vmatpush.bf16.msra.mxu0 %v1255
    %1586 = vmatpush.bf16.msra.mxu0 %v1251
    %1587 = vmatpush.bf16.msra.mxu0 %v1247
    %1588 = vmatpush.bf16.msra.mxu0 %v1243
    %1589 = vmatpush.bf16.msra.mxu0 %v1239
    %1590 = vmatpush.bf16.msra.mxu0 %v1235
    %1591 = vmatpush.bf16.msra.mxu0 %v1231
    %1592 = vmatpush.bf16.msra.mxu0 %v1227
    %1593 = vmatmul.bf16.gmra.mxu0 %v386
    %v1594 = vpop.f32.mrf.mxu0
    %v1595 = vadd.f32 %v1581, %v1594
    %v1596 = vpop.f32.mrf.mxu0
    %v1597 = vadd.f32 %v1583, %v1596
    %1598 = vdwg.mxu0
    %1599 = vmatpush.bf16.msra.mxu0 %v1287
    %1600 = vmatpush.bf16.msra.mxu0 %v1283
    %1601 = vmatpush.bf16.msra.mxu0 %v1279
    %1602 = vmatpush.bf16.msra.mxu0 %v1275
    %1603 = vmatpush.bf16.msra.mxu0 %v1271
    %1604 = vmatpush.bf16.msra.mxu0 %v1267
    %1605 = vmatpush.bf16.msra.mxu0 %v1263
    %1606 = vmatpush.bf16.msra.mxu0 %v1259
    %1607 = vmatmul.bf16.gmra.mxu0 %v387
    %v1608 = vpop.f32.mrf.mxu0
    %v1609 = vadd.f32 %v1595, %v1608
    %v1610 = vpop.f32.mrf.mxu0
    %v1611 = vadd.f32 %v1597, %v1610
    %1612 = vdwg.mxu0
    %1613 = vmatpush.bf16.msra.mxu0 %v1096
    %1614 = vmatpush.bf16.msra.mxu0 %v1092
    %1615 = vmatpush.bf16.msra.mxu0 %v1088
    %1616 = vmatpush.bf16.msra.mxu0 %v1084
    %1617 = vmatpush.bf16.msra.mxu0 %v1080
    %1618 = vmatpush.bf16.msra.mxu0 %v1076
    %1619 = vmatpush.bf16.msra.mxu0 %v1072
    %1620 = vmatpush.bf16.msra.mxu0 %v1068
    %1621 = vmatmul.bf16.gmra.mxu0 %v381
    %v1622 = vpop.f32.mrf.mxu0
    %v1623 = vadd.f32 %v352, %v1622
    %v1624 = vpop.f32.mrf.mxu0
    %v1625 = vadd.f32 %v352, %v1624
    %1626 = vdwg.mxu0
    %1627 = vmatpush.bf16.msra.mxu0 %v1128
    %1628 = vmatpush.bf16.msra.mxu0 %v1124
    %1629 = vmatpush.bf16.msra.mxu0 %v1120
    %1630 = vmatpush.bf16.msra.mxu0 %v1116
    %1631 = vmatpush.bf16.msra.mxu0 %v1112
    %1632 = vmatpush.bf16.msra.mxu0 %v1108
    %1633 = vmatpush.bf16.msra.mxu0 %v1104
    %1634 = vmatpush.bf16.msra.mxu0 %v1100
    %1635 = vmatmul.bf16.gmra.mxu0 %v382
    %v1636 = vpop.f32.mrf.mxu0
    %v1637 = vadd.f32 %v1623, %v1636
    %v1638 = vpop.f32.mrf.mxu0
    %v1639 = vadd.f32 %v1625, %v1638
    %1640 = vdwg.mxu0
    %1641 = vmatpush.bf16.msra.mxu0 %v1160
    %1642 = vmatpush.bf16.msra.mxu0 %v1156
    %1643 = vmatpush.bf16.msra.mxu0 %v1152
    %1644 = vmatpush.bf16.msra.mxu0 %v1148
    %1645 = vmatpush.bf16.msra.mxu0 %v1144
    %1646 = vmatpush.bf16.msra.mxu0 %v1140
    %1647 = vmatpush.bf16.msra.mxu0 %v1136
    %1648 = vmatpush.bf16.msra.mxu0 %v1132
    %1649 = vmatmul.bf16.gmra.mxu0 %v383
    %v1650 = vpop.f32.mrf.mxu0
    %v1651 = vadd.f32 %v1637, %v1650
    %v1652 = vpop.f32.mrf.mxu0
    %v1653 = vadd.f32 %v1639, %v1652
    %1654 = vdwg.mxu0
    %1655 = vmatpush.bf16.msra.mxu0 %v1192
    %1656 = vmatpush.bf16.msra.mxu0 %v1188
    %1657 = vmatpush.bf16.msra.mxu0 %v1184
    %1658 = vmatpush.bf16.msra.mxu0 %v1180
    %1659 = vmatpush.bf16.msra.mxu0 %v1176
    %1660 = vmatpush.bf16.msra.mxu0 %v1172
    %1661 = vmatpush.bf16.msra.mxu0 %v1168
    %1662 = vmatpush.bf16.msra.mxu0 %v1164
    %1663 = vmatmul.bf16.gmra.mxu0 %v384
    %v1664 = vpop.f32.mrf.mxu0
    %v1665 = vadd.f32 %v1651, %v1664
    %v1666 = vpop.f32.mrf.mxu0
    %v1667 = vadd.f32 %v1653, %v1666
    %1668 = vdwg.mxu0
    %1669 = vmatpush.bf16.msra.mxu0 %v1224
    %1670 = vmatpush.bf16.msra.mxu0 %v1220
    %1671 = vmatpush.bf16.msra.mxu0 %v1216
    %1672 = vmatpush.bf16.msra.mxu0 %v1212
    %1673 = vmatpush.bf16.msra.mxu0 %v1208
    %1674 = vmatpush.bf16.msra.mxu0 %v1204
    %1675 = vmatpush.bf16.msra.mxu0 %v1200
    %1676 = vmatpush.bf16.msra.mxu0 %v1196
    %1677 = vmatmul.bf16.gmra.mxu0 %v385
    %v1678 = vpop.f32.mrf.mxu0
    %v1679 = vadd.f32 %v1665, %v1678
    %v1680 = vpop.f32.mrf.mxu0
    %v1681 = vadd.f32 %v1667, %v1680
    %1682 = vdwg.mxu0
    %1683 = vmatpush.bf16.msra.mxu0 %v1256
    %1684 = vmatpush.bf16.msra.mxu0 %v1252
    %1685 = vmatpush.bf16.msra.mxu0 %v1248
    %1686 = vmatpush.bf16.msra.mxu0 %v1244
    %1687 = vmatpush.bf16.msra.mxu0 %v1240
    %1688 = vmatpush.bf16.msra.mxu0 %v1236
    %1689 = vmatpush.bf16.msra.mxu0 %v1232
    %1690 = vmatpush.bf16.msra.mxu0 %v1228
    %1691 = vmatmul.bf16.gmra.mxu0 %v386
    %v1692 = vpop.f32.mrf.mxu0
    %v1693 = vadd.f32 %v1679, %v1692
    %v1694 = vpop.f32.mrf.mxu0
    %v1695 = vadd.f32 %v1681, %v1694
    %1696 = vdwg.mxu0
    %1697 = vmatpush.bf16.msra.mxu0 %v1288
    %1698 = vmatpush.bf16.msra.mxu0 %v1284
    %1699 = vmatpush.bf16.msra.mxu0 %v1280
    %1700 = vmatpush.bf16.msra.mxu0 %v1276
    %1701 = vmatpush.bf16.msra.mxu0 %v1272
    %1702 = vmatpush.bf16.msra.mxu0 %v1268
    %1703 = vmatpush.bf16.msra.mxu0 %v1264
    %1704 = vmatpush.bf16.msra.mxu0 %v1260
    %1705 = vmatmul.bf16.gmra.mxu0 %v387
    %v1706 = vpop.f32.mrf.mxu0
    %v1707 = vadd.f32 %v1693, %v1706
    %v1708 = vpop.f32.mrf.mxu0
    %v1709 = vadd.f32 %v1695, %v1708
    %1710 = vdwg.mxu0
    %1711 = vmatpush.bf16.msra.mxu0 %v1097
    %1712 = vmatpush.bf16.msra.mxu0 %v1093
    %1713 = vmatpush.bf16.msra.mxu0 %v1089
    %1714 = vmatpush.bf16.msra.mxu0 %v1085
    %1715 = vmatpush.bf16.msra.mxu0 %v1081
    %1716 = vmatpush.bf16.msra.mxu0 %v1077
    %1717 = vmatpush.bf16.msra.mxu0 %v1073
    %1718 = vmatpush.bf16.msra.mxu0 %v1069
    %1719 = vmatmul.bf16.gmra.mxu0 %v381
    %v1720 = vpop.f32.mrf.mxu0
    %v1721 = vadd.f32 %v353, %v1720
    %v1722 = vpop.f32.mrf.mxu0
    %v1723 = vadd.f32 %v353, %v1722
    %1724 = vdwg.mxu0
    %1725 = vmatpush.bf16.msra.mxu0 %v1129
    %1726 = vmatpush.bf16.msra.mxu0 %v1125
    %1727 = vmatpush.bf16.msra.mxu0 %v1121
    %1728 = vmatpush.bf16.msra.mxu0 %v1117
    %1729 = vmatpush.bf16.msra.mxu0 %v1113
    %1730 = vmatpush.bf16.msra.mxu0 %v1109
    %1731 = vmatpush.bf16.msra.mxu0 %v1105
    %1732 = vmatpush.bf16.msra.mxu0 %v1101
    %1733 = vmatmul.bf16.gmra.mxu0 %v382
    %v1734 = vpop.f32.mrf.mxu0
    %v1735 = vadd.f32 %v1721, %v1734
    %v1736 = vpop.f32.mrf.mxu0
    %v1737 = vadd.f32 %v1723, %v1736
    %1738 = vdwg.mxu0
    %1739 = vmatpush.bf16.msra.mxu0 %v1161
    %1740 = vmatpush.bf16.msra.mxu0 %v1157
    %1741 = vmatpush.bf16.msra.mxu0 %v1153
    %1742 = vmatpush.bf16.msra.mxu0 %v1149
    %1743 = vmatpush.bf16.msra.mxu0 %v1145
    %1744 = vmatpush.bf16.msra.mxu0 %v1141
    %1745 = vmatpush.bf16.msra.mxu0 %v1137
    %1746 = vmatpush.bf16.msra.mxu0 %v1133
    %1747 = vmatmul.bf16.gmra.mxu0 %v383
    %v1748 = vpop.f32.mrf.mxu0
    %v1749 = vadd.f32 %v1735, %v1748
    %v1750 = vpop.f32.mrf.mxu0
    %v1751 = vadd.f32 %v1737, %v1750
    %1752 = vdwg.mxu0
    %1753 = vmatpush.bf16.msra.mxu0 %v1193
    %1754 = vmatpush.bf16.msra.mxu0 %v1189
    %1755 = vmatpush.bf16.msra.mxu0 %v1185
    %1756 = vmatpush.bf16.msra.mxu0 %v1181
    %1757 = vmatpush.bf16.msra.mxu0 %v1177
    %1758 = vmatpush.bf16.msra.mxu0 %v1173
    %1759 = vmatpush.bf16.msra.mxu0 %v1169
    %1760 = vmatpush.bf16.msra.mxu0 %v1165
    %1761 = vmatmul.bf16.gmra.mxu0 %v384
    %v1762 = vpop.f32.mrf.mxu0
    %v1763 = vadd.f32 %v1749, %v1762
    %v1764 = vpop.f32.mrf.mxu0
    %v1765 = vadd.f32 %v1751, %v1764
    %1766 = vdwg.mxu0
    %1767 = vmatpush.bf16.msra.mxu0 %v1225
    %1768 = vmatpush.bf16.msra.mxu0 %v1221
    %1769 = vmatpush.bf16.msra.mxu0 %v1217
    %1770 = vmatpush.bf16.msra.mxu0 %v1213
    %1771 = vmatpush.bf16.msra.mxu0 %v1209
    %1772 = vmatpush.bf16.msra.mxu0 %v1205
    %1773 = vmatpush.bf16.msra.mxu0 %v1201
    %1774 = vmatpush.bf16.msra.mxu0 %v1197
    %1775 = vmatmul.bf16.gmra.mxu0 %v385
    %v1776 = vpop.f32.mrf.mxu0
    %v1777 = vadd.f32 %v1763, %v1776
    %v1778 = vpop.f32.mrf.mxu0
    %v1779 = vadd.f32 %v1765, %v1778
    %1780 = vdwg.mxu0
    %1781 = vmatpush.bf16.msra.mxu0 %v1257
    %1782 = vmatpush.bf16.msra.mxu0 %v1253
    %1783 = vmatpush.bf16.msra.mxu0 %v1249
    %1784 = vmatpush.bf16.msra.mxu0 %v1245
    %1785 = vmatpush.bf16.msra.mxu0 %v1241
    %1786 = vmatpush.bf16.msra.mxu0 %v1237
    %1787 = vmatpush.bf16.msra.mxu0 %v1233
    %1788 = vmatpush.bf16.msra.mxu0 %v1229
    %1789 = vmatmul.bf16.gmra.mxu0 %v386
    %v1790 = vpop.f32.mrf.mxu0
    %v1791 = vadd.f32 %v1777, %v1790
    %v1792 = vpop.f32.mrf.mxu0
    %v1793 = vadd.f32 %v1779, %v1792
    %1794 = vdwg.mxu0
    %1795 = vmatpush.bf16.msra.mxu0 %v1289
    %1796 = vmatpush.bf16.msra.mxu0 %v1285
    %1797 = vmatpush.bf16.msra.mxu0 %v1281
    %1798 = vmatpush.bf16.msra.mxu0 %v1277
    %1799 = vmatpush.bf16.msra.mxu0 %v1273
    %1800 = vmatpush.bf16.msra.mxu0 %v1269
    %1801 = vmatpush.bf16.msra.mxu0 %v1265
    %1802 = vmatpush.bf16.msra.mxu0 %v1261
    %1803 = vmatmul.bf16.gmra.mxu0 %v387
    %v1804 = vpop.f32.mrf.mxu0
    %v1805 = vadd.f32 %v1791, %v1804
    %v1806 = vpop.f32.mrf.mxu0
    %v1807 = vadd.f32 %v1793, %v1806
    %1808 = vdwg.mxu0
    %1809 = vmatpush.bf16.msra.mxu0 %v1098
    %1810 = vmatpush.bf16.msra.mxu0 %v1094
    %1811 = vmatpush.bf16.msra.mxu0 %v1090
    %1812 = vmatpush.bf16.msra.mxu0 %v1086
    %1813 = vmatpush.bf16.msra.mxu0 %v1082
    %1814 = vmatpush.bf16.msra.mxu0 %v1078
    %1815 = vmatpush.bf16.msra.mxu0 %v1074
    %1816 = vmatpush.bf16.msra.mxu0 %v1070
    %1817 = vmatmul.bf16.gmra.mxu0 %v381
    %v1818 = vpop.f32.mrf.mxu0
    %v1819 = vadd.f32 %v354, %v1818
    %v1820 = vpop.f32.mrf.mxu0
    %v1821 = vadd.f32 %v354, %v1820
    %1822 = vdwg.mxu0
    %1823 = vmatpush.bf16.msra.mxu0 %v1130
    %1824 = vmatpush.bf16.msra.mxu0 %v1126
    %1825 = vmatpush.bf16.msra.mxu0 %v1122
    %1826 = vmatpush.bf16.msra.mxu0 %v1118
    %1827 = vmatpush.bf16.msra.mxu0 %v1114
    %1828 = vmatpush.bf16.msra.mxu0 %v1110
    %1829 = vmatpush.bf16.msra.mxu0 %v1106
    %1830 = vmatpush.bf16.msra.mxu0 %v1102
    %1831 = vmatmul.bf16.gmra.mxu0 %v382
    %v1832 = vpop.f32.mrf.mxu0
    %v1833 = vadd.f32 %v1819, %v1832
    %v1834 = vpop.f32.mrf.mxu0
    %v1835 = vadd.f32 %v1821, %v1834
    %1836 = vdwg.mxu0
    %1837 = vmatpush.bf16.msra.mxu0 %v1162
    %1838 = vmatpush.bf16.msra.mxu0 %v1158
    %1839 = vmatpush.bf16.msra.mxu0 %v1154
    %1840 = vmatpush.bf16.msra.mxu0 %v1150
    %1841 = vmatpush.bf16.msra.mxu0 %v1146
    %1842 = vmatpush.bf16.msra.mxu0 %v1142
    %1843 = vmatpush.bf16.msra.mxu0 %v1138
    %1844 = vmatpush.bf16.msra.mxu0 %v1134
    %1845 = vmatmul.bf16.gmra.mxu0 %v383
    %v1846 = vpop.f32.mrf.mxu0
    %v1847 = vadd.f32 %v1833, %v1846
    %v1848 = vpop.f32.mrf.mxu0
    %v1849 = vadd.f32 %v1835, %v1848
    %1850 = vdwg.mxu0
    %1851 = vmatpush.bf16.msra.mxu0 %v1194
    %1852 = vmatpush.bf16.msra.mxu0 %v1190
    %1853 = vmatpush.bf16.msra.mxu0 %v1186
    %1854 = vmatpush.bf16.msra.mxu0 %v1182
    %1855 = vmatpush.bf16.msra.mxu0 %v1178
    %1856 = vmatpush.bf16.msra.mxu0 %v1174
    %1857 = vmatpush.bf16.msra.mxu0 %v1170
    %1858 = vmatpush.bf16.msra.mxu0 %v1166
    %1859 = vmatmul.bf16.gmra.mxu0 %v384
    %v1860 = vpop.f32.mrf.mxu0
    %v1861 = vadd.f32 %v1847, %v1860
    %v1862 = vpop.f32.mrf.mxu0
    %v1863 = vadd.f32 %v1849, %v1862
    %1864 = vdwg.mxu0
    %1865 = vmatpush.bf16.msra.mxu0 %v1226
    %1866 = vmatpush.bf16.msra.mxu0 %v1222
    %1867 = vmatpush.bf16.msra.mxu0 %v1218
    %1868 = vmatpush.bf16.msra.mxu0 %v1214
    %1869 = vmatpush.bf16.msra.mxu0 %v1210
    %1870 = vmatpush.bf16.msra.mxu0 %v1206
    %1871 = vmatpush.bf16.msra.mxu0 %v1202
    %1872 = vmatpush.bf16.msra.mxu0 %v1198
    %1873 = vmatmul.bf16.gmra.mxu0 %v385
    %v1874 = vpop.f32.mrf.mxu0
    %v1875 = vadd.f32 %v1861, %v1874
    %v1876 = vpop.f32.mrf.mxu0
    %v1877 = vadd.f32 %v1863, %v1876
    %1878 = vdwg.mxu0
    %1879 = vmatpush.bf16.msra.mxu0 %v1258
    %1880 = vmatpush.bf16.msra.mxu0 %v1254
    %1881 = vmatpush.bf16.msra.mxu0 %v1250
    %1882 = vmatpush.bf16.msra.mxu0 %v1246
    %1883 = vmatpush.bf16.msra.mxu0 %v1242
    %1884 = vmatpush.bf16.msra.mxu0 %v1238
    %1885 = vmatpush.bf16.msra.mxu0 %v1234
    %1886 = vmatpush.bf16.msra.mxu0 %v1230
    %1887 = vmatmul.bf16.gmra.mxu0 %v386
    %v1888 = vpop.f32.mrf.mxu0
    %v1889 = vadd.f32 %v1875, %v1888
    %v1890 = vpop.f32.mrf.mxu0
    %v1891 = vadd.f32 %v1877, %v1890
    %1892 = vdwg.mxu0
    %1893 = vmatpush.bf16.msra.mxu0 %v1290
    %1894 = vmatpush.bf16.msra.mxu0 %v1286
    %1895 = vmatpush.bf16.msra.mxu0 %v1282
    %1896 = vmatpush.bf16.msra.mxu0 %v1278
    %1897 = vmatpush.bf16.msra.mxu0 %v1274
    %1898 = vmatpush.bf16.msra.mxu0 %v1270
    %1899 = vmatpush.bf16.msra.mxu0 %v1266
    %1900 = vmatpush.bf16.msra.mxu0 %v1262
    %1901 = vmatmul.bf16.gmra.mxu0 %v387
    %v1902 = vpop.f32.mrf.mxu0
    %v1903 = vadd.f32 %v1889, %v1902
    %v1904 = vpop.f32.mrf.mxu0
    %v1905 = vadd.f32 %v1891, %v1904
    %1906 = vdwg.mxu0
    %v1907 = vmax.f32 %v1609, 0.0
    %v1908 = vmax.f32 %v1707, 0.0
    %v1909 = vmax.f32 %v1805, 0.0
    %v1910 = vmax.f32 %v1903, 0.0
    %v1911 = vmax.f32 %v1611, 0.0
    %v1912 = vmax.f32 %v1709, 0.0
    %v1913 = vmax.f32 %v1807, 0.0
    %v1914 = vmax.f32 %v1905, 0.0
    %v1915 = vpack.c.bf16 %v1911, %v1907
    %v1916 = vpack.c.bf16 %v1912, %v1908
    %v1917 = vpack.c.bf16 %v1913, %v1909
    %v1918 = vpack.c.bf16 %v1914, %v1910
    %v1919 = vld [vmem:[#allocation8] sm:$0xff]
    %v1920 = vld [vmem:[#allocation8 + $0x8] sm:$0xff]
    %v1921 = vld [vmem:[#allocation8 + $0x10] sm:$0xff]
    %v1922 = vld [vmem:[#allocation8 + $0x18] sm:$0xff]
    %v1923 = vld [vmem:[#allocation8 + $0x20] sm:$0xff]
    %v1924 = vld [vmem:[#allocation8 + $0x28] sm:$0xff]
    %v1925 = vld [vmem:[#allocation8 + $0x30] sm:$0xff]
    %v1926 = vld [vmem:[#allocation8 + $0x38] sm:$0xff]
    %v1927 = vld [vmem:[#allocation8 + $0x40] sm:$0xff]
    %v1928 = vld [vmem:[#allocation8 + $0x48] sm:$0xff]
    %v1929 = vld [vmem:[#allocation8 + $0x50] sm:$0xff]
    %v1930 = vld [vmem:[#allocation8 + $0x58] sm:$0xff]
    %v1931 = vld [vmem:[#allocation8 + $0x60] sm:$0xff]
    %v1932 = vld [vmem:[#allocation8 + $0x68] sm:$0xff]
    %v1933 = vld [vmem:[#allocation8 + $0x70] sm:$0xff]
    %v1934 = vld [vmem:[#allocation8 + $0x78] sm:$0xff]
    %v1935 = vld [vmem:[#allocation8 + $0x80] sm:$0xff]
    %v1936 = vld [vmem:[#allocation8 + $0x88] sm:$0xff]
    %v1937 = vld [vmem:[#allocation8 + $0x90] sm:$0xff]
    %v1938 = vld [vmem:[#allocation8 + $0x98] sm:$0xff]
    %v1939 = vld [vmem:[#allocation8 + $0xa0] sm:$0xff]
    %v1940 = vld [vmem:[#allocation8 + $0xa8] sm:$0xff]
    %v1941 = vld [vmem:[#allocation8 + $0xb0] sm:$0xff]
    %v1942 = vld [vmem:[#allocation8 + $0xb8] sm:$0xff]
    %v1943 = vld [vmem:[#allocation8 + $0xc0] sm:$0xff]
    %v1944 = vld [vmem:[#allocation8 + $0xc8] sm:$0xff]
    %v1945 = vld [vmem:[#allocation8 + $0xd0] sm:$0xff]
    %v1946 = vld [vmem:[#allocation8 + $0xd8] sm:$0xff]
    %v1947 = vld [vmem:[#allocation8 + $0xe0] sm:$0xff]
    %v1948 = vld [vmem:[#allocation8 + $0xe8] sm:$0xff]
    %v1949 = vld [vmem:[#allocation8 + $0xf0] sm:$0xff]
    %v1950 = vld [vmem:[#allocation8 + $0xf8] sm:$0xff]
    %v1951 = vld [vmem:[#allocation8 + $0x100] sm:$0xff]
    %v1952 = vld [vmem:[#allocation8 + $0x108] sm:$0xff]
    %v1953 = vld [vmem:[#allocation8 + $0x110] sm:$0xff]
    %v1954 = vld [vmem:[#allocation8 + $0x118] sm:$0xff]
    %v1955 = vld [vmem:[#allocation8 + $0x120] sm:$0xff]
    %v1956 = vld [vmem:[#allocation8 + $0x128] sm:$0xff]
    %v1957 = vld [vmem:[#allocation8 + $0x130] sm:$0xff]
    %v1958 = vld [vmem:[#allocation8 + $0x138] sm:$0xff]
    %v1959 = vld [vmem:[#allocation8 + $0x140] sm:$0xff]
    %v1960 = vld [vmem:[#allocation8 + $0x148] sm:$0xff]
    %v1961 = vld [vmem:[#allocation8 + $0x150] sm:$0xff]
    %v1962 = vld [vmem:[#allocation8 + $0x158] sm:$0xff]
    %v1963 = vld [vmem:[#allocation8 + $0x160] sm:$0xff]
    %v1964 = vld [vmem:[#allocation8 + $0x168] sm:$0xff]
    %v1965 = vld [vmem:[#allocation8 + $0x170] sm:$0xff]
    %v1966 = vld [vmem:[#allocation8 + $0x178] sm:$0xff]
    %v1967 = vld [vmem:[#allocation8 + $0x180] sm:$0xff]
    %v1968 = vld [vmem:[#allocation8 + $0x188] sm:$0xff]
    %v1969 = vld [vmem:[#allocation8 + $0x190] sm:$0xff]
    %v1970 = vld [vmem:[#allocation8 + $0x198] sm:$0xff]
    %v1971 = vld [vmem:[#allocation8 + $0x1a0] sm:$0xff]
    %v1972 = vld [vmem:[#allocation8 + $0x1a8] sm:$0xff]
    %v1973 = vld [vmem:[#allocation8 + $0x1b0] sm:$0xff]
    %v1974 = vld [vmem:[#allocation8 + $0x1b8] sm:$0xff]
    %v1975 = vld [vmem:[#allocation8 + $0x1c0] sm:$0xff]
    %v1976 = vld [vmem:[#allocation8 + $0x1c8] sm:$0xff]
    %v1977 = vld [vmem:[#allocation8 + $0x1d0] sm:$0xff]
    %v1978 = vld [vmem:[#allocation8 + $0x1d8] sm:$0xff]
    %v1979 = vld [vmem:[#allocation8 + $0x1e0] sm:$0xff]
    %v1980 = vld [vmem:[#allocation8 + $0x1e8] sm:$0xff]
    %v1981 = vld [vmem:[#allocation8 + $0x1f0] sm:$0xff]
    %v1982 = vld [vmem:[#allocation8 + $0x1f8] sm:$0xff]
    %v1983 = vld [vmem:[#allocation8 + $0x200] sm:$0xff]
    %v1984 = vld [vmem:[#allocation8 + $0x208] sm:$0xff]
    %v1985 = vld [vmem:[#allocation8 + $0x210] sm:$0xff]
    %v1986 = vld [vmem:[#allocation8 + $0x218] sm:$0xff]
    %v1987 = vld [vmem:[#allocation8 + $0x220] sm:$0xff]
    %v1988 = vld [vmem:[#allocation8 + $0x228] sm:$0xff]
    %v1989 = vld [vmem:[#allocation8 + $0x230] sm:$0xff]
    %v1990 = vld [vmem:[#allocation8 + $0x238] sm:$0xff]
    %v1991 = vld [vmem:[#allocation8 + $0x240] sm:$0xff]
    %v1992 = vld [vmem:[#allocation8 + $0x248] sm:$0xff]
    %v1993 = vld [vmem:[#allocation8 + $0x250] sm:$0xff]
    %v1994 = vld [vmem:[#allocation8 + $0x258] sm:$0xff]
    %v1995 = vld [vmem:[#allocation8 + $0x260] sm:$0xff]
    %v1996 = vld [vmem:[#allocation8 + $0x268] sm:$0xff]
    %v1997 = vld [vmem:[#allocation8 + $0x270] sm:$0xff]
    %v1998 = vld [vmem:[#allocation8 + $0x278] sm:$0xff]
    %v1999 = vld [vmem:[#allocation8 + $0x280] sm:$0xff]
    %v2000 = vld [vmem:[#allocation8 + $0x288] sm:$0xff]
    %v2001 = vld [vmem:[#allocation8 + $0x290] sm:$0xff]
    %v2002 = vld [vmem:[#allocation8 + $0x298] sm:$0xff]
    %v2003 = vld [vmem:[#allocation8 + $0x2a0] sm:$0xff]
    %v2004 = vld [vmem:[#allocation8 + $0x2a8] sm:$0xff]
    %v2005 = vld [vmem:[#allocation8 + $0x2b0] sm:$0xff]
    %v2006 = vld [vmem:[#allocation8 + $0x2b8] sm:$0xff]
    %v2007 = vld [vmem:[#allocation8 + $0x2c0] sm:$0xff]
    %v2008 = vld [vmem:[#allocation8 + $0x2c8] sm:$0xff]
    %v2009 = vld [vmem:[#allocation8 + $0x2d0] sm:$0xff]
    %v2010 = vld [vmem:[#allocation8 + $0x2d8] sm:$0xff]
    %v2011 = vld [vmem:[#allocation8 + $0x2e0] sm:$0xff]
    %v2012 = vld [vmem:[#allocation8 + $0x2e8] sm:$0xff]
    %v2013 = vld [vmem:[#allocation8 + $0x2f0] sm:$0xff]
    %v2014 = vld [vmem:[#allocation8 + $0x2f8] sm:$0xff]
    %v2015 = vld [vmem:[#allocation8 + $0x300] sm:$0xff]
    %v2016 = vld [vmem:[#allocation8 + $0x308] sm:$0xff]
    %v2017 = vld [vmem:[#allocation8 + $0x310] sm:$0xff]
    %v2018 = vld [vmem:[#allocation8 + $0x318] sm:$0xff]
    %v2019 = vld [vmem:[#allocation8 + $0x320] sm:$0xff]
    %v2020 = vld [vmem:[#allocation8 + $0x328] sm:$0xff]
    %v2021 = vld [vmem:[#allocation8 + $0x330] sm:$0xff]
    %v2022 = vld [vmem:[#allocation8 + $0x338] sm:$0xff]
    %v2023 = vld [vmem:[#allocation8 + $0x340] sm:$0xff]
    %v2024 = vld [vmem:[#allocation8 + $0x348] sm:$0xff]
    %v2025 = vld [vmem:[#allocation8 + $0x350] sm:$0xff]
    %v2026 = vld [vmem:[#allocation8 + $0x358] sm:$0xff]
    %v2027 = vld [vmem:[#allocation8 + $0x360] sm:$0xff]
    %v2028 = vld [vmem:[#allocation8 + $0x368] sm:$0xff]
    %v2029 = vld [vmem:[#allocation8 + $0x370] sm:$0xff]
    %v2030 = vld [vmem:[#allocation8 + $0x378] sm:$0xff]
    %v2031 = vld [vmem:[#allocation8 + $0x380] sm:$0xff]
    %v2032 = vld [vmem:[#allocation8 + $0x388] sm:$0xff]
    %v2033 = vld [vmem:[#allocation8 + $0x390] sm:$0xff]
    %v2034 = vld [vmem:[#allocation8 + $0x398] sm:$0xff]
    %v2035 = vld [vmem:[#allocation8 + $0x3a0] sm:$0xff]
    %v2036 = vld [vmem:[#allocation8 + $0x3a8] sm:$0xff]
    %v2037 = vld [vmem:[#allocation8 + $0x3b0] sm:$0xff]
    %v2038 = vld [vmem:[#allocation8 + $0x3b8] sm:$0xff]
    %v2039 = vld [vmem:[#allocation8 + $0x3c0] sm:$0xff]
    %v2040 = vld [vmem:[#allocation8 + $0x3c8] sm:$0xff]
    %v2041 = vld [vmem:[#allocation8 + $0x3d0] sm:$0xff]
    %v2042 = vld [vmem:[#allocation8 + $0x3d8] sm:$0xff]
    %v2043 = vld [vmem:[#allocation8 + $0x3e0] sm:$0xff]
    %v2044 = vld [vmem:[#allocation8 + $0x3e8] sm:$0xff]
    %v2045 = vld [vmem:[#allocation8 + $0x3f0] sm:$0xff]
    %v2046 = vld [vmem:[#allocation8 + $0x3f8] sm:$0xff]
    %v2047 = vld [vmem:[#allocation10] sm:$0xf]
    %v2049 = vperm.slane %v2047, 0
    %v2050 = vperm.slane %v2047, 1
    %v2051 = vperm.slane %v2047, 2
    %v2052 = vperm.slane %v2047, 3
    %v2185 = vunpack.c.l.b16 %v1919
    %v2186 = vunpack.c.h.b16 %v1919
    %v2187 = vunpack.c.l.b16 %v1920
    %v2188 = vunpack.c.h.b16 %v1920
    %v2189 = vunpack.c.l.b16 %v1921
    %v2190 = vunpack.c.h.b16 %v1921
    %v2191 = vunpack.c.l.b16 %v1922
    %v2192 = vunpack.c.h.b16 %v1922
    %v2193 = vunpack.c.l.b16 %v1923
    %v2194 = vunpack.c.h.b16 %v1923
    %v2195 = vunpack.c.l.b16 %v1924
    %v2196 = vunpack.c.h.b16 %v1924
    %v2197 = vunpack.c.l.b16 %v1925
    %v2198 = vunpack.c.h.b16 %v1925
    %v2199 = vunpack.c.l.b16 %v1926
    %v2200 = vunpack.c.h.b16 %v1926
    %v2201 = vunpack.c.l.b16 %v1927
    %v2202 = vunpack.c.h.b16 %v1927
    %v2203 = vunpack.c.l.b16 %v1928
    %v2204 = vunpack.c.h.b16 %v1928
    %v2205 = vunpack.c.l.b16 %v1929
    %v2206 = vunpack.c.h.b16 %v1929
    %v2207 = vunpack.c.l.b16 %v1930
    %v2208 = vunpack.c.h.b16 %v1930
    %v2209 = vunpack.c.l.b16 %v1931
    %v2210 = vunpack.c.h.b16 %v1931
    %v2211 = vunpack.c.l.b16 %v1932
    %v2212 = vunpack.c.h.b16 %v1932
    %v2213 = vunpack.c.l.b16 %v1933
    %v2214 = vunpack.c.h.b16 %v1933
    %v2215 = vunpack.c.l.b16 %v1934
    %v2216 = vunpack.c.h.b16 %v1934
    %v2217 = vunpack.c.l.b16 %v1935
    %v2218 = vunpack.c.h.b16 %v1935
    %v2219 = vunpack.c.l.b16 %v1936
    %v2220 = vunpack.c.h.b16 %v1936
    %v2221 = vunpack.c.l.b16 %v1937
    %v2222 = vunpack.c.h.b16 %v1937
    %v2223 = vunpack.c.l.b16 %v1938
    %v2224 = vunpack.c.h.b16 %v1938
    %v2225 = vunpack.c.l.b16 %v1939
    %v2226 = vunpack.c.h.b16 %v1939
    %v2227 = vunpack.c.l.b16 %v1940
    %v2228 = vunpack.c.h.b16 %v1940
    %v2229 = vunpack.c.l.b16 %v1941
    %v2230 = vunpack.c.h.b16 %v1941
    %v2231 = vunpack.c.l.b16 %v1942
    %v2232 = vunpack.c.h.b16 %v1942
    %v2233 = vunpack.c.l.b16 %v1943
    %v2234 = vunpack.c.h.b16 %v1943
    %v2235 = vunpack.c.l.b16 %v1944
    %v2236 = vunpack.c.h.b16 %v1944
    %v2237 = vunpack.c.l.b16 %v1945
    %v2238 = vunpack.c.h.b16 %v1945
    %v2239 = vunpack.c.l.b16 %v1946
    %v2240 = vunpack.c.h.b16 %v1946
    %v2241 = vunpack.c.l.b16 %v1947
    %v2242 = vunpack.c.h.b16 %v1947
    %v2243 = vunpack.c.l.b16 %v1948
    %v2244 = vunpack.c.h.b16 %v1948
    %v2245 = vunpack.c.l.b16 %v1949
    %v2246 = vunpack.c.h.b16 %v1949
    %v2247 = vunpack.c.l.b16 %v1950
    %v2248 = vunpack.c.h.b16 %v1950
    %v2249 = vunpack.c.l.b16 %v1951
    %v2250 = vunpack.c.h.b16 %v1951
    %v2251 = vunpack.c.l.b16 %v1952
    %v2252 = vunpack.c.h.b16 %v1952
    %v2253 = vunpack.c.l.b16 %v1953
    %v2254 = vunpack.c.h.b16 %v1953
    %v2255 = vunpack.c.l.b16 %v1954
    %v2256 = vunpack.c.h.b16 %v1954
    %v2257 = vunpack.c.l.b16 %v1955
    %v2258 = vunpack.c.h.b16 %v1955
    %v2259 = vunpack.c.l.b16 %v1956
    %v2260 = vunpack.c.h.b16 %v1956
    %v2261 = vunpack.c.l.b16 %v1957
    %v2262 = vunpack.c.h.b16 %v1957
    %v2263 = vunpack.c.l.b16 %v1958
    %v2264 = vunpack.c.h.b16 %v1958
    %v2265 = vunpack.c.l.b16 %v1959
    %v2266 = vunpack.c.h.b16 %v1959
    %v2267 = vunpack.c.l.b16 %v1960
    %v2268 = vunpack.c.h.b16 %v1960
    %v2269 = vunpack.c.l.b16 %v1961
    %v2270 = vunpack.c.h.b16 %v1961
    %v2271 = vunpack.c.l.b16 %v1962
    %v2272 = vunpack.c.h.b16 %v1962
    %v2273 = vunpack.c.l.b16 %v1963
    %v2274 = vunpack.c.h.b16 %v1963
    %v2275 = vunpack.c.l.b16 %v1964
    %v2276 = vunpack.c.h.b16 %v1964
    %v2277 = vunpack.c.l.b16 %v1965
    %v2278 = vunpack.c.h.b16 %v1965
    %v2279 = vunpack.c.l.b16 %v1966
    %v2280 = vunpack.c.h.b16 %v1966
    %v2281 = vunpack.c.l.b16 %v1967
    %v2282 = vunpack.c.h.b16 %v1967
    %v2283 = vunpack.c.l.b16 %v1968
    %v2284 = vunpack.c.h.b16 %v1968
    %v2285 = vunpack.c.l.b16 %v1969
    %v2286 = vunpack.c.h.b16 %v1969
    %v2287 = vunpack.c.l.b16 %v1970
    %v2288 = vunpack.c.h.b16 %v1970
    %v2289 = vunpack.c.l.b16 %v1971
    %v2290 = vunpack.c.h.b16 %v1971
    %v2291 = vunpack.c.l.b16 %v1972
    %v2292 = vunpack.c.h.b16 %v1972
    %v2293 = vunpack.c.l.b16 %v1973
    %v2294 = vunpack.c.h.b16 %v1973
    %v2295 = vunpack.c.l.b16 %v1974
    %v2296 = vunpack.c.h.b16 %v1974
    %v2297 = vunpack.c.l.b16 %v1975
    %v2298 = vunpack.c.h.b16 %v1975
    %v2299 = vunpack.c.l.b16 %v1976
    %v2300 = vunpack.c.h.b16 %v1976
    %v2301 = vunpack.c.l.b16 %v1977
    %v2302 = vunpack.c.h.b16 %v1977
    %v2303 = vunpack.c.l.b16 %v1978
    %v2304 = vunpack.c.h.b16 %v1978
    %v2305 = vunpack.c.l.b16 %v1979
    %v2306 = vunpack.c.h.b16 %v1979
    %v2307 = vunpack.c.l.b16 %v1980
    %v2308 = vunpack.c.h.b16 %v1980
    %v2309 = vunpack.c.l.b16 %v1981
    %v2310 = vunpack.c.h.b16 %v1981
    %v2311 = vunpack.c.l.b16 %v1982
    %v2312 = vunpack.c.h.b16 %v1982
    %v2313 = vunpack.c.l.b16 %v1983
    %v2314 = vunpack.c.h.b16 %v1983
    %v2315 = vunpack.c.l.b16 %v1984
    %v2316 = vunpack.c.h.b16 %v1984
    %v2317 = vunpack.c.l.b16 %v1985
    %v2318 = vunpack.c.h.b16 %v1985
    %v2319 = vunpack.c.l.b16 %v1986
    %v2320 = vunpack.c.h.b16 %v1986
    %v2321 = vunpack.c.l.b16 %v1987
    %v2322 = vunpack.c.h.b16 %v1987
    %v2323 = vunpack.c.l.b16 %v1988
    %v2324 = vunpack.c.h.b16 %v1988
    %v2325 = vunpack.c.l.b16 %v1989
    %v2326 = vunpack.c.h.b16 %v1989
    %v2327 = vunpack.c.l.b16 %v1990
    %v2328 = vunpack.c.h.b16 %v1990
    %v2329 = vunpack.c.l.b16 %v1991
    %v2330 = vunpack.c.h.b16 %v1991
    %v2331 = vunpack.c.l.b16 %v1992
    %v2332 = vunpack.c.h.b16 %v1992
    %v2333 = vunpack.c.l.b16 %v1993
    %v2334 = vunpack.c.h.b16 %v1993
    %v2335 = vunpack.c.l.b16 %v1994
    %v2336 = vunpack.c.h.b16 %v1994
    %v2337 = vunpack.c.l.b16 %v1995
    %v2338 = vunpack.c.h.b16 %v1995
    %v2339 = vunpack.c.l.b16 %v1996
    %v2340 = vunpack.c.h.b16 %v1996
    %v2341 = vunpack.c.l.b16 %v1997
    %v2342 = vunpack.c.h.b16 %v1997
    %v2343 = vunpack.c.l.b16 %v1998
    %v2344 = vunpack.c.h.b16 %v1998
    %v2345 = vunpack.c.l.b16 %v1999
    %v2346 = vunpack.c.h.b16 %v1999
    %v2347 = vunpack.c.l.b16 %v2000
    %v2348 = vunpack.c.h.b16 %v2000
    %v2349 = vunpack.c.l.b16 %v2001
    %v2350 = vunpack.c.h.b16 %v2001
    %v2351 = vunpack.c.l.b16 %v2002
    %v2352 = vunpack.c.h.b16 %v2002
    %v2353 = vunpack.c.l.b16 %v2003
    %v2354 = vunpack.c.h.b16 %v2003
    %v2355 = vunpack.c.l.b16 %v2004
    %v2356 = vunpack.c.h.b16 %v2004
    %v2357 = vunpack.c.l.b16 %v2005
    %v2358 = vunpack.c.h.b16 %v2005
    %v2359 = vunpack.c.l.b16 %v2006
    %v2360 = vunpack.c.h.b16 %v2006
    %v2361 = vunpack.c.l.b16 %v2007
    %v2362 = vunpack.c.h.b16 %v2007
    %v2363 = vunpack.c.l.b16 %v2008
    %v2364 = vunpack.c.h.b16 %v2008
    %v2365 = vunpack.c.l.b16 %v2009
    %v2366 = vunpack.c.h.b16 %v2009
    %v2367 = vunpack.c.l.b16 %v2010
    %v2368 = vunpack.c.h.b16 %v2010
    %v2369 = vunpack.c.l.b16 %v2011
    %v2370 = vunpack.c.h.b16 %v2011
    %v2371 = vunpack.c.l.b16 %v2012
    %v2372 = vunpack.c.h.b16 %v2012
    %v2373 = vunpack.c.l.b16 %v2013
    %v2374 = vunpack.c.h.b16 %v2013
    %v2375 = vunpack.c.l.b16 %v2014
    %v2376 = vunpack.c.h.b16 %v2014
    %v2377 = vunpack.c.l.b16 %v2015
    %v2378 = vunpack.c.h.b16 %v2015
    %v2379 = vunpack.c.l.b16 %v2016
    %v2380 = vunpack.c.h.b16 %v2016
    %v2381 = vunpack.c.l.b16 %v2017
    %v2382 = vunpack.c.h.b16 %v2017
    %v2383 = vunpack.c.l.b16 %v2018
    %v2384 = vunpack.c.h.b16 %v2018
    %v2385 = vunpack.c.l.b16 %v2019
    %v2386 = vunpack.c.h.b16 %v2019
    %v2387 = vunpack.c.l.b16 %v2020
    %v2388 = vunpack.c.h.b16 %v2020
    %v2389 = vunpack.c.l.b16 %v2021
    %v2390 = vunpack.c.h.b16 %v2021
    %v2391 = vunpack.c.l.b16 %v2022
    %v2392 = vunpack.c.h.b16 %v2022
    %v2393 = vunpack.c.l.b16 %v2023
    %v2394 = vunpack.c.h.b16 %v2023
    %v2395 = vunpack.c.l.b16 %v2024
    %v2396 = vunpack.c.h.b16 %v2024
    %v2397 = vunpack.c.l.b16 %v2025
    %v2398 = vunpack.c.h.b16 %v2025
    %v2399 = vunpack.c.l.b16 %v2026
    %v2400 = vunpack.c.h.b16 %v2026
    %v2401 = vunpack.c.l.b16 %v2027
    %v2402 = vunpack.c.h.b16 %v2027
    %v2403 = vunpack.c.l.b16 %v2028
    %v2404 = vunpack.c.h.b16 %v2028
    %v2405 = vunpack.c.l.b16 %v2029
    %v2406 = vunpack.c.h.b16 %v2029
    %v2407 = vunpack.c.l.b16 %v2030
    %v2408 = vunpack.c.h.b16 %v2030
    %v2409 = vunpack.c.l.b16 %v2031
    %v2410 = vunpack.c.h.b16 %v2031
    %v2411 = vunpack.c.l.b16 %v2032
    %v2412 = vunpack.c.h.b16 %v2032
    %v2413 = vunpack.c.l.b16 %v2033
    %v2414 = vunpack.c.h.b16 %v2033
    %v2415 = vunpack.c.l.b16 %v2034
    %v2416 = vunpack.c.h.b16 %v2034
    %v2417 = vunpack.c.l.b16 %v2035
    %v2418 = vunpack.c.h.b16 %v2035
    %v2419 = vunpack.c.l.b16 %v2036
    %v2420 = vunpack.c.h.b16 %v2036
    %v2421 = vunpack.c.l.b16 %v2037
    %v2422 = vunpack.c.h.b16 %v2037
    %v2423 = vunpack.c.l.b16 %v2038
    %v2424 = vunpack.c.h.b16 %v2038
    %v2425 = vunpack.c.l.b16 %v2039
    %v2426 = vunpack.c.h.b16 %v2039
    %v2427 = vunpack.c.l.b16 %v2040
    %v2428 = vunpack.c.h.b16 %v2040
    %v2429 = vunpack.c.l.b16 %v2041
    %v2430 = vunpack.c.h.b16 %v2041
    %v2431 = vunpack.c.l.b16 %v2042
    %v2432 = vunpack.c.h.b16 %v2042
    %v2433 = vunpack.c.l.b16 %v2043
    %v2434 = vunpack.c.h.b16 %v2043
    %v2435 = vunpack.c.l.b16 %v2044
    %v2436 = vunpack.c.h.b16 %v2044
    %v2437 = vunpack.c.l.b16 %v2045
    %v2438 = vunpack.c.h.b16 %v2045
    %v2439 = vunpack.c.l.b16 %v2046
    %v2440 = vunpack.c.h.b16 %v2046
    %v2441 = vpack.c.b16 %v2189, %v2185
    %v2442 = vpack.c.b16 %v2190, %v2186
    %v2443 = vpack.c.b16 %v2191, %v2187
    %v2444 = vpack.c.b16 %v2192, %v2188
    %v2445 = vpack.c.b16 %v2197, %v2193
    %v2446 = vpack.c.b16 %v2198, %v2194
    %v2447 = vpack.c.b16 %v2199, %v2195
    %v2448 = vpack.c.b16 %v2200, %v2196
    %v2449 = vpack.c.b16 %v2205, %v2201
    %v2450 = vpack.c.b16 %v2206, %v2202
    %v2451 = vpack.c.b16 %v2207, %v2203
    %v2452 = vpack.c.b16 %v2208, %v2204
    %v2453 = vpack.c.b16 %v2213, %v2209
    %v2454 = vpack.c.b16 %v2214, %v2210
    %v2455 = vpack.c.b16 %v2215, %v2211
    %v2456 = vpack.c.b16 %v2216, %v2212
    %v2457 = vpack.c.b16 %v2221, %v2217
    %v2458 = vpack.c.b16 %v2222, %v2218
    %v2459 = vpack.c.b16 %v2223, %v2219
    %v2460 = vpack.c.b16 %v2224, %v2220
    %v2461 = vpack.c.b16 %v2229, %v2225
    %v2462 = vpack.c.b16 %v2230, %v2226
    %v2463 = vpack.c.b16 %v2231, %v2227
    %v2464 = vpack.c.b16 %v2232, %v2228
    %v2465 = vpack.c.b16 %v2237, %v2233
    %v2466 = vpack.c.b16 %v2238, %v2234
    %v2467 = vpack.c.b16 %v2239, %v2235
    %v2468 = vpack.c.b16 %v2240, %v2236
    %v2469 = vpack.c.b16 %v2245, %v2241
    %v2470 = vpack.c.b16 %v2246, %v2242
    %v2471 = vpack.c.b16 %v2247, %v2243
    %v2472 = vpack.c.b16 %v2248, %v2244
    %v2473 = vpack.c.b16 %v2253, %v2249
    %v2474 = vpack.c.b16 %v2254, %v2250
    %v2475 = vpack.c.b16 %v2255, %v2251
    %v2476 = vpack.c.b16 %v2256, %v2252
    %v2477 = vpack.c.b16 %v2261, %v2257
    %v2478 = vpack.c.b16 %v2262, %v2258
    %v2479 = vpack.c.b16 %v2263, %v2259
    %v2480 = vpack.c.b16 %v2264, %v2260
    %v2481 = vpack.c.b16 %v2269, %v2265
    %v2482 = vpack.c.b16 %v2270, %v2266
    %v2483 = vpack.c.b16 %v2271, %v2267
    %v2484 = vpack.c.b16 %v2272, %v2268
    %v2485 = vpack.c.b16 %v2277, %v2273
    %v2486 = vpack.c.b16 %v2278, %v2274
    %v2487 = vpack.c.b16 %v2279, %v2275
    %v2488 = vpack.c.b16 %v2280, %v2276
    %v2489 = vpack.c.b16 %v2285, %v2281
    %v2490 = vpack.c.b16 %v2286, %v2282
    %v2491 = vpack.c.b16 %v2287, %v2283
    %v2492 = vpack.c.b16 %v2288, %v2284
    %v2493 = vpack.c.b16 %v2293, %v2289
    %v2494 = vpack.c.b16 %v2294, %v2290
    %v2495 = vpack.c.b16 %v2295, %v2291
    %v2496 = vpack.c.b16 %v2296, %v2292
    %v2497 = vpack.c.b16 %v2301, %v2297
    %v2498 = vpack.c.b16 %v2302, %v2298
    %v2499 = vpack.c.b16 %v2303, %v2299
    %v2500 = vpack.c.b16 %v2304, %v2300
    %v2501 = vpack.c.b16 %v2309, %v2305
    %v2502 = vpack.c.b16 %v2310, %v2306
    %v2503 = vpack.c.b16 %v2311, %v2307
    %v2504 = vpack.c.b16 %v2312, %v2308
    %v2505 = vpack.c.b16 %v2317, %v2313
    %v2506 = vpack.c.b16 %v2318, %v2314
    %v2507 = vpack.c.b16 %v2319, %v2315
    %v2508 = vpack.c.b16 %v2320, %v2316
    %v2509 = vpack.c.b16 %v2325, %v2321
    %v2510 = vpack.c.b16 %v2326, %v2322
    %v2511 = vpack.c.b16 %v2327, %v2323
    %v2512 = vpack.c.b16 %v2328, %v2324
    %v2513 = vpack.c.b16 %v2333, %v2329
    %v2514 = vpack.c.b16 %v2334, %v2330
    %v2515 = vpack.c.b16 %v2335, %v2331
    %v2516 = vpack.c.b16 %v2336, %v2332
    %v2517 = vpack.c.b16 %v2341, %v2337
    %v2518 = vpack.c.b16 %v2342, %v2338
    %v2519 = vpack.c.b16 %v2343, %v2339
    %v2520 = vpack.c.b16 %v2344, %v2340
    %v2521 = vpack.c.b16 %v2349, %v2345
    %v2522 = vpack.c.b16 %v2350, %v2346
    %v2523 = vpack.c.b16 %v2351, %v2347
    %v2524 = vpack.c.b16 %v2352, %v2348
    %v2525 = vpack.c.b16 %v2357, %v2353
    %v2526 = vpack.c.b16 %v2358, %v2354
    %v2527 = vpack.c.b16 %v2359, %v2355
    %v2528 = vpack.c.b16 %v2360, %v2356
    %v2529 = vpack.c.b16 %v2365, %v2361
    %v2530 = vpack.c.b16 %v2366, %v2362
    %v2531 = vpack.c.b16 %v2367, %v2363
    %v2532 = vpack.c.b16 %v2368, %v2364
    %v2533 = vpack.c.b16 %v2373, %v2369
    %v2534 = vpack.c.b16 %v2374, %v2370
    %v2535 = vpack.c.b16 %v2375, %v2371
    %v2536 = vpack.c.b16 %v2376, %v2372
    %v2537 = vpack.c.b16 %v2381, %v2377
    %v2538 = vpack.c.b16 %v2382, %v2378
    %v2539 = vpack.c.b16 %v2383, %v2379
    %v2540 = vpack.c.b16 %v2384, %v2380
    %v2541 = vpack.c.b16 %v2389, %v2385
    %v2542 = vpack.c.b16 %v2390, %v2386
    %v2543 = vpack.c.b16 %v2391, %v2387
    %v2544 = vpack.c.b16 %v2392, %v2388
    %v2545 = vpack.c.b16 %v2397, %v2393
    %v2546 = vpack.c.b16 %v2398, %v2394
    %v2547 = vpack.c.b16 %v2399, %v2395
    %v2548 = vpack.c.b16 %v2400, %v2396
    %v2549 = vpack.c.b16 %v2405, %v2401
    %v2550 = vpack.c.b16 %v2406, %v2402
    %v2551 = vpack.c.b16 %v2407, %v2403
    %v2552 = vpack.c.b16 %v2408, %v2404
    %v2553 = vpack.c.b16 %v2413, %v2409
    %v2554 = vpack.c.b16 %v2414, %v2410
    %v2555 = vpack.c.b16 %v2415, %v2411
    %v2556 = vpack.c.b16 %v2416, %v2412
    %v2557 = vpack.c.b16 %v2421, %v2417
    %v2558 = vpack.c.b16 %v2422, %v2418
    %v2559 = vpack.c.b16 %v2423, %v2419
    %v2560 = vpack.c.b16 %v2424, %v2420
    %v2561 = vpack.c.b16 %v2429, %v2425
    %v2562 = vpack.c.b16 %v2430, %v2426
    %v2563 = vpack.c.b16 %v2431, %v2427
    %v2564 = vpack.c.b16 %v2432, %v2428
    %v2565 = vpack.c.b16 %v2437, %v2433
    %v2566 = vpack.c.b16 %v2438, %v2434
    %v2567 = vpack.c.b16 %v2439, %v2435
    %v2568 = vpack.c.b16 %v2440, %v2436
    %2697 = vmatpush.bf16.msra.mxu0 %v2469
    %2698 = vmatpush.bf16.msra.mxu0 %v2465
    %2699 = vmatpush.bf16.msra.mxu0 %v2461
    %2700 = vmatpush.bf16.msra.mxu0 %v2457
    %2701 = vmatpush.bf16.msra.mxu0 %v2453
    %2702 = vmatpush.bf16.msra.mxu0 %v2449
    %2703 = vmatpush.bf16.msra.mxu0 %v2445
    %2704 = vmatpush.bf16.msra.mxu0 %v2441
    %2705 = vmatmul.bf16.gmra.mxu0 %v1915
    %v2706 = vpop.f32.mrf.mxu0
    %v2707 = vadd.f32 %v2049, %v2706
    %v2708 = vpop.f32.mrf.mxu0
    %v2709 = vadd.f32 %v2049, %v2708
    %2710 = vdwg.mxu0
    %2711 = vmatpush.bf16.msra.mxu0 %v2501
    %2712 = vmatpush.bf16.msra.mxu0 %v2497
    %2713 = vmatpush.bf16.msra.mxu0 %v2493
    %2714 = vmatpush.bf16.msra.mxu0 %v2489
    %2715 = vmatpush.bf16.msra.mxu0 %v2485
    %2716 = vmatpush.bf16.msra.mxu0 %v2481
    %2717 = vmatpush.bf16.msra.mxu0 %v2477
    %2718 = vmatpush.bf16.msra.mxu0 %v2473
    %2719 = vmatmul.bf16.gmra.mxu0 %v1916
    %v2720 = vpop.f32.mrf.mxu0
    %v2721 = vadd.f32 %v2707, %v2720
    %v2722 = vpop.f32.mrf.mxu0
    %v2723 = vadd.f32 %v2709, %v2722
    %2724 = vdwg.mxu0
    %2725 = vmatpush.bf16.msra.mxu0 %v2533
    %2726 = vmatpush.bf16.msra.mxu0 %v2529
    %2727 = vmatpush.bf16.msra.mxu0 %v2525
    %2728 = vmatpush.bf16.msra.mxu0 %v2521
    %2729 = vmatpush.bf16.msra.mxu0 %v2517
    %2730 = vmatpush.bf16.msra.mxu0 %v2513
    %2731 = vmatpush.bf16.msra.mxu0 %v2509
    %2732 = vmatpush.bf16.msra.mxu0 %v2505
    %2733 = vmatmul.bf16.gmra.mxu0 %v1917
    %v2734 = vpop.f32.mrf.mxu0
    %v2735 = vadd.f32 %v2721, %v2734
    %v2736 = vpop.f32.mrf.mxu0
    %v2737 = vadd.f32 %v2723, %v2736
    %2738 = vdwg.mxu0
    %2739 = vmatpush.bf16.msra.mxu0 %v2565
    %2740 = vmatpush.bf16.msra.mxu0 %v2561
    %2741 = vmatpush.bf16.msra.mxu0 %v2557
    %2742 = vmatpush.bf16.msra.mxu0 %v2553
    %2743 = vmatpush.bf16.msra.mxu0 %v2549
    %2744 = vmatpush.bf16.msra.mxu0 %v2545
    %2745 = vmatpush.bf16.msra.mxu0 %v2541
    %2746 = vmatpush.bf16.msra.mxu0 %v2537
    %2747 = vmatmul.bf16.gmra.mxu0 %v1918
    %v2748 = vpop.f32.mrf.mxu0
    %v2749 = vadd.f32 %v2735, %v2748
    %v2750 = vpop.f32.mrf.mxu0
    %v2751 = vadd.f32 %v2737, %v2750
    %2752 = vdwg.mxu0
    %2753 = vmatpush.bf16.msra.mxu0 %v2470
    %2754 = vmatpush.bf16.msra.mxu0 %v2466
    %2755 = vmatpush.bf16.msra.mxu0 %v2462
    %2756 = vmatpush.bf16.msra.mxu0 %v2458
    %2757 = vmatpush.bf16.msra.mxu0 %v2454
    %2758 = vmatpush.bf16.msra.mxu0 %v2450
    %2759 = vmatpush.bf16.msra.mxu0 %v2446
    %2760 = vmatpush.bf16.msra.mxu0 %v2442
    %2761 = vmatmul.bf16.gmra.mxu0 %v1915
    %v2762 = vpop.f32.mrf.mxu0
    %v2763 = vadd.f32 %v2050, %v2762
    %v2764 = vpop.f32.mrf.mxu0
    %v2765 = vadd.f32 %v2050, %v2764
    %2766 = vdwg.mxu0
    %2767 = vmatpush.bf16.msra.mxu0 %v2502
    %2768 = vmatpush.bf16.msra.mxu0 %v2498
    %2769 = vmatpush.bf16.msra.mxu0 %v2494
    %2770 = vmatpush.bf16.msra.mxu0 %v2490
    %2771 = vmatpush.bf16.msra.mxu0 %v2486
    %2772 = vmatpush.bf16.msra.mxu0 %v2482
    %2773 = vmatpush.bf16.msra.mxu0 %v2478
    %2774 = vmatpush.bf16.msra.mxu0 %v2474
    %2775 = vmatmul.bf16.gmra.mxu0 %v1916
    %v2776 = vpop.f32.mrf.mxu0
    %v2777 = vadd.f32 %v2763, %v2776
    %v2778 = vpop.f32.mrf.mxu0
    %v2779 = vadd.f32 %v2765, %v2778
    %2780 = vdwg.mxu0
    %2781 = vmatpush.bf16.msra.mxu0 %v2534
    %2782 = vmatpush.bf16.msra.mxu0 %v2530
    %2783 = vmatpush.bf16.msra.mxu0 %v2526
    %2784 = vmatpush.bf16.msra.mxu0 %v2522
    %2785 = vmatpush.bf16.msra.mxu0 %v2518
    %2786 = vmatpush.bf16.msra.mxu0 %v2514
    %2787 = vmatpush.bf16.msra.mxu0 %v2510
    %2788 = vmatpush.bf16.msra.mxu0 %v2506
    %2789 = vmatmul.bf16.gmra.mxu0 %v1917
    %v2790 = vpop.f32.mrf.mxu0
    %v2791 = vadd.f32 %v2777, %v2790
    %v2792 = vpop.f32.mrf.mxu0
    %v2793 = vadd.f32 %v2779, %v2792
    %2794 = vdwg.mxu0
    %2795 = vmatpush.bf16.msra.mxu0 %v2566
    %2796 = vmatpush.bf16.msra.mxu0 %v2562
    %2797 = vmatpush.bf16.msra.mxu0 %v2558
    %2798 = vmatpush.bf16.msra.mxu0 %v2554
    %2799 = vmatpush.bf16.msra.mxu0 %v2550
    %2800 = vmatpush.bf16.msra.mxu0 %v2546
    %2801 = vmatpush.bf16.msra.mxu0 %v2542
    %2802 = vmatpush.bf16.msra.mxu0 %v2538
    %2803 = vmatmul.bf16.gmra.mxu0 %v1918
    %v2804 = vpop.f32.mrf.mxu0
    %v2805 = vadd.f32 %v2791, %v2804
    %v2806 = vpop.f32.mrf.mxu0
    %v2807 = vadd.f32 %v2793, %v2806
    %2808 = vdwg.mxu0
    %2809 = vmatpush.bf16.msra.mxu0 %v2471
    %2810 = vmatpush.bf16.msra.mxu0 %v2467
    %2811 = vmatpush.bf16.msra.mxu0 %v2463
    %2812 = vmatpush.bf16.msra.mxu0 %v2459
    %2813 = vmatpush.bf16.msra.mxu0 %v2455
    %2814 = vmatpush.bf16.msra.mxu0 %v2451
    %2815 = vmatpush.bf16.msra.mxu0 %v2447
    %2816 = vmatpush.bf16.msra.mxu0 %v2443
    %2817 = vmatmul.bf16.gmra.mxu0 %v1915
    %v2818 = vpop.f32.mrf.mxu0
    %v2819 = vadd.f32 %v2051, %v2818
    %v2820 = vpop.f32.mrf.mxu0
    %v2821 = vadd.f32 %v2051, %v2820
    %2822 = vdwg.mxu0
    %2823 = vmatpush.bf16.msra.mxu0 %v2503
    %2824 = vmatpush.bf16.msra.mxu0 %v2499
    %2825 = vmatpush.bf16.msra.mxu0 %v2495
    %2826 = vmatpush.bf16.msra.mxu0 %v2491
    %2827 = vmatpush.bf16.msra.mxu0 %v2487
    %2828 = vmatpush.bf16.msra.mxu0 %v2483
    %2829 = vmatpush.bf16.msra.mxu0 %v2479
    %2830 = vmatpush.bf16.msra.mxu0 %v2475
    %2831 = vmatmul.bf16.gmra.mxu0 %v1916
    %v2832 = vpop.f32.mrf.mxu0
    %v2833 = vadd.f32 %v2819, %v2832
    %v2834 = vpop.f32.mrf.mxu0
    %v2835 = vadd.f32 %v2821, %v2834
    %2836 = vdwg.mxu0
    %2837 = vmatpush.bf16.msra.mxu0 %v2535
    %2838 = vmatpush.bf16.msra.mxu0 %v2531
    %2839 = vmatpush.bf16.msra.mxu0 %v2527
    %2840 = vmatpush.bf16.msra.mxu0 %v2523
    %2841 = vmatpush.bf16.msra.mxu0 %v2519
    %2842 = vmatpush.bf16.msra.mxu0 %v2515
    %2843 = vmatpush.bf16.msra.mxu0 %v2511
    %2844 = vmatpush.bf16.msra.mxu0 %v2507
    %2845 = vmatmul.bf16.gmra.mxu0 %v1917
    %v2846 = vpop.f32.mrf.mxu0
    %v2847 = vadd.f32 %v2833, %v2846
    %v2848 = vpop.f32.mrf.mxu0
    %v2849 = vadd.f32 %v2835, %v2848
    %2850 = vdwg.mxu0
    %2851 = vmatpush.bf16.msra.mxu0 %v2567
    %2852 = vmatpush.bf16.msra.mxu0 %v2563
    %2853 = vmatpush.bf16.msra.mxu0 %v2559
    %2854 = vmatpush.bf16.msra.mxu0 %v2555
    %2855 = vmatpush.bf16.msra.mxu0 %v2551
    %2856 = vmatpush.bf16.msra.mxu0 %v2547
    %2857 = vmatpush.bf16.msra.mxu0 %v2543
    %2858 = vmatpush.bf16.msra.mxu0 %v2539
    %2859 = vmatmul.bf16.gmra.mxu0 %v1918
    %v2860 = vpop.f32.mrf.mxu0
    %v2861 = vadd.f32 %v2847, %v2860
    %v2862 = vpop.f32.mrf.mxu0
    %v2863 = vadd.f32 %v2849, %v2862
    %2864 = vdwg.mxu0
    %2865 = vmatpush.bf16.msra.mxu0 %v2472
    %2866 = vmatpush.bf16.msra.mxu0 %v2468
    %2867 = vmatpush.bf16.msra.mxu0 %v2464
    %2868 = vmatpush.bf16.msra.mxu0 %v2460
    %2869 = vmatpush.bf16.msra.mxu0 %v2456
    %2870 = vmatpush.bf16.msra.mxu0 %v2452
    %2871 = vmatpush.bf16.msra.mxu0 %v2448
    %2872 = vmatpush.bf16.msra.mxu0 %v2444
    %2873 = vmatmul.bf16.gmra.mxu0 %v1915
    %v2874 = vpop.f32.mrf.mxu0
    %v2875 = vadd.f32 %v2052, %v2874
    %v2876 = vpop.f32.mrf.mxu0
    %v2877 = vadd.f32 %v2052, %v2876
    %2878 = vdwg.mxu0
    %2879 = vmatpush.bf16.msra.mxu0 %v2504
    %2880 = vmatpush.bf16.msra.mxu0 %v2500
    %2881 = vmatpush.bf16.msra.mxu0 %v2496
    %2882 = vmatpush.bf16.msra.mxu0 %v2492
    %2883 = vmatpush.bf16.msra.mxu0 %v2488
    %2884 = vmatpush.bf16.msra.mxu0 %v2484
    %2885 = vmatpush.bf16.msra.mxu0 %v2480
    %2886 = vmatpush.bf16.msra.mxu0 %v2476
    %2887 = vmatmul.bf16.gmra.mxu0 %v1916
    %v2888 = vpop.f32.mrf.mxu0
    %v2889 = vadd.f32 %v2875, %v2888
    %v2890 = vpop.f32.mrf.mxu0
    %v2891 = vadd.f32 %v2877, %v2890
    %2892 = vdwg.mxu0
    %2893 = vmatpush.bf16.msra.mxu0 %v2536
    %2894 = vmatpush.bf16.msra.mxu0 %v2532
    %2895 = vmatpush.bf16.msra.mxu0 %v2528
    %2896 = vmatpush.bf16.msra.mxu0 %v2524
    %2897 = vmatpush.bf16.msra.mxu0 %v2520
    %2898 = vmatpush.bf16.msra.mxu0 %v2516
    %2899 = vmatpush.bf16.msra.mxu0 %v2512
    %2900 = vmatpush.bf16.msra.mxu0 %v2508
    %2901 = vmatmul.bf16.gmra.mxu0 %v1917
    %v2902 = vpop.f32.mrf.mxu0
    %v2903 = vadd.f32 %v2889, %v2902
    %v2904 = vpop.f32.mrf.mxu0
    %v2905 = vadd.f32 %v2891, %v2904
    %2906 = vdwg.mxu0
    %2907 = vmatpush.bf16.msra.mxu0 %v2568
    %2908 = vmatpush.bf16.msra.mxu0 %v2564
    %2909 = vmatpush.bf16.msra.mxu0 %v2560
    %2910 = vmatpush.bf16.msra.mxu0 %v2556
    %2911 = vmatpush.bf16.msra.mxu0 %v2552
    %2912 = vmatpush.bf16.msra.mxu0 %v2548
    %2913 = vmatpush.bf16.msra.mxu0 %v2544
    %2914 = vmatpush.bf16.msra.mxu0 %v2540
    %2915 = vmatmul.bf16.gmra.mxu0 %v1918
    %v2916 = vpop.f32.mrf.mxu0
    %v2917 = vadd.f32 %v2903, %v2916
    %v2918 = vpop.f32.mrf.mxu0
    %v2919 = vadd.f32 %v2905, %v2918
    %2920 = vdwg.mxu0
    %v2921 = vmax.f32 %v2749, 0.0
    %v2922 = vmax.f32 %v2805, 0.0
    %v2923 = vmax.f32 %v2861, 0.0
    %v2924 = vmax.f32 %v2917, 0.0
    %v2925 = vmax.f32 %v2751, 0.0
    %v2926 = vmax.f32 %v2807, 0.0
    %v2927 = vmax.f32 %v2863, 0.0
    %v2928 = vmax.f32 %v2919, 0.0
    %v2929 = vpack.c.bf16 %v2925, %v2921
    %v2930 = vpack.c.bf16 %v2926, %v2922
    %v2931 = vpack.c.bf16 %v2927, %v2923
    %v2932 = vpack.c.bf16 %v2928, %v2924
    %v2933 = vld [vmem:[#allocation11] sm:$0xf]
    %v2934 = vld [vmem:[#allocation11 + $0x4] sm:$0xf]
    %v2935 = vld [vmem:[#allocation11 + $0x8] sm:$0xf]
    %v2936 = vld [vmem:[#allocation11 + $0xc] sm:$0xf]
    %v2937 = vld [vmem:[#allocation11 + $0x10] sm:$0xf]
    %v2938 = vld [vmem:[#allocation11 + $0x14] sm:$0xf]
    %v2939 = vld [vmem:[#allocation11 + $0x18] sm:$0xf]
    %v2940 = vld [vmem:[#allocation11 + $0x1c] sm:$0xf]
    %v2941 = vld [vmem:[#allocation11 + $0x20] sm:$0xf]
    %v2942 = vld [vmem:[#allocation11 + $0x24] sm:$0xf]
    %v2943 = vld [vmem:[#allocation11 + $0x28] sm:$0xf]
    %v2944 = vld [vmem:[#allocation11 + $0x2c] sm:$0xf]
    %v2945 = vld [vmem:[#allocation11 + $0x30] sm:$0xf]
    %v2946 = vld [vmem:[#allocation11 + $0x34] sm:$0xf]
    %v2947 = vld [vmem:[#allocation11 + $0x38] sm:$0xf]
    %v2948 = vld [vmem:[#allocation11 + $0x3c] sm:$0xf]
    %v2949 = vld [vmem:[#allocation11 + $0x40] sm:$0xf]
    %v2950 = vld [vmem:[#allocation11 + $0x44] sm:$0xf]
    %v2951 = vld [vmem:[#allocation11 + $0x48] sm:$0xf]
    %v2952 = vld [vmem:[#allocation11 + $0x4c] sm:$0xf]
    %v2953 = vld [vmem:[#allocation11 + $0x50] sm:$0xf]
    %v2954 = vld [vmem:[#allocation11 + $0x54] sm:$0xf]
    %v2955 = vld [vmem:[#allocation11 + $0x58] sm:$0xf]
    %v2956 = vld [vmem:[#allocation11 + $0x5c] sm:$0xf]
    %v2957 = vld [vmem:[#allocation11 + $0x60] sm:$0xf]
    %v2958 = vld [vmem:[#allocation11 + $0x64] sm:$0xf]
    %v2959 = vld [vmem:[#allocation11 + $0x68] sm:$0xf]
    %v2960 = vld [vmem:[#allocation11 + $0x6c] sm:$0xf]
    %v2961 = vld [vmem:[#allocation11 + $0x70] sm:$0xf]
    %v2962 = vld [vmem:[#allocation11 + $0x74] sm:$0xf]
    %v2963 = vld [vmem:[#allocation11 + $0x78] sm:$0xf]
    %v2964 = vld [vmem:[#allocation11 + $0x7c] sm:$0xf]
    %v2965 = vld [vmem:[#allocation11 + $0x80] sm:$0xf]
    %v2966 = vld [vmem:[#allocation11 + $0x84] sm:$0xf]
    %v2967 = vld [vmem:[#allocation11 + $0x88] sm:$0xf]
    %v2968 = vld [vmem:[#allocation11 + $0x8c] sm:$0xf]
    %v2969 = vld [vmem:[#allocation11 + $0x90] sm:$0xf]
    %v2970 = vld [vmem:[#allocation11 + $0x94] sm:$0xf]
    %v2971 = vld [vmem:[#allocation11 + $0x98] sm:$0xf]
    %v2972 = vld [vmem:[#allocation11 + $0x9c] sm:$0xf]
    %v2973 = vld [vmem:[#allocation11 + $0xa0] sm:$0xf]
    %v2974 = vld [vmem:[#allocation11 + $0xa4] sm:$0xf]
    %v2975 = vld [vmem:[#allocation11 + $0xa8] sm:$0xf]
    %v2976 = vld [vmem:[#allocation11 + $0xac] sm:$0xf]
    %v2977 = vld [vmem:[#allocation11 + $0xb0] sm:$0xf]
    %v2978 = vld [vmem:[#allocation11 + $0xb4] sm:$0xf]
    %v2979 = vld [vmem:[#allocation11 + $0xb8] sm:$0xf]
    %v2980 = vld [vmem:[#allocation11 + $0xbc] sm:$0xf]
    %v2981 = vld [vmem:[#allocation11 + $0xc0] sm:$0xf]
    %v2982 = vld [vmem:[#allocation11 + $0xc4] sm:$0xf]
    %v2983 = vld [vmem:[#allocation11 + $0xc8] sm:$0xf]
    %v2984 = vld [vmem:[#allocation11 + $0xcc] sm:$0xf]
    %v2985 = vld [vmem:[#allocation11 + $0xd0] sm:$0xf]
    %v2986 = vld [vmem:[#allocation11 + $0xd4] sm:$0xf]
    %v2987 = vld [vmem:[#allocation11 + $0xd8] sm:$0xf]
    %v2988 = vld [vmem:[#allocation11 + $0xdc] sm:$0xf]
    %v2989 = vld [vmem:[#allocation11 + $0xe0] sm:$0xf]
    %v2990 = vld [vmem:[#allocation11 + $0xe4] sm:$0xf]
    %v2991 = vld [vmem:[#allocation11 + $0xe8] sm:$0xf]
    %v2992 = vld [vmem:[#allocation11 + $0xec] sm:$0xf]
    %v2993 = vld [vmem:[#allocation11 + $0xf0] sm:$0xf]
    %v2994 = vld [vmem:[#allocation11 + $0xf4] sm:$0xf]
    %v2995 = vld [vmem:[#allocation11 + $0xf8] sm:$0xf]
    %v2996 = vld [vmem:[#allocation11 + $0xfc] sm:$0xf]
    %v2997 = vld [vmem:[%s6] sm:$0x1]
    %v2999 = vperm.slane %v2997, 0
    %v3065 = vunpack.c.l.b16 %v2933
    %v3066 = vunpack.c.l.b16 %v2934
    %v3067 = vunpack.c.l.b16 %v2935
    %v3068 = vunpack.c.l.b16 %v2936
    %v3069 = vunpack.c.l.b16 %v2937
    %v3070 = vunpack.c.l.b16 %v2938
    %v3071 = vunpack.c.l.b16 %v2939
    %v3072 = vunpack.c.l.b16 %v2940
    %v3073 = vunpack.c.l.b16 %v2941
    %v3074 = vunpack.c.l.b16 %v2942
    %v3075 = vunpack.c.l.b16 %v2943
    %v3076 = vunpack.c.l.b16 %v2944
    %v3077 = vunpack.c.l.b16 %v2945
    %v3078 = vunpack.c.l.b16 %v2946
    %v3079 = vunpack.c.l.b16 %v2947
    %v3080 = vunpack.c.l.b16 %v2948
    %v3081 = vunpack.c.l.b16 %v2949
    %v3082 = vunpack.c.l.b16 %v2950
    %v3083 = vunpack.c.l.b16 %v2951
    %v3084 = vunpack.c.l.b16 %v2952
    %v3085 = vunpack.c.l.b16 %v2953
    %v3086 = vunpack.c.l.b16 %v2954
    %v3087 = vunpack.c.l.b16 %v2955
    %v3088 = vunpack.c.l.b16 %v2956
    %v3089 = vunpack.c.l.b16 %v2957
    %v3090 = vunpack.c.l.b16 %v2958
    %v3091 = vunpack.c.l.b16 %v2959
    %v3092 = vunpack.c.l.b16 %v2960
    %v3093 = vunpack.c.l.b16 %v2961
    %v3094 = vunpack.c.l.b16 %v2962
    %v3095 = vunpack.c.l.b16 %v2963
    %v3096 = vunpack.c.l.b16 %v2964
    %v3097 = vunpack.c.l.b16 %v2965
    %v3098 = vunpack.c.l.b16 %v2966
    %v3099 = vunpack.c.l.b16 %v2967
    %v3100 = vunpack.c.l.b16 %v2968
    %v3101 = vunpack.c.l.b16 %v2969
    %v3102 = vunpack.c.l.b16 %v2970
    %v3103 = vunpack.c.l.b16 %v2971
    %v3104 = vunpack.c.l.b16 %v2972
    %v3105 = vunpack.c.l.b16 %v2973
    %v3106 = vunpack.c.l.b16 %v2974
    %v3107 = vunpack.c.l.b16 %v2975
    %v3108 = vunpack.c.l.b16 %v2976
    %v3109 = vunpack.c.l.b16 %v2977
    %v3110 = vunpack.c.l.b16 %v2978
    %v3111 = vunpack.c.l.b16 %v2979
    %v3112 = vunpack.c.l.b16 %v2980
    %v3113 = vunpack.c.l.b16 %v2981
    %v3114 = vunpack.c.l.b16 %v2982
    %v3115 = vunpack.c.l.b16 %v2983
    %v3116 = vunpack.c.l.b16 %v2984
    %v3117 = vunpack.c.l.b16 %v2985
    %v3118 = vunpack.c.l.b16 %v2986
    %v3119 = vunpack.c.l.b16 %v2987
    %v3120 = vunpack.c.l.b16 %v2988
    %v3121 = vunpack.c.l.b16 %v2989
    %v3122 = vunpack.c.l.b16 %v2990
    %v3123 = vunpack.c.l.b16 %v2991
    %v3124 = vunpack.c.l.b16 %v2992
    %v3125 = vunpack.c.l.b16 %v2993
    %v3126 = vunpack.c.l.b16 %v2994
    %v3127 = vunpack.c.l.b16 %v2995
    %v3128 = vunpack.c.l.b16 %v2996
    %v3129 = vpack.c.b16 %v3066, %v3065
    %v3130 = vpack.c.b16 %v3068, %v3067
    %v3131 = vpack.c.b16 %v3070, %v3069
    %v3132 = vpack.c.b16 %v3072, %v3071
    %v3133 = vpack.c.b16 %v3074, %v3073
    %v3134 = vpack.c.b16 %v3076, %v3075
    %v3135 = vpack.c.b16 %v3078, %v3077
    %v3136 = vpack.c.b16 %v3080, %v3079
    %v3137 = vpack.c.b16 %v3082, %v3081
    %v3138 = vpack.c.b16 %v3084, %v3083
    %v3139 = vpack.c.b16 %v3086, %v3085
    %v3140 = vpack.c.b16 %v3088, %v3087
    %v3141 = vpack.c.b16 %v3090, %v3089
    %v3142 = vpack.c.b16 %v3092, %v3091
    %v3143 = vpack.c.b16 %v3094, %v3093
    %v3144 = vpack.c.b16 %v3096, %v3095
    %v3145 = vpack.c.b16 %v3098, %v3097
    %v3146 = vpack.c.b16 %v3100, %v3099
    %v3147 = vpack.c.b16 %v3102, %v3101
    %v3148 = vpack.c.b16 %v3104, %v3103
    %v3149 = vpack.c.b16 %v3106, %v3105
    %v3150 = vpack.c.b16 %v3108, %v3107
    %v3151 = vpack.c.b16 %v3110, %v3109
    %v3152 = vpack.c.b16 %v3112, %v3111
    %v3153 = vpack.c.b16 %v3114, %v3113
    %v3154 = vpack.c.b16 %v3116, %v3115
    %v3155 = vpack.c.b16 %v3118, %v3117
    %v3156 = vpack.c.b16 %v3120, %v3119
    %v3157 = vpack.c.b16 %v3122, %v3121
    %v3158 = vpack.c.b16 %v3124, %v3123
    %v3159 = vpack.c.b16 %v3126, %v3125
    %v3160 = vpack.c.b16 %v3128, %v3127
    %3193 = vmatpush.bf16.msra.mxu0 %v3136
    %3194 = vmatpush.bf16.msra.mxu0 %v3135
    %3195 = vmatpush.bf16.msra.mxu0 %v3134
    %3196 = vmatpush.bf16.msra.mxu0 %v3133
    %3197 = vmatpush.bf16.msra.mxu0 %v3132
    %3198 = vmatpush.bf16.msra.mxu0 %v3131
    %3199 = vmatpush.bf16.msra.mxu0 %v3130
    %3200 = vmatpush.bf16.msra.mxu0 %v3129
    %3201 = vmatmul.bf16.gmra.mxu0 %v2929
    %v3202 = vpop.f32.mrf.mxu0
    %v3203 = vadd.f32 %v2999, %v3202
    %v3204 = vpop.f32.mrf.mxu0
    %v3205 = vadd.f32 %v2999, %v3204
    %3206 = vdwg.mxu0
    %3207 = vmatpush.bf16.msra.mxu0 %v3144
    %3208 = vmatpush.bf16.msra.mxu0 %v3143
    %3209 = vmatpush.bf16.msra.mxu0 %v3142
    %3210 = vmatpush.bf16.msra.mxu0 %v3141
    %3211 = vmatpush.bf16.msra.mxu0 %v3140
    %3212 = vmatpush.bf16.msra.mxu0 %v3139
    %3213 = vmatpush.bf16.msra.mxu0 %v3138
    %3214 = vmatpush.bf16.msra.mxu0 %v3137
    %3215 = vmatmul.bf16.gmra.mxu0 %v2930
    %v3216 = vpop.f32.mrf.mxu0
    %v3217 = vadd.f32 %v3203, %v3216
    %v3218 = vpop.f32.mrf.mxu0
    %v3219 = vadd.f32 %v3205, %v3218
    %3220 = vdwg.mxu0
    %3221 = vmatpush.bf16.msra.mxu0 %v3152
    %3222 = vmatpush.bf16.msra.mxu0 %v3151
    %3223 = vmatpush.bf16.msra.mxu0 %v3150
    %3224 = vmatpush.bf16.msra.mxu0 %v3149
    %3225 = vmatpush.bf16.msra.mxu0 %v3148
    %3226 = vmatpush.bf16.msra.mxu0 %v3147
    %3227 = vmatpush.bf16.msra.mxu0 %v3146
    %3228 = vmatpush.bf16.msra.mxu0 %v3145
    %3229 = vmatmul.bf16.gmra.mxu0 %v2931
    %v3230 = vpop.f32.mrf.mxu0
    %v3231 = vadd.f32 %v3217, %v3230
    %v3232 = vpop.f32.mrf.mxu0
    %v3233 = vadd.f32 %v3219, %v3232
    %3234 = vdwg.mxu0
    %3235 = vmatpush.bf16.msra.mxu0 %v3160
    %3236 = vmatpush.bf16.msra.mxu0 %v3159
    %3237 = vmatpush.bf16.msra.mxu0 %v3158
    %3238 = vmatpush.bf16.msra.mxu0 %v3157
    %3239 = vmatpush.bf16.msra.mxu0 %v3156
    %3240 = vmatpush.bf16.msra.mxu0 %v3155
    %3241 = vmatpush.bf16.msra.mxu0 %v3154
    %3242 = vmatpush.bf16.msra.mxu0 %v3153
    %3243 = vmatmul.bf16.gmra.mxu0 %v2932
    %v3244 = vpop.f32.mrf.mxu0
    %v3245 = vadd.f32 %v3231, %v3244
    %v3246 = vpop.f32.mrf.mxu0
    %v3247 = vadd.f32 %v3233, %v3246
    %3248 = vdwg.mxu0
    %3249 = vst [vmem:[#allocation13] sm:$0xff] %v3245
    %3250 = vst [vmem:[#allocation13 + $0x8] sm:$0xff] %v3247
    // Predicated region
    $region54: #{tpu_custom_call.1} parent=1 // pred_check
      _
    $region55: #{tpu_custom_call.1} parent=1 // pred_check_branch
      %3252 = sbr.rel (0) target = $region57
    $region56: #{tpu_custom_call.1} parent=1 // pred_region
      %3254 = vsyncadd [#allocation4], 0
      %s3255 = sshll.u32 [#allocation13], 4
      %s3256 = int_to_ptr.vmem [resolvable:$true] %s3255
      %s3257 = sshll.u32 %s7, 4
      %s3258 = int_to_ptr.hbm [resolvable:$true] %s3257
      %3263 = dma.vmem_to_hbm [thread:$0]  %s3256, 256, %s3258, [#allocation4], 128, 128, 8
    $region57: #{tpu_custom_call.1} parent=1 // pred_fallthru
      _
    // Predicated region
    $region58: #{tpu_custom_call.1} parent=1 // pred_check
      _
    $region59: #{tpu_custom_call.1} parent=1 // pred_check_branch
      %3265 = sbr.rel (0) target = $region61
    $region60: #{tpu_custom_call.1} parent=1 // pred_region
      %3267 = dma.done [#allocation4], 256
    $region61: #{tpu_custom_call.1} parent=1 // pred_fallthru
      _
    %3268 = vsyncpa [#allocation3], 1
    %3269 = vsyncpa [#allocation6], 1
    %3270 = vsyncpa [#allocation9], 1
    %3271 = vsyncpa [#allocation12], 1
    %3272 = vsyncpa [#allocation4], 1

// kernel: tpu_custom_call.1
$region0: #{tpu_custom_call.1}
  #allocation0 [shape = 'u32[]', space=smem, size = 0x4, offset = 0x4, fixed_abs, tag = 'smem constant byte address 0x4 - core index']
  #allocation1 [shape = 'u32[72,128]{1,0:T(1,128)}', space=vmem, size = 0x9000, scoped, tag = 'internal scratch']
  %s0 = inlined_call_operand.hbm [shape: bf16[16,896], index: 0, kind: input, shape index: {}]
  %s1 = inlined_call_operand.hbm [shape: bf16[896,512], index: 1, kind: input, shape index: {}]
  %s2 = inlined_call_operand.hbm [shape: f32[1,512], index: 2, kind: input, shape index: {}]
  %s3 = inlined_call_operand.hbm [shape: bf16[512,512], index: 3, kind: input, shape index: {}]
  %s4 = inlined_call_operand.hbm [shape: f32[1,512], index: 4, kind: input, shape index: {}]
  %s5 = inlined_call_operand.hbm [shape: bf16[512,128], index: 5, kind: input, shape index: {}]
  %s6 = inlined_call_operand.vmem [shape: f32[1,128], index: 6, kind: input, shape index: {}]
  %s7 = inlined_call_operand.hbm [shape: f32[16,128], index: 7, kind: output, shape index: {}]
  %s8 = sld [smem:[#allocation0]]
  $region62: #{tpu_custom_call.1} parent=0
    _
  %s10 = ssub.s32 1, %s8
  %s11 = scalar_select 0, %s10, %s8
  $region1: #{tpu_custom_call.1} parent=0
    #allocation2 [shape = 'u8[28672]{0}', space=vmem, size = 0x7000, scoped, tag = 'input window, operand 0, single buffered']
    #allocation3 [shape = 's32[1]{0}', space=sflag, size = 0x4, scoped, tag = 'scoped memory for tpu_custom_call.1']
    #allocation4 [shape = 's32[1]{0}', space=sflag, size = 0x4, scoped, tag = 'scoped memory for tpu_custom_call.1']
    #allocation5 [shape = 'u8[917504]{0}', space=vmem, size = 0xe0000, scoped, tag = 'input window, operand 1, single buffered']
    #allocation6 [shape = 's32[1]{0}', space=sflag, size = 0x4, scoped, tag = 'scoped memory for tpu_custom_call.1']
    #allocation7 [shape = 'u8[2048]{0}', space=vmem, size = 0x800, scoped, tag = 'input window, operand 2, single buffered']
    #allocation8 [shape = 'u8[524288]{0}', space=vmem, size = 0x80000, scoped, tag = 'input window, operand 3, single buffered']
    #allocation9 [shape = 's32[1]{0}', space=sflag, size = 0x4, scoped, tag = 'scoped memory for tpu_custom_call.1']
    #allocation10 [shape = 'u8[2048]{0}', space=vmem, size = 0x800, scoped, tag = 'input window, operand 4, single buffered']
    #allocation11 [shape = 'u8[131072]{0}', space=vmem, size = 0x20000, scoped, tag = 'input window, operand 5, single buffered']
    #allocation12 [shape = 's32[1]{0}', space=sflag, size = 0x4, scoped, tag = 'scoped memory for tpu_custom_call.1']
    #allocation13 [shape = 'u8[8192]{0}', space=vmem, size = 0x2000, scoped, tag = 'output window, operand 0, single buffered']
    %12 = vsyncpa [#allocation3], 0
    %13 = vsyncpa [#allocation6], 0
    %14 = vsyncpa [#allocation9], 0
    %15 = vsyncpa [#allocation12], 0
    %16 = vsyncpa [#allocation4], 0
    // Predicated region
    $region2: #{tpu_custom_call.1} parent=1 // pred_check
      _
    $region3: #{tpu_custom_call.1} parent=1 // pred_check_branch
      %18 = sbr.rel (0) target = $region5
    $region4: #{tpu_custom_call.1} parent=1 // pred_region
      %20 = vsyncadd [#allocation3], 0
      %s21 = sshll.u32 %s0, 4
      %s22 = int_to_ptr.hbm [resolvable:$true] %s21
      %s23 = sshll.u32 [#allocation2], 4
      %s24 = int_to_ptr.vmem [resolvable:$true] %s23
      %29 = dma.hbm_to_vmem [thread:$0]  %s22, 896, %s24, [#allocation3], 448, 448, 28
    $region5: #{tpu_custom_call.1} parent=1 // pred_fallthru
      _
    // Predicated region
    $region6: #{tpu_custom_call.1} parent=1 // pred_check
      _
    $region7: #{tpu_custom_call.1} parent=1 // pred_check_branch
      %31 = sbr.rel (0) target = $region9
    $region8: #{tpu_custom_call.1} parent=1 // pred_region
      %33 = vsyncadd [#allocation6], 0
      %s34 = sshll.u32 %s1, 4
      %s35 = int_to_ptr.hbm [resolvable:$true] %s34
      %s36 = sshll.u32 [#allocation5], 4
      %s37 = int_to_ptr.vmem [resolvable:$true] %s36
      %42 = dma.hbm_to_vmem [thread:$0]  %s35, 28672, %s37, [#allocation6], 256, 256, 16
    $region9: #{tpu_custom_call.1} parent=1 // pred_fallthru
      _
    // Predicated region
    $region10: #{tpu_custom_call.1} parent=1 // pred_check
      _
    $region11: #{tpu_custom_call.1} parent=1 // pred_check_branch
      %44 = sbr.rel (0) target = $region13
    $region12: #{tpu_custom_call.1} parent=1 // pred_region
      %46 = vsyncadd [#allocation6], 0
      %s48 = sshll.u32 %s2, 4
      %s49 = int_to_ptr.hbm [resolvable:$true] %s48
      %s50 = sshll.u32 [#allocation7], 4
      %s51 = int_to_ptr.vmem [resolvable:$true] %s50
      %53 = dma.hbm_to_vmem [thread:$0]  %s49, 64, %s51, [#allocation6]
    $region13: #{tpu_custom_call.1} parent=1 // pred_fallthru
      _
    // Predicated region
    $region14: #{tpu_custom_call.1} parent=1 // pred_check
      _
    $region15: #{tpu_custom_call.1} parent=1 // pred_check_branch
      %55 = sbr.rel (0) target = $region17
    $region16: #{tpu_custom_call.1} parent=1 // pred_region
      %57 = vsyncadd [#allocation9], 0
      %s58 = sshll.u32 %s3, 4
      %s59 = int_to_ptr.hbm [resolvable:$true] %s58
      %s60 = sshll.u32 [#allocation8], 4
      %s61 = int_to_ptr.vmem [resolvable:$true] %s60
      %66 = dma.hbm_to_vmem [thread:$0]  %s59, 16384, %s61, [#allocation9], 256, 256, 16
    $region17: #{tpu_custom_call.1} parent=1 // pred_fallthru
      _
    // Predicated region
    $region18: #{tpu_custom_call.1} parent=1 // pred_check
      _
    $region19: #{tpu_custom_call.1} parent=1 // pred_check_branch
      %68 = sbr.rel (0) target = $region21
    $region20: #{tpu_custom_call.1} parent=1 // pred_region
      %70 = vsyncadd [#allocation9], 0
      %s72 = sshll.u32 %s4, 4
      %s73 = int_to_ptr.hbm [resolvable:$true] %s72
      %s74 = sshll.u32 [#allocation10], 4
      %s75 = int_to_ptr.vmem [resolvable:$true] %s74
      %77 = dma.hbm_to_vmem [thread:$0]  %s73, 64, %s75, [#allocation9]
    $region21: #{tpu_custom_call.1} parent=1 // pred_fallthru
      _
    // Predicated region
    $region22: #{tpu_custom_call.1} parent=1 // pred_check
      _
    $region23: #{tpu_custom_call.1} parent=1 // pred_check_branch
      %79 = sbr.rel (0) target = $region25
    $region24: #{tpu_custom_call.1} parent=1 // pred_region
      %81 = vsyncadd [#allocation12], 0
      %s82 = sshll.u32 %s5, 4
      %s83 = int_to_ptr.hbm [resolvable:$true] %s82
      %s84 = sshll.u32 [#allocation11], 4
      %s85 = int_to_ptr.vmem [resolvable:$true] %s84
      %90 = dma.hbm_to_vmem [thread:$0]  %s83, 4096, %s85, [#allocation12], 64, 64, 4
    $region25: #{tpu_custom_call.1} parent=1 // pred_fallthru
      _
    // Predicated region
    $region26: #{tpu_custom_call.1} parent=1 // pred_check
      _
    $region27: #{tpu_custom_call.1} parent=1 // pred_check_branch
      %92 = sbr.rel (0) target = $region29
    $region28: #{tpu_custom_call.1} parent=1 // pred_region
      _
    $region29: #{tpu_custom_call.1} parent=1 // pred_fallthru
      _
    // Predicated region
    $region30: #{tpu_custom_call.1} parent=1 // pred_check
      _
    $region31: #{tpu_custom_call.1} parent=1 // pred_check_branch
      %94 = sbr.rel (0) target = $region33
    $region32: #{tpu_custom_call.1} parent=1 // pred_region
      %96 = dma.done [#allocation3], 896
    $region33: #{tpu_custom_call.1} parent=1 // pred_fallthru
      _
    // Predicated region
    $region34: #{tpu_custom_call.1} parent=1 // pred_check
      _
    $region35: #{tpu_custom_call.1} parent=1 // pred_check_branch
      %98 = sbr.rel (0) target = $region37
    $region36: #{tpu_custom_call.1} parent=1 // pred_region
      %100 = dma.done [#allocation6], 28672
    $region37: #{tpu_custom_call.1} parent=1 // pred_fallthru
      _
    // Predicated region
    $region38: #{tpu_custom_call.1} parent=1 // pred_check
      _
    $region39: #{tpu_custom_call.1} parent=1 // pred_check_branch
      %102 = sbr.rel (0) target = $region41
    $region40: #{tpu_custom_call.1} parent=1 // pred_region
      %104 = dma.done [#allocation6], 64
    $region41: #{tpu_custom_call.1} parent=1 // pred_fallthru
      _
    // Predicated region
    $region42: #{tpu_custom_call.1} parent=1 // pred_check
      _
    $region43: #{tpu_custom_call.1} parent=1 // pred_check_branch
      %106 = sbr.rel (0) target = $region45
    $region44: #{tpu_custom_call.1} parent=1 // pred_region
      %108 = dma.done [#allocation9], 16384
    $region45: #{tpu_custom_call.1} parent=1 // pred_fallthru
      _
    // Predicated region
    $region46: #{tpu_custom_call.1} parent=1 // pred_check
      _
    $region47: #{tpu_custom_call.1} parent=1 // pred_check_branch
      %110 = sbr.rel (0) target = $region49
    $region48: #{tpu_custom_call.1} parent=1 // pred_region
      %112 = dma.done [#allocation9], 64
    $region49: #{tpu_custom_call.1} parent=1 // pred_fallthru
      _
    // Predicated region
    $region50: #{tpu_custom_call.1} parent=1 // pred_check
      _
    $region51: #{tpu_custom_call.1} parent=1 // pred_check_branch
      %114 = sbr.rel (0) target = $region53
    $region52: #{tpu_custom_call.1} parent=1 // pred_region
      %116 = dma.done [#allocation12], 4096
    $region53: #{tpu_custom_call.1} parent=1 // pred_fallthru
      _
    %v117 = vld [vmem:[#allocation2] sm:$0xff]
    %v118 = vld [vmem:[#allocation2 + $0x8] sm:$0xff]
    %v119 = vld [vmem:[#allocation2 + $0x10] sm:$0xff]
    %v120 = vld [vmem:[#allocation2 + $0x18] sm:$0xf]
    %v121 = vld [vmem:[#allocation2 + $0x1c] sm:$0xff]
    %v122 = vld [vmem:[#allocation2 + $0x24] sm:$0xff]
    %v123 = vld [vmem:[#allocation2 + $0x2c] sm:$0xff]
    %v124 = vld [vmem:[#allocation2 + $0x34] sm:$0xf]
    %v125 = vld [vmem:[#allocation5] sm:$0xff]
    %v126 = vld [vmem:[#allocation5 + $0x8] sm:$0xff]
    %v127 = vld [vmem:[#allocation5 + $0x10] sm:$0xff]
    %v128 = vld [vmem:[#allocation5 + $0x18] sm:$0xff]
    %v129 = vld [vmem:[#allocation5 + $0x20] sm:$0xff]
    %v130 = vld [vmem:[#allocation5 + $0x28] sm:$0xff]
    %v131 = vld [vmem:[#allocation5 + $0x30] sm:$0xff]
    %v132 = vld [vmem:[#allocation5 + $0x38] sm:$0xff]
    %v133 = vld [vmem:[#allocation5 + $0x40] sm:$0xff]
    %v134 = vld [vmem:[#allocation5 + $0x48] sm:$0xff]
    %v135 = vld [vmem:[#allocation5 + $0x50] sm:$0xff]
    %v136 = vld [vmem:[#allocation5 + $0x58] sm:$0xff]
    %v137 = vld [vmem:[#allocation5 + $0x60] sm:$0xff]
    %v138 = vld [vmem:[#allocation5 + $0x68] sm:$0xff]
    %v139 = vld [vmem:[#allocation5 + $0x70] sm:$0xff]
    %v140 = vld [vmem:[#allocation5 + $0x78] sm:$0xff]
    %v141 = vld [vmem:[#allocation5 + $0x80] sm:$0xff]
    %v142 = vld [vmem:[#allocation5 + $0x88] sm:$0xff]
    %v143 = vld [vmem:[#allocation5 + $0x90] sm:$0xff]
    %v144 = vld [vmem:[#allocation5 + $0x98] sm:$0xff]
    %v145 = vld [vmem:[#allocation5 + $0xa0] sm:$0xff]
    %v146 = vld [vmem:[#allocation5 + $0xa8] sm:$0xff]
    %v147 = vld [vmem:[#allocation5 + $0xb0] sm:$0xff]
    %v148 = vld [vmem:[#allocation5 + $0xb8] sm:$0xff]
    %v149 = vld [vmem:[#allocation5 + $0xc0] sm:$0xff]
    %v150 = vld [vmem:[#allocation5 + $0xc8] sm:$0xff]
    %v151 = vld [vmem:[#allocation5 + $0xd0] sm:$0xff]
    %v152 = vld [vmem:[#allocation5 + $0xd8] sm:$0xff]
    %v153 = vld [vmem:[#allocation5 + $0xe0] sm:$0xff]
    %v154 = vld [vmem:[#allocation5 + $0xe8] sm:$0xff]
    %v155 = vld [vmem:[#allocation5 + $0xf0] sm:$0xff]
    %v156 = vld [vmem:[#allocation5 + $0xf8] sm:$0xff]
    %v157 = vld [vmem:[#allocation5 + $0x100] sm:$0xff]
    %v158 = vld [vmem:[#allocation5 + $0x108] sm:$0xff]
    %v159 = vld [vmem:[#allocation5 + $0x110] sm:$0xff]
    %v160 = vld [vmem:[#allocation5 + $0x118] sm:$0xff]
    %v161 = vld [vmem:[#allocation5 + $0x120] sm:$0xff]
    %v162 = vld [vmem:[#allocation5 + $0x128] sm:$0xff]
    %v163 = vld [vmem:[#allocation5 + $0x130] sm:$0xff]
    %v164 = vld [vmem:[#allocation5 + $0x138] sm:$0xff]
    %v165 = vld [vmem:[#allocation5 + $0x140] sm:$0xff]
    %v166 = vld [vmem:[#allocation5 + $0x148] sm:$0xff]
    %v167 = vld [vmem:[#allocation5 + $0x150] sm:$0xff]
    %v168 = vld [vmem:[#allocation5 + $0x158] sm:$0xff]
    %v169 = vld [vmem:[#allocation5 + $0x160] sm:$0xff]
    %v170 = vld [vmem:[#allocation5 + $0x168] sm:$0xff]
    %v171 = vld [vmem:[#allocation5 + $0x170] sm:$0xff]
    %v172 = vld [vmem:[#allocation5 + $0x178] sm:$0xff]
    %v173 = vld [vmem:[#allocation5 + $0x180] sm:$0xff]
    %v174 = vld [vmem:[#allocation5 + $0x188] sm:$0xff]
    %v175 = vld [vmem:[#allocation5 + $0x190] sm:$0xff]
    %v176 = vld [vmem:[#allocation5 + $0x198] sm:$0xff]
    %v177 = vld [vmem:[#allocation5 + $0x1a0] sm:$0xff]
    %v178 = vld [vmem:[#allocation5 + $0x1a8] sm:$0xff]
    %v179 = vld [vmem:[#allocation5 + $0x1b0] sm:$0xff]
    %v180 = vld [vmem:[#allocation5 + $0x1b8] sm:$0xff]
    %v181 = vld [vmem:[#allocation5 + $0x1c0] sm:$0xff]
    %v182 = vld [vmem:[#allocation5 + $0x1c8] sm:$0xff]
    %v183 = vld [vmem:[#allocation5 + $0x1d0] sm:$0xff]
    %v184 = vld [vmem:[#allocation5 + $0x1d8] sm:$0xff]
    %v185 = vld [vmem:[#allocation5 + $0x1e0] sm:$0xff]
    %v186 = vld [vmem:[#allocation5 + $0x1e8] sm:$0xff]
    %v187 = vld [vmem:[#allocation5 + $0x1f0] sm:$0xff]
    %v188 = vld [vmem:[#allocation5 + $0x1f8] sm:$0xff]
    %v189 = vld [vmem:[#allocation5 + $0x200] sm:$0xff]
    %v190 = vld [vmem:[#allocation5 + $0x208] sm:$0xff]
    %v191 = vld [vmem:[#allocation5 + $0x210] sm:$0xff]
    %v192 = vld [vmem:[#allocation5 + $0x218] sm:$0xff]
    %v193 = vld [vmem:[#allocation5 + $0x220] sm:$0xff]
    %v194 = vld [vmem:[#allocation5 + $0x228] sm:$0xff]
    %v195 = vld [vmem:[#allocation5 + $0x230] sm:$0xff]
    %v196 = vld [vmem:[#allocation5 + $0x238] sm:$0xff]
    %v197 = vld [vmem:[#allocation5 + $0x240] sm:$0xff]
    %v198 = vld [vmem:[#allocation5 + $0x248] sm:$0xff]
    %v199 = vld [vmem:[#allocation5 + $0x250] sm:$0xff]
    %v200 = vld [vmem:[#allocation5 + $0x258] sm:$0xff]
    %v201 = vld [vmem:[#allocation5 + $0x260] sm:$0xff]
    %v202 = vld [vmem:[#allocation5 + $0x268] sm:$0xff]
    %v203 = vld [vmem:[#allocation5 + $0x270] sm:$0xff]
    %v204 = vld [vmem:[#allocation5 + $0x278] sm:$0xff]
    %v205 = vld [vmem:[#allocation5 + $0x280] sm:$0xff]
    %v206 = vld [vmem:[#allocation5 + $0x288] sm:$0xff]
    %v207 = vld [vmem:[#allocation5 + $0x290] sm:$0xff]
    %v208 = vld [vmem:[#allocation5 + $0x298] sm:$0xff]
    %v209 = vld [vmem:[#allocation5 + $0x2a0] sm:$0xff]
    %v210 = vld [vmem:[#allocation5 + $0x2a8] sm:$0xff]
    %v211 = vld [vmem:[#allocation5 + $0x2b0] sm:$0xff]
    %v212 = vld [vmem:[#allocation5 + $0x2b8] sm:$0xff]
    %v213 = vld [vmem:[#allocation5 + $0x2c0] sm:$0xff]
    %v214 = vld [vmem:[#allocation5 + $0x2c8] sm:$0xff]
    %v215 = vld [vmem:[#allocation5 + $0x2d0] sm:$0xff]
    %v216 = vld [vmem:[#allocation5 + $0x2d8] sm:$0xff]
    %v217 = vld [vmem:[#allocation5 + $0x2e0] sm:$0xff]
    %v218 = vld [vmem:[#allocation5 + $0x2e8] sm:$0xff]
    %v219 = vld [vmem:[#allocation5 + $0x2f0] sm:$0xff]
    %v220 = vld [vmem:[#allocation5 + $0x2f8] sm:$0xff]
    %v221 = vld [vmem:[#allocation5 + $0x300] sm:$0xff]
    %v222 = vld [vmem:[#allocation5 + $0x308] sm:$0xff]
    %v223 = vld [vmem:[#allocation5 + $0x310] sm:$0xff]
    %v224 = vld [vmem:[#allocation5 + $0x318] sm:$0xff]
    %v225 = vld [vmem:[#allocation5 + $0x320] sm:$0xff]
    %v226 = vld [vmem:[#allocation5 + $0x328] sm:$0xff]
    %v227 = vld [vmem:[#allocation5 + $0x330] sm:$0xff]
    %v228 = vld [vmem:[#allocation5 + $0x338] sm:$0xff]
    %v229 = vld [vmem:[#allocation5 + $0x340] sm:$0xff]
    %v230 = vld [vmem:[#allocation5 + $0x348] sm:$0xff]
    %v231 = vld [vmem:[#allocation5 + $0x350] sm:$0xff]
    %v232 = vld [vmem:[#allocation5 + $0x358] sm:$0xff]
    %v233 = vld [vmem:[#allocation5 + $0x360] sm:$0xff]
    %v234 = vld [vmem:[#allocation5 + $0x368] sm:$0xff]
    %v235 = vld [vmem:[#allocation5 + $0x370] sm:$0xff]
    %v236 = vld [vmem:[#allocation5 + $0x378] sm:$0xff]
    %v237 = vld [vmem:[#allocation5 + $0x380] sm:$0xff]
    %v238 = vld [vmem:[#allocation5 + $0x388] sm:$0xff]
    %v239 = vld [vmem:[#allocation5 + $0x390] sm:$0xff]
    %v240 = vld [vmem:[#allocation5 + $0x398] sm:$0xff]
    %v241 = vld [vmem:[#allocation5 + $0x3a0] sm:$0xff]
    %v242 = vld [vmem:[#allocation5 + $0x3a8] sm:$0xff]
    %v243 = vld [vmem:[#allocation5 + $0x3b0] sm:$0xff]
    %v244 = vld [vmem:[#allocation5 + $0x3b8] sm:$0xff]
    %v245 = vld [vmem:[#allocation5 + $0x3c0] sm:$0xff]
    %v246 = vld [vmem:[#allocation5 + $0x3c8] sm:$0xff]
    %v247 = vld [vmem:[#allocation5 + $0x3d0] sm:$0xff]
    %v248 = vld [vmem:[#allocation5 + $0x3d8] sm:$0xff]
    %v249 = vld [vmem:[#allocation5 + $0x3e0] sm:$0xff]
    %v250 = vld [vmem:[#allocation5 + $0x3e8] sm:$0xff]
    %v251 = vld [vmem:[#allocation5 + $0x3f0] sm:$0xff]
    %v252 = vld [vmem:[#allocation5 + $0x3f8] sm:$0xff]
    %v253 = vld [vmem:[#allocation5 + $0x400] sm:$0xff]
    %v254 = vld [vmem:[#allocation5 + $0x408] sm:$0xff]
    %v255 = vld [vmem:[#allocation5 + $0x410] sm:$0xff]
    %v256 = vld [vmem:[#allocation5 + $0x418] sm:$0xff]
    %v257 = vld [vmem:[#allocation5 + $0x420] sm:$0xff]
    %v258 = vld [vmem:[#allocation5 + $0x428] sm:$0xff]
    %v259 = vld [vmem:[#allocation5 + $0x430] sm:$0xff]
    %v260 = vld [vmem:[#allocation5 + $0x438] sm:$0xff]
    %v261 = vld [vmem:[#allocation5 + $0x440] sm:$0xff]
    %v262 = vld [vmem:[#allocation5 + $0x448] sm:$0xff]
    %v263 = vld [vmem:[#allocation5 + $0x450] sm:$0xff]
    %v264 = vld [vmem:[#allocation5 + $0x458] sm:$0xff]
    %v265 = vld [vmem:[#allocation5 + $0x460] sm:$0xff]
    %v266 = vld [vmem:[#allocation5 + $0x468] sm:$0xff]
    %v267 = vld [vmem:[#allocation5 + $0x470] sm:$0xff]
    %v268 = vld [vmem:[#allocation5 + $0x478] sm:$0xff]
    %v269 = vld [vmem:[#allocation5 + $0x480] sm:$0xff]
    %v270 = vld [vmem:[#allocation5 + $0x488] sm:$0xff]
    %v271 = vld [vmem:[#allocation5 + $0x490] sm:$0xff]
    %v272 = vld [vmem:[#allocation5 + $0x498] sm:$0xff]
    %v273 = vld [vmem:[#allocation5 + $0x4a0] sm:$0xff]
    %v274 = vld [vmem:[#allocation5 + $0x4a8] sm:$0xff]
    %v275 = vld [vmem:[#allocation5 + $0x4b0] sm:$0xff]
    %v276 = vld [vmem:[#allocation5 + $0x4b8] sm:$0xff]
    %v277 = vld [vmem:[#allocation5 + $0x4c0] sm:$0xff]
    %v278 = vld [vmem:[#allocation5 + $0x4c8] sm:$0xff]
    %v279 = vld [vmem:[#allocation5 + $0x4d0] sm:$0xff]
    %v280 = vld [vmem:[#allocation5 + $0x4d8] sm:$0xff]
    %v281 = vld [vmem:[#allocation5 + $0x4e0] sm:$0xff]
    %v282 = vld [vmem:[#allocation5 + $0x4e8] sm:$0xff]
    %v283 = vld [vmem:[#allocation5 + $0x4f0] sm:$0xff]
    %v284 = vld [vmem:[#allocation5 + $0x4f8] sm:$0xff]
    %v285 = vld [vmem:[#allocation5 + $0x500] sm:$0xff]
    %v286 = vld [vmem:[#allocation5 + $0x508] sm:$0xff]
    %v287 = vld [vmem:[#allocation5 + $0x510] sm:$0xff]
    %v288 = vld [vmem:[#allocation5 + $0x518] sm:$0xff]
    %v289 = vld [vmem:[#allocation5 + $0x520] sm:$0xff]
    %v290 = vld [vmem:[#allocation5 + $0x528] sm:$0xff]
    %v291 = vld [vmem:[#allocation5 + $0x530] sm:$0xff]
    %v292 = vld [vmem:[#allocation5 + $0x538] sm:$0xff]
    %v293 = vld [vmem:[#allocation5 + $0x540] sm:$0xff]
    %v294 = vld [vmem:[#allocation5 + $0x548] sm:$0xff]
    %v295 = vld [vmem:[#allocation5 + $0x550] sm:$0xff]
    %v296 = vld [vmem:[#allocation5 + $0x558] sm:$0xff]
    %v297 = vld [vmem:[#allocation5 + $0x560] sm:$0xff]
    %v298 = vld [vmem:[#allocation5 + $0x568] sm:$0xff]
    %v299 = vld [vmem:[#allocation5 + $0x570] sm:$0xff]
    %v300 = vld [vmem:[#allocation5 + $0x578] sm:$0xff]
    %v301 = vld [vmem:[#allocation5 + $0x580] sm:$0xff]
    %v302 = vld [vmem:[#allocation5 + $0x588] sm:$0xff]
    %v303 = vld [vmem:[#allocation5 + $0x590] sm:$0xff]
    %v304 = vld [vmem:[#allocation5 + $0x598] sm:$0xff]
    %v305 = vld [vmem:[#allocation5 + $0x5a0] sm:$0xff]
    %v306 = vld [vmem:[#allocation5 + $0x5a8] sm:$0xff]
    %v307 = vld [vmem:[#allocation5 + $0x5b0] sm:$0xff]
    %v308 = vld [vmem:[#allocation5 + $0x5b8] sm:$0xff]
    %v309 = vld [vmem:[#allocation5 + $0x5c0] sm:$0xff]
    %v310 = vld [vmem:[#allocation5 + $0x5c8] sm:$0xff]
    %v311 = vld [vmem:[#allocation5 + $0x5d0] sm:$0xff]
    %v312 = vld [vmem:[#allocation5 + $0x5d8] sm:$0xff]
    %v313 = vld [vmem:[#allocation5 + $0x5e0] sm:$0xff]
    %v314 = vld [vmem:[#allocation5 + $0x5e8] sm:$0xff]
    %v315 = vld [vmem:[#allocation5 + $0x5f0] sm:$0xff]
    %v316 = vld [vmem:[#allocation5 + $0x5f8] sm:$0xff]
    %v317 = vld [vmem:[#allocation5 + $0x600] sm:$0xff]
    %v318 = vld [vmem:[#allocation5 + $0x608] sm:$0xff]
    %v319 = vld [vmem:[#allocation5 + $0x610] sm:$0xff]
    %v320 = vld [vmem:[#allocation5 + $0x618] sm:$0xff]
    %v321 = vld [vmem:[#allocation5 + $0x620] sm:$0xff]
    %v322 = vld [vmem:[#allocation5 + $0x628] sm:$0xff]
    %v323 = vld [vmem:[#allocation5 + $0x630] sm:$0xff]
    %v324 = vld [vmem:[#allocation5 + $0x638] sm:$0xff]
    %v325 = vld [vmem:[#allocation5 + $0x640] sm:$0xff]
    %v326 = vld [vmem:[#allocation5 + $0x648] sm:$0xff]
    %v327 = vld [vmem:[#allocation5 + $0x650] sm:$0xff]
    %v328 = vld [vmem:[#allocation5 + $0x658] sm:$0xff]
    %v329 = vld [vmem:[#allocation5 + $0x660] sm:$0xff]
    %v330 = vld [vmem:[#allocation5 + $0x668] sm:$0xff]
    %v331 = vld [vmem:[#allocation5 + $0x670] sm:$0xff]
    %v332 = vld [vmem:[#allocation5 + $0x678] sm:$0xff]
    %v333 = vld [vmem:[#allocation5 + $0x680] sm:$0xff]
    %v334 = vld [vmem:[#allocation5 + $0x688] sm:$0xff]
    %v335 = vld [vmem:[#allocation5 + $0x690] sm:$0xff]
    %v336 = vld [vmem:[#allocation5 + $0x698] sm:$0xff]
    %v337 = vld [vmem:[#allocation5 + $0x6a0] sm:$0xff]
    %v338 = vld [vmem:[#allocation5 + $0x6a8] sm:$0xff]
    %v339 = vld [vmem:[#allocation5 + $0x6b0] sm:$0xff]
    %v340 = vld [vmem:[#allocation5 + $0x6b8] sm:$0xff]
    %v341 = vld [vmem:[#allocation5 + $0x6c0] sm:$0xff]
    %v342 = vld [vmem:[#allocation5 + $0x6c8] sm:$0xff]
    %v343 = vld [vmem:[#allocation5 + $0x6d0] sm:$0xff]
    %v344 = vld [vmem:[#allocation5 + $0x6d8] sm:$0xff]
    %v345 = vld [vmem:[#allocation5 + $0x6e0] sm:$0xff]
    %v346 = vld [vmem:[#allocation5 + $0x6e8] sm:$0xff]
    %v347 = vld [vmem:[#allocation5 + $0x6f0] sm:$0xff]
    %v348 = vld [vmem:[#allocation5 + $0x6f8] sm:$0xff]
    %v349 = vld [vmem:[#allocation7] sm:$0xf]
    %v351 = vperm.slane %v349, 0
    %v352 = vperm.slane %v349, 1
    %v353 = vperm.slane %v349, 2
    %v354 = vperm.slane %v349, 3
    %v367 = vunpack.c.l.b16 %v117
    %v368 = vunpack.c.h.b16 %v117
    %v369 = vunpack.c.l.b16 %v118
    %v370 = vunpack.c.h.b16 %v118
    %v371 = vunpack.c.l.b16 %v119
    %v372 = vunpack.c.h.b16 %v119
    %v373 = vunpack.c.l.b16 %v120
    %v374 = vunpack.c.l.b16 %v121
    %v375 = vunpack.c.h.b16 %v121
    %v376 = vunpack.c.l.b16 %v122
    %v377 = vunpack.c.h.b16 %v122
    %v378 = vunpack.c.l.b16 %v123
    %v379 = vunpack.c.h.b16 %v123
    %v380 = vunpack.c.l.b16 %v124
    %v381 = vpack.c.b16 %v374, %v367
    %v382 = vpack.c.b16 %v375, %v368
    %v383 = vpack.c.b16 %v376, %v369
    %v384 = vpack.c.b16 %v377, %v370
    %v385 = vpack.c.b16 %v378, %v371
    %v386 = vpack.c.b16 %v379, %v372
    %v387 = vpack.c.b16 %v380, %v373
    %v619 = vunpack.c.l.b16 %v125
    %v620 = vunpack.c.h.b16 %v125
    %v621 = vunpack.c.l.b16 %v126
    %v622 = vunpack.c.h.b16 %v126
    %v623 = vunpack.c.l.b16 %v127
    %v624 = vunpack.c.h.b16 %v127
    %v625 = vunpack.c.l.b16 %v128
    %v626 = vunpack.c.h.b16 %v128
    %v627 = vunpack.c.l.b16 %v129
    %v628 = vunpack.c.h.b16 %v129
    %v629 = vunpack.c.l.b16 %v130
    %v630 = vunpack.c.h.b16 %v130
    %v631 = vunpack.c.l.b16 %v131
    %v632 = vunpack.c.h.b16 %v131
    %v633 = vunpack.c.l.b16 %v132
    %v634 = vunpack.c.h.b16 %v132
    %v635 = vunpack.c.l.b16 %v133
    %v636 = vunpack.c.h.b16 %v133
    %v637 = vunpack.c.l.b16 %v134
    %v638 = vunpack.c.h.b16 %v134
    %v639 = vunpack.c.l.b16 %v135
    %v640 = vunpack.c.h.b16 %v135
    %v641 = vunpack.c.l.b16 %v136
    %v642 = vunpack.c.h.b16 %v136
    %v643 = vunpack.c.l.b16 %v137
    %v644 = vunpack.c.h.b16 %v137
    %v645 = vunpack.c.l.b16 %v138
    %v646 = vunpack.c.h.b16 %v138
    %v647 = vunpack.c.l.b16 %v139
    %v648 = vunpack.c.h.b16 %v139
    %v649 = vunpack.c.l.b16 %v140
    %v650 = vunpack.c.h.b16 %v140
    %v651 = vunpack.c.l.b16 %v141
    %v652 = vunpack.c.h.b16 %v141
    %v653 = vunpack.c.l.b16 %v142
    %v654 = vunpack.c.h.b16 %v142
    %v655 = vunpack.c.l.b16 %v143
    %v656 = vunpack.c.h.b16 %v143
    %v657 = vunpack.c.l.b16 %v144
    %v658 = vunpack.c.h.b16 %v144
    %v659 = vunpack.c.l.b16 %v145
    %v660 = vunpack.c.h.b16 %v145
    %v661 = vunpack.c.l.b16 %v146
    %v662 = vunpack.c.h.b16 %v146
    %v663 = vunpack.c.l.b16 %v147
    %v664 = vunpack.c.h.b16 %v147
    %v665 = vunpack.c.l.b16 %v148
    %v666 = vunpack.c.h.b16 %v148
    %v667 = vunpack.c.l.b16 %v149
    %v668 = vunpack.c.h.b16 %v149
    %v669 = vunpack.c.l.b16 %v150
    %v670 = vunpack.c.h.b16 %v150
    %v671 = vunpack.c.l.b16 %v151
    %v672 = vunpack.c.h.b16 %v151
    %v673 = vunpack.c.l.b16 %v152
    %v674 = vunpack.c.h.b16 %v152
    %v675 = vunpack.c.l.b16 %v153
    %v676 = vunpack.c.h.b16 %v153
    %v677 = vunpack.c.l.b16 %v154
    %v678 = vunpack.c.h.b16 %v154
    %v679 = vunpack.c.l.b16 %v155
    %v680 = vunpack.c.h.b16 %v155
    %v681 = vunpack.c.l.b16 %v156
    %v682 = vunpack.c.h.b16 %v156
    %v683 = vunpack.c.l.b16 %v157
    %v684 = vunpack.c.h.b16 %v157
    %v685 = vunpack.c.l.b16 %v158
    %v686 = vunpack.c.h.b16 %v158
    %v687 = vunpack.c.l.b16 %v159
    %v688 = vunpack.c.h.b16 %v159
    %v689 = vunpack.c.l.b16 %v160
    %v690 = vunpack.c.h.b16 %v160
    %v691 = vunpack.c.l.b16 %v161
    %v692 = vunpack.c.h.b16 %v161
    %v693 = vunpack.c.l.b16 %v162
    %v694 = vunpack.c.h.b16 %v162
    %v695 = vunpack.c.l.b16 %v163
    %v696 = vunpack.c.h.b16 %v163
    %v697 = vunpack.c.l.b16 %v164
    %v698 = vunpack.c.h.b16 %v164
    %v699 = vunpack.c.l.b16 %v165
    %v700 = vunpack.c.h.b16 %v165
    %v701 = vunpack.c.l.b16 %v166
    %v702 = vunpack.c.h.b16 %v166
    %v703 = vunpack.c.l.b16 %v167
    %v704 = vunpack.c.h.b16 %v167
    %v705 = vunpack.c.l.b16 %v168
    %v706 = vunpack.c.h.b16 %v168
    %v707 = vunpack.c.l.b16 %v169
    %v708 = vunpack.c.h.b16 %v169
    %v709 = vunpack.c.l.b16 %v170
    %v710 = vunpack.c.h.b16 %v170
    %v711 = vunpack.c.l.b16 %v171
    %v712 = vunpack.c.h.b16 %v171
    %v713 = vunpack.c.l.b16 %v172
    %v714 = vunpack.c.h.b16 %v172
    %v715 = vunpack.c.l.b16 %v173
    %v716 = vunpack.c.h.b16 %v173
    %v717 = vunpack.c.l.b16 %v174
    %v718 = vunpack.c.h.b16 %v174
    %v719 = vunpack.c.l.b16 %v175
    %v720 = vunpack.c.h.b16 %v175
    %v721 = vunpack.c.l.b16 %v176
    %v722 = vunpack.c.h.b16 %v176
    %v723 = vunpack.c.l.b16 %v177
    %v724 = vunpack.c.h.b16 %v177
    %v725 = vunpack.c.l.b16 %v178
    %v726 = vunpack.c.h.b16 %v178
    %v727 = vunpack.c.l.b16 %v179
    %v728 = vunpack.c.h.b16 %v179
    %v729 = vunpack.c.l.b16 %v180
    %v730 = vunpack.c.h.b16 %v180
    %v731 = vunpack.c.l.b16 %v181
    %v732 = vunpack.c.h.b16 %v181
    %v733 = vunpack.c.l.b16 %v182
    %v734 = vunpack.c.h.b16 %v182
    %v735 = vunpack.c.l.b16 %v183
    %v736 = vunpack.c.h.b16 %v183
    %v737 = vunpack.c.l.b16 %v184
    %v738 = vunpack.c.h.b16 %v184
    %v739 = vunpack.c.l.b16 %v185
    %v740 = vunpack.c.h.b16 %v185
    %v741 = vunpack.c.l.b16 %v186
    %v742 = vunpack.c.h.b16 %v186
    %v743 = vunpack.c.l.b16 %v187
    %v744 = vunpack.c.h.b16 %v187
    %v745 = vunpack.c.l.b16 %v188
    %v746 = vunpack.c.h.b16 %v188
    %v747 = vunpack.c.l.b16 %v189
    %v748 = vunpack.c.h.b16 %v189
    %v749 = vunpack.c.l.b16 %v190
    %v750 = vunpack.c.h.b16 %v190
    %v751 = vunpack.c.l.b16 %v191
    %v752 = vunpack.c.h.b16 %v191
    %v753 = vunpack.c.l.b16 %v192
    %v754 = vunpack.c.h.b16 %v192
    %v755 = vunpack.c.l.b16 %v193
    %v756 = vunpack.c.h.b16 %v193
    %v757 = vunpack.c.l.b16 %v194
    %v758 = vunpack.c.h.b16 %v194
    %v759 = vunpack.c.l.b16 %v195
    %v760 = vunpack.c.h.b16 %v195
    %v761 = vunpack.c.l.b16 %v196
    %v762 = vunpack.c.h.b16 %v196
    %v763 = vunpack.c.l.b16 %v197
    %v764 = vunpack.c.h.b16 %v197
    %v765 = vunpack.c.l.b16 %v198
    %v766 = vunpack.c.h.b16 %v198
    %v767 = vunpack.c.l.b16 %v199
    %v768 = vunpack.c.h.b16 %v199
    %v769 = vunpack.c.l.b16 %v200
    %v770 = vunpack.c.h.b16 %v200
    %v771 = vunpack.c.l.b16 %v201
    %v772 = vunpack.c.h.b16 %v201
    %v773 = vunpack.c.l.b16 %v202
    %v774 = vunpack.c.h.b16 %v202
    %v775 = vunpack.c.l.b16 %v203
    %v776 = vunpack.c.h.b16 %v203
    %v777 = vunpack.c.l.b16 %v204
    %v778 = vunpack.c.h.b16 %v204
    %v779 = vunpack.c.l.b16 %v205
    %v780 = vunpack.c.h.b16 %v205
    %v781 = vunpack.c.l.b16 %v206
    %v782 = vunpack.c.h.b16 %v206
    %v783 = vunpack.c.l.b16 %v207
    %v784 = vunpack.c.h.b16 %v207
    %v785 = vunpack.c.l.b16 %v208
    %v786 = vunpack.c.h.b16 %v208
    %v787 = vunpack.c.l.b16 %v209
    %v788 = vunpack.c.h.b16 %v209
    %v789 = vunpack.c.l.b16 %v210
    %v790 = vunpack.c.h.b16 %v210
    %v791 = vunpack.c.l.b16 %v211
    %v792 = vunpack.c.h.b16 %v211
    %v793 = vunpack.c.l.b16 %v212
    %v794 = vunpack.c.h.b16 %v212
    %v795 = vunpack.c.l.b16 %v213
    %v796 = vunpack.c.h.b16 %v213
    %v797 = vunpack.c.l.b16 %v214
    %v798 = vunpack.c.h.b16 %v214
    %v799 = vunpack.c.l.b16 %v215
    %v800 = vunpack.c.h.b16 %v215
    %v801 = vunpack.c.l.b16 %v216
    %v802 = vunpack.c.h.b16 %v216
    %v803 = vunpack.c.l.b16 %v217
    %v804 = vunpack.c.h.b16 %v217
    %v805 = vunpack.c.l.b16 %v218
    %v806 = vunpack.c.h.b16 %v218
    %v807 = vunpack.c.l.b16 %v219
    %v808 = vunpack.c.h.b16 %v219
    %v809 = vunpack.c.l.b16 %v220
    %v810 = vunpack.c.h.b16 %v220
    %v811 = vunpack.c.l.b16 %v221
    %v812 = vunpack.c.h.b16 %v221
    %v813 = vunpack.c.l.b16 %v222
    %v814 = vunpack.c.h.b16 %v222
    %v815 = vunpack.c.l.b16 %v223
    %v816 = vunpack.c.h.b16 %v223
    %v817 = vunpack.c.l.b16 %v224
    %v818 = vunpack.c.h.b16 %v224
    %v819 = vunpack.c.l.b16 %v225
    %v820 = vunpack.c.h.b16 %v225
    %v821 = vunpack.c.l.b16 %v226
    %v822 = vunpack.c.h.b16 %v226
    %v823 = vunpack.c.l.b16 %v227
    %v824 = vunpack.c.h.b16 %v227
    %v825 = vunpack.c.l.b16 %v228
    %v826 = vunpack.c.h.b16 %v228
    %v827 = vunpack.c.l.b16 %v229
    %v828 = vunpack.c.h.b16 %v229
    %v829 = vunpack.c.l.b16 %v230
    %v830 = vunpack.c.h.b16 %v230
    %v831 = vunpack.c.l.b16 %v231
    %v832 = vunpack.c.h.b16 %v231
    %v833 = vunpack.c.l.b16 %v232
    %v834 = vunpack.c.h.b16 %v232
    %v835 = vunpack.c.l.b16 %v233
    %v836 = vunpack.c.h.b16 %v233
    %v837 = vunpack.c.l.b16 %v234
    %v838 = vunpack.c.h.b16 %v234
    %v839 = vunpack.c.l.b16 %v235
    %v840 = vunpack.c.h.b16 %v235
    %v841 = vunpack.c.l.b16 %v236
    %v842 = vunpack.c.h.b16 %v236
    %v843 = vunpack.c.l.b16 %v237
    %v844 = vunpack.c.h.b16 %v237
    %v845 = vunpack.c.l.b16 %v238
    %v846 = vunpack.c.h.b16 %v238
    %v847 = vunpack.c.l.b16 %v239
    %v848 = vunpack.c.h.b16 %v239
    %v849 = vunpack.c.l.b16 %v240
    %v850 = vunpack.c.h.b16 %v240
    %v851 = vunpack.c.l.b16 %v241
    %v852 = vunpack.c.h.b16 %v241
    %v853 = vunpack.c.l.b16 %v242
    %v854 = vunpack.c.h.b16 %v242
    %v855 = vunpack.c.l.b16 %v243
    %v856 = vunpack.c.h.b16 %v243
    %v857 = vunpack.c.l.b16 %v244
    %v858 = vunpack.c.h.b16 %v244
    %v859 = vunpack.c.l.b16 %v245
    %v860 = vunpack.c.h.b16 %v245
    %v861 = vunpack.c.l.b16 %v246
    %v862 = vunpack.c.h.b16 %v246
    %v863 = vunpack.c.l.b16 %v247
    %v864 = vunpack.c.h.b16 %v247
    %v865 = vunpack.c.l.b16 %v248
    %v866 = vunpack.c.h.b16 %v248
    %v867 = vunpack.c.l.b16 %v249
    %v868 = vunpack.c.h.b16 %v249
    %v869 = vunpack.c.l.b16 %v250
    %v870 = vunpack.c.h.b16 %v250
    %v871 = vunpack.c.l.b16 %v251
    %v872 = vunpack.c.h.b16 %v251
    %v873 = vunpack.c.l.b16 %v252
    %v874 = vunpack.c.h.b16 %v252
    %v875 = vunpack.c.l.b16 %v253
    %v876 = vunpack.c.h.b16 %v253
    %v877 = vunpack.c.l.b16 %v254
    %v878 = vunpack.c.h.b16 %v254
    %v879 = vunpack.c.l.b16 %v255
    %v880 = vunpack.c.h.b16 %v255
    %v881 = vunpack.c.l.b16 %v256
    %v882 = vunpack.c.h.b16 %v256
    %v883 = vunpack.c.l.b16 %v257
    %v884 = vunpack.c.h.b16 %v257
    %v885 = vunpack.c.l.b16 %v258
    %v886 = vunpack.c.h.b16 %v258
    %v887 = vunpack.c.l.b16 %v259
    %v888 = vunpack.c.h.b16 %v259
    %v889 = vunpack.c.l.b16 %v260
    %v890 = vunpack.c.h.b16 %v260
    %v891 = vunpack.c.l.b16 %v261
    %v892 = vunpack.c.h.b16 %v261
    %v893 = vunpack.c.l.b16 %v262
    %v894 = vunpack.c.h.b16 %v262
    %v895 = vunpack.c.l.b16 %v263
    %v896 = vunpack.c.h.b16 %v263
    %v897 = vunpack.c.l.b16 %v264
    %v898 = vunpack.c.h.b16 %v264
    %v899 = vunpack.c.l.b16 %v265
    %v900 = vunpack.c.h.b16 %v265
    %v901 = vunpack.c.l.b16 %v266
    %v902 = vunpack.c.h.b16 %v266
    %v903 = vunpack.c.l.b16 %v267
    %v904 = vunpack.c.h.b16 %v267
    %v905 = vunpack.c.l.b16 %v268
    %v906 = vunpack.c.h.b16 %v268
    %v907 = vunpack.c.l.b16 %v269
    %v908 = vunpack.c.h.b16 %v269
    %v909 = vunpack.c.l.b16 %v270
    %v910 = vunpack.c.h.b16 %v270
    %v911 = vunpack.c.l.b16 %v271
    %v912 = vunpack.c.h.b16 %v271
    %v913 = vunpack.c.l.b16 %v272
    %v914 = vunpack.c.h.b16 %v272
    %v915 = vunpack.c.l.b16 %v273
    %v916 = vunpack.c.h.b16 %v273
    %v917 = vunpack.c.l.b16 %v274
    %v918 = vunpack.c.h.b16 %v274
    %v919 = vunpack.c.l.b16 %v275
    %v920 = vunpack.c.h.b16 %v275
    %v921 = vunpack.c.l.b16 %v276
    %v922 = vunpack.c.h.b16 %v276
    %v923 = vunpack.c.l.b16 %v277
    %v924 = vunpack.c.h.b16 %v277
    %v925 = vunpack.c.l.b16 %v278
    %v926 = vunpack.c.h.b16 %v278
    %v927 = vunpack.c.l.b16 %v279
    %v928 = vunpack.c.h.b16 %v279
    %v929 = vunpack.c.l.b16 %v280
    %v930 = vunpack.c.h.b16 %v280
    %v931 = vunpack.c.l.b16 %v281
    %v932 = vunpack.c.h.b16 %v281
    %v933 = vunpack.c.l.b16 %v282
    %v934 = vunpack.c.h.b16 %v282
    %v935 = vunpack.c.l.b16 %v283
    %v936 = vunpack.c.h.b16 %v283
    %v937 = vunpack.c.l.b16 %v284
    %v938 = vunpack.c.h.b16 %v284
    %v939 = vunpack.c.l.b16 %v285
    %v940 = vunpack.c.h.b16 %v285
    %v941 = vunpack.c.l.b16 %v286
    %v942 = vunpack.c.h.b16 %v286
    %v943 = vunpack.c.l.b16 %v287
    %v944 = vunpack.c.h.b16 %v287
    %v945 = vunpack.c.l.b16 %v288
    %v946 = vunpack.c.h.b16 %v288
    %v947 = vunpack.c.l.b16 %v289
    %v948 = vunpack.c.h.b16 %v289
    %v949 = vunpack.c.l.b16 %v290
    %v950 = vunpack.c.h.b16 %v290
    %v951 = vunpack.c.l.b16 %v291
    %v952 = vunpack.c.h.b16 %v291
    %v953 = vunpack.c.l.b16 %v292
    %v954 = vunpack.c.h.b16 %v292
    %v955 = vunpack.c.l.b16 %v293
    %v956 = vunpack.c.h.b16 %v293
    %v957 = vunpack.c.l.b16 %v294
    %v958 = vunpack.c.h.b16 %v294
    %v959 = vunpack.c.l.b16 %v295
    %v960 = vunpack.c.h.b16 %v295
    %v961 = vunpack.c.l.b16 %v296
    %v962 = vunpack.c.h.b16 %v296
    %v963 = vunpack.c.l.b16 %v297
    %v964 = vunpack.c.h.b16 %v297
    %v965 = vunpack.c.l.b16 %v298
    %v966 = vunpack.c.h.b16 %v298
    %v967 = vunpack.c.l.b16 %v299
    %v968 = vunpack.c.h.b16 %v299
    %v969 = vunpack.c.l.b16 %v300
    %v970 = vunpack.c.h.b16 %v300
    %v971 = vunpack.c.l.b16 %v301
    %v972 = vunpack.c.h.b16 %v301
    %v973 = vunpack.c.l.b16 %v302
    %v974 = vunpack.c.h.b16 %v302
    %v975 = vunpack.c.l.b16 %v303
    %v976 = vunpack.c.h.b16 %v303
    %v977 = vunpack.c.l.b16 %v304
    %v978 = vunpack.c.h.b16 %v304
    %v979 = vunpack.c.l.b16 %v305
    %v980 = vunpack.c.h.b16 %v305
    %v981 = vunpack.c.l.b16 %v306
    %v982 = vunpack.c.h.b16 %v306
    %v983 = vunpack.c.l.b16 %v307
    %v984 = vunpack.c.h.b16 %v307
    %v985 = vunpack.c.l.b16 %v308
    %v986 = vunpack.c.h.b16 %v308
    %v987 = vunpack.c.l.b16 %v309
    %v988 = vunpack.c.h.b16 %v309
    %v989 = vunpack.c.l.b16 %v310
    %v990 = vunpack.c.h.b16 %v310
    %v991 = vunpack.c.l.b16 %v311
    %v992 = vunpack.c.h.b16 %v311
    %v993 = vunpack.c.l.b16 %v312
    %v994 = vunpack.c.h.b16 %v312
    %v995 = vunpack.c.l.b16 %v313
    %v996 = vunpack.c.h.b16 %v313
    %v997 = vunpack.c.l.b16 %v314
    %v998 = vunpack.c.h.b16 %v314
    %v999 = vunpack.c.l.b16 %v315
    %v1000 = vunpack.c.h.b16 %v315
    %v1001 = vunpack.c.l.b16 %v316
    %v1002 = vunpack.c.h.b16 %v316
    %v1003 = vunpack.c.l.b16 %v317
    %v1004 = vunpack.c.h.b16 %v317
    %v1005 = vunpack.c.l.b16 %v318
    %v1006 = vunpack.c.h.b16 %v318
    %v1007 = vunpack.c.l.b16 %v319
    %v1008 = vunpack.c.h.b16 %v319
    %v1009 = vunpack.c.l.b16 %v320
    %v1010 = vunpack.c.h.b16 %v320
    %v1011 = vunpack.c.l.b16 %v321
    %v1012 = vunpack.c.h.b16 %v321
    %v1013 = vunpack.c.l.b16 %v322
    %v1014 = vunpack.c.h.b16 %v322
    %v1015 = vunpack.c.l.b16 %v323
    %v1016 = vunpack.c.h.b16 %v323
    %v1017 = vunpack.c.l.b16 %v324
    %v1018 = vunpack.c.h.b16 %v324
    %v1019 = vunpack.c.l.b16 %v325
    %v1020 = vunpack.c.h.b16 %v325
    %v1021 = vunpack.c.l.b16 %v326
    %v1022 = vunpack.c.h.b16 %v326
    %v1023 = vunpack.c.l.b16 %v327
    %v1024 = vunpack.c.h.b16 %v327
    %v1025 = vunpack.c.l.b16 %v328
    %v1026 = vunpack.c.h.b16 %v328
    %v1027 = vunpack.c.l.b16 %v329
    %v1028 = vunpack.c.h.b16 %v329
    %v1029 = vunpack.c.l.b16 %v330
    %v1030 = vunpack.c.h.b16 %v330
    %v1031 = vunpack.c.l.b16 %v331
    %v1032 = vunpack.c.h.b16 %v331
    %v1033 = vunpack.c.l.b16 %v332
    %v1034 = vunpack.c.h.b16 %v332
    %v1035 = vunpack.c.l.b16 %v333
    %v1036 = vunpack.c.h.b16 %v333
    %v1037 = vunpack.c.l.b16 %v334
    %v1038 = vunpack.c.h.b16 %v334
    %v1039 = vunpack.c.l.b16 %v335
    %v1040 = vunpack.c.h.b16 %v335
    %v1041 = vunpack.c.l.b16 %v336
    %v1042 = vunpack.c.h.b16 %v336
    %v1043 = vunpack.c.l.b16 %v337
    %v1044 = vunpack.c.h.b16 %v337
    %v1045 = vunpack.c.l.b16 %v338
    %v1046 = vunpack.c.h.b16 %v338
    %v1047 = vunpack.c.l.b16 %v339
    %v1048 = vunpack.c.h.b16 %v339
    %v1049 = vunpack.c.l.b16 %v340
    %v1050 = vunpack.c.h.b16 %v340
    %v1051 = vunpack.c.l.b16 %v341
    %v1052 = vunpack.c.h.b16 %v341
    %v1053 = vunpack.c.l.b16 %v342
    %v1054 = vunpack.c.h.b16 %v342
    %v1055 = vunpack.c.l.b16 %v343
    %v1056 = vunpack.c.h.b16 %v343
    %v1057 = vunpack.c.l.b16 %v344
    %v1058 = vunpack.c.h.b16 %v344
    %v1059 = vunpack.c.l.b16 %v345
    %v1060 = vunpack.c.h.b16 %v345
    %v1061 = vunpack.c.l.b16 %v346
    %v1062 = vunpack.c.h.b16 %v346
    %v1063 = vunpack.c.l.b16 %v347
    %v1064 = vunpack.c.h.b16 %v347
    %v1065 = vunpack.c.l.b16 %v348
    %v1066 = vunpack.c.h.b16 %v348
    %v1067 = vpack.c.b16 %v623, %v619
    %v1068 = vpack.c.b16 %v624, %v620
    %v1069 = vpack.c.b16 %v625, %v621
    %v1070 = vpack.c.b16 %v626, %v622
    %v1071 = vpack.c.b16 %v631, %v627
    %v1072 = vpack.c.b16 %v632, %v628
    %v1073 = vpack.c.b16 %v633, %v629
    %v1074 = vpack.c.b16 %v634, %v630
    %v1075 = vpack.c.b16 %v639, %v635
    %v1076 = vpack.c.b16 %v640, %v636
    %v1077 = vpack.c.b16 %v641, %v637
    %v1078 = vpack.c.b16 %v642, %v638
    %v1079 = vpack.c.b16 %v647, %v643
    %v1080 = vpack.c.b16 %v648, %v644
    %v1081 = vpack.c.b16 %v649, %v645
    %v1082 = vpack.c.b16 %v650, %v646
    %v1083 = vpack.c.b16 %v655, %v651
    %v1084 = vpack.c.b16 %v656, %v652
    %v1085 = vpack.c.b16 %v657, %v653
    %v1086 = vpack.c.b16 %v658, %v654
    %v1087 = vpack.c.b16 %v663, %v659
    %v1088 = vpack.c.b16 %v664, %v660
    %v1089 = vpack.c.b16 %v665, %v661
    %v1090 = vpack.c.b16 %v666, %v662
    %v1091 = vpack.c.b16 %v671, %v667
    %v1092 = vpack.c.b16 %v672, %v668
    %v1093 = vpack.c.b16 %v673, %v669
    %v1094 = vpack.c.b16 %v674, %v670
    %v1095 = vpack.c.b16 %v679, %v675
    %v1096 = vpack.c.b16 %v680, %v676
    %v1097 = vpack.c.b16 %v681, %v677
    %v1098 = vpack.c.b16 %v682, %v678
    %v1099 = vpack.c.b16 %v687, %v683
    %v1100 = vpack.c.b16 %v688, %v684
    %v1101 = vpack.c.b16 %v689, %v685
    %v1102 = vpack.c.b16 %v690, %v686
    %v1103 = vpack.c.b16 %v695, %v691
    %v1104 = vpack.c.b16 %v696, %v692
    %v1105 = vpack.c.b16 %v697, %v693
    %v1106 = vpack.c.b16 %v698, %v694
    %v1107 = vpack.c.b16 %v703, %v699
    %v1108 = vpack.c.b16 %v704, %v700
    %v1109 = vpack.c.b16 %v705, %v701
    %v1110 = vpack.c.b16 %v706, %v702
    %v1111 = vpack.c.b16 %v711, %v707
    %v1112 = vpack.c.b16 %v712, %v708
    %v1113 = vpack.c.b16 %v713, %v709
    %v1114 = vpack.c.b16 %v714, %v710
    %v1115 = vpack.c.b16 %v719, %v715
    %v1116 = vpack.c.b16 %v720, %v716
    %v1117 = vpack.c.b16 %v721, %v717
    %v1118 = vpack.c.b16 %v722, %v718
    %v1119 = vpack.c.b16 %v727, %v723
    %v1120 = vpack.c.b16 %v728, %v724
    %v1121 = vpack.c.b16 %v729, %v725
    %v1122 = vpack.c.b16 %v730, %v726
    %v1123 = vpack.c.b16 %v735, %v731
    %v1124 = vpack.c.b16 %v736, %v732
    %v1125 = vpack.c.b16 %v737, %v733
    %v1126 = vpack.c.b16 %v738, %v734
    %v1127 = vpack.c.b16 %v743, %v739
    %v1128 = vpack.c.b16 %v744, %v740
    %v1129 = vpack.c.b16 %v745, %v741
    %v1130 = vpack.c.b16 %v746, %v742
    %v1131 = vpack.c.b16 %v751, %v747
    %v1132 = vpack.c.b16 %v752, %v748
    %v1133 = vpack.c.b16 %v753, %v749
    %v1134 = vpack.c.b16 %v754, %v750
    %v1135 = vpack.c.b16 %v759, %v755
    %v1136 = vpack.c.b16 %v760, %v756
    %v1137 = vpack.c.b16 %v761, %v757
    %v1138 = vpack.c.b16 %v762, %v758
    %v1139 = vpack.c.b16 %v767, %v763
    %v1140 = vpack.c.b16 %v768, %v764
    %v1141 = vpack.c.b16 %v769, %v765
    %v1142 = vpack.c.b16 %v770, %v766
    %v1143 = vpack.c.b16 %v775, %v771
    %v1144 = vpack.c.b16 %v776, %v772
    %v1145 = vpack.c.b16 %v777, %v773
    %v1146 = vpack.c.b16 %v778, %v774
    %v1147 = vpack.c.b16 %v783, %v779
    %v1148 = vpack.c.b16 %v784, %v780
    %v1149 = vpack.c.b16 %v785, %v781
    %v1150 = vpack.c.b16 %v786, %v782
    %v1151 = vpack.c.b16 %v791, %v787
    %v1152 = vpack.c.b16 %v792, %v788
    %v1153 = vpack.c.b16 %v793, %v789
    %v1154 = vpack.c.b16 %v794, %v790
    %v1155 = vpack.c.b16 %v799, %v795
    %v1156 = vpack.c.b16 %v800, %v796
    %v1157 = vpack.c.b16 %v801, %v797
    %v1158 = vpack.c.b16 %v802, %v798
    %v1159 = vpack.c.b16 %v807, %v803
    %v1160 = vpack.c.b16 %v808, %v804
    %v1161 = vpack.c.b16 %v809, %v805
    %v1162 = vpack.c.b16 %v810, %v806
    %v1163 = vpack.c.b16 %v815, %v811
    %v1164 = vpack.c.b16 %v816, %v812
    %v1165 = vpack.c.b16 %v817, %v813
    %v1166 = vpack.c.b16 %v818, %v814
    %v1167 = vpack.c.b16 %v823, %v819
    %v1168 = vpack.c.b16 %v824, %v820
    %v1169 = vpack.c.b16 %v825, %v821
    %v1170 = vpack.c.b16 %v826, %v822
    %v1171 = vpack.c.b16 %v831, %v827
    %v1172 = vpack.c.b16 %v832, %v828
    %v1173 = vpack.c.b16 %v833, %v829
    %v1174 = vpack.c.b16 %v834, %v830
    %v1175 = vpack.c.b16 %v839, %v835
    %v1176 = vpack.c.b16 %v840, %v836
    %v1177 = vpack.c.b16 %v841, %v837
    %v1178 = vpack.c.b16 %v842, %v838
    %v1179 = vpack.c.b16 %v847, %v843
    %v1180 = vpack.c.b16 %v848, %v844
    %v1181 = vpack.c.b16 %v849, %v845
    %v1182 = vpack.c.b16 %v850, %v846
    %v1183 = vpack.c.b16 %v855, %v851
    %v1184 = vpack.c.b16 %v856, %v852
    %v1185 = vpack.c.b16 %v857, %v853
    %v1186 = vpack.c.b16 %v858, %v854
    %v1187 = vpack.c.b16 %v863, %v859
    %v1188 = vpack.c.b16 %v864, %v860
    %v1189 = vpack.c.b16 %v865, %v861
    %v1190 = vpack.c.b16 %v866, %v862
    %v1191 = vpack.c.b16 %v871, %v867
    %v1192 = vpack.c.b16 %v872, %v868
    %v1193 = vpack.c.b16 %v873, %v869
    %v1194 = vpack.c.b16 %v874, %v870
    %v1195 = vpack.c.b16 %v879, %v875
    %v1196 = vpack.c.b16 %v880, %v876
    %v1197 = vpack.c.b16 %v881, %v877
    %v1198 = vpack.c.b16 %v882, %v878
    %v1199 = vpack.c.b16 %v887, %v883
    %v1200 = vpack.c.b16 %v888, %v884
    %v1201 = vpack.c.b16 %v889, %v885
    %v1202 = vpack.c.b16 %v890, %v886
    %v1203 = vpack.c.b16 %v895, %v891
    %v1204 = vpack.c.b16 %v896, %v892
    %v1205 = vpack.c.b16 %v897, %v893
    %v1206 = vpack.c.b16 %v898, %v894
    %v1207 = vpack.c.b16 %v903, %v899
    %v1208 = vpack.c.b16 %v904, %v900
    %v1209 = vpack.c.b16 %v905, %v901
    %v1210 = vpack.c.b16 %v906, %v902
    %v1211 = vpack.c.b16 %v911, %v907
    %v1212 = vpack.c.b16 %v912, %v908
    %v1213 = vpack.c.b16 %v913, %v909
    %v1214 = vpack.c.b16 %v914, %v910
    %v1215 = vpack.c.b16 %v919, %v915
    %v1216 = vpack.c.b16 %v920, %v916
    %v1217 = vpack.c.b16 %v921, %v917
    %v1218 = vpack.c.b16 %v922, %v918
    %v1219 = vpack.c.b16 %v927, %v923
    %v1220 = vpack.c.b16 %v928, %v924
    %v1221 = vpack.c.b16 %v929, %v925
    %v1222 = vpack.c.b16 %v930, %v926
    %v1223 = vpack.c.b16 %v935, %v931
    %v1224 = vpack.c.b16 %v936, %v932
    %v1225 = vpack.c.b16 %v937, %v933
    %v1226 = vpack.c.b16 %v938, %v934
    %v1227 = vpack.c.b16 %v943, %v939
    %v1228 = vpack.c.b16 %v944, %v940
    %v1229 = vpack.c.b16 %v945, %v941
    %v1230 = vpack.c.b16 %v946, %v942
    %v1231 = vpack.c.b16 %v951, %v947
    %v1232 = vpack.c.b16 %v952, %v948
    %v1233 = vpack.c.b16 %v953, %v949
    %v1234 = vpack.c.b16 %v954, %v950
    %v1235 = vpack.c.b16 %v959, %v955
    %v1236 = vpack.c.b16 %v960, %v956
    %v1237 = vpack.c.b16 %v961, %v957
    %v1238 = vpack.c.b16 %v962, %v958
    %v1239 = vpack.c.b16 %v967, %v963
    %v1240 = vpack.c.b16 %v968, %v964
    %v1241 = vpack.c.b16 %v969, %v965
    %v1242 = vpack.c.b16 %v970, %v966
    %v1243 = vpack.c.b16 %v975, %v971
    %v1244 = vpack.c.b16 %v976, %v972
    %v1245 = vpack.c.b16 %v977, %v973
    %v1246 = vpack.c.b16 %v978, %v974
    %v1247 = vpack.c.b16 %v983, %v979
    %v1248 = vpack.c.b16 %v984, %v980
    %v1249 = vpack.c.b16 %v985, %v981
    %v1250 = vpack.c.b16 %v986, %v982
    %v1251 = vpack.c.b16 %v991, %v987
    %v1252 = vpack.c.b16 %v992, %v988
    %v1253 = vpack.c.b16 %v993, %v989
    %v1254 = vpack.c.b16 %v994, %v990
    %v1255 = vpack.c.b16 %v999, %v995
    %v1256 = vpack.c.b16 %v1000, %v996
    %v1257 = vpack.c.b16 %v1001, %v997
    %v1258 = vpack.c.b16 %v1002, %v998
    %v1259 = vpack.c.b16 %v1007, %v1003
    %v1260 = vpack.c.b16 %v1008, %v1004
    %v1261 = vpack.c.b16 %v1009, %v1005
    %v1262 = vpack.c.b16 %v1010, %v1006
    %v1263 = vpack.c.b16 %v1015, %v1011
    %v1264 = vpack.c.b16 %v1016, %v1012
    %v1265 = vpack.c.b16 %v1017, %v1013
    %v1266 = vpack.c.b16 %v1018, %v1014
    %v1267 = vpack.c.b16 %v1023, %v1019
    %v1268 = vpack.c.b16 %v1024, %v1020
    %v1269 = vpack.c.b16 %v1025, %v1021
    %v1270 = vpack.c.b16 %v1026, %v1022
    %v1271 = vpack.c.b16 %v1031, %v1027
    %v1272 = vpack.c.b16 %v1032, %v1028
    %v1273 = vpack.c.b16 %v1033, %v1029
    %v1274 = vpack.c.b16 %v1034, %v1030
    %v1275 = vpack.c.b16 %v1039, %v1035
    %v1276 = vpack.c.b16 %v1040, %v1036
    %v1277 = vpack.c.b16 %v1041, %v1037
    %v1278 = vpack.c.b16 %v1042, %v1038
    %v1279 = vpack.c.b16 %v1047, %v1043
    %v1280 = vpack.c.b16 %v1048, %v1044
    %v1281 = vpack.c.b16 %v1049, %v1045
    %v1282 = vpack.c.b16 %v1050, %v1046
    %v1283 = vpack.c.b16 %v1055, %v1051
    %v1284 = vpack.c.b16 %v1056, %v1052
    %v1285 = vpack.c.b16 %v1057, %v1053
    %v1286 = vpack.c.b16 %v1058, %v1054
    %v1287 = vpack.c.b16 %v1063, %v1059
    %v1288 = vpack.c.b16 %v1064, %v1060
    %v1289 = vpack.c.b16 %v1065, %v1061
    %v1290 = vpack.c.b16 %v1066, %v1062
    %1515 = vmatpush.bf16.msra.mxu0 %v1095
    %1516 = vmatpush.bf16.msra.mxu0 %v1091
    %1517 = vmatpush.bf16.msra.mxu0 %v1087
    %1518 = vmatpush.bf16.msra.mxu0 %v1083
    %1519 = vmatpush.bf16.msra.mxu0 %v1079
    %1520 = vmatpush.bf16.msra.mxu0 %v1075
    %1521 = vmatpush.bf16.msra.mxu0 %v1071
    %1522 = vmatpush.bf16.msra.mxu0 %v1067
    %1523 = vmatmul.bf16.gmra.mxu0 %v381
    %v1524 = vpop.f32.mrf.mxu0
    %v1525 = vadd.f32 %v351, %v1524
    %v1526 = vpop.f32.mrf.mxu0
    %v1527 = vadd.f32 %v351, %v1526
    %1528 = vdwg.mxu0
    %1529 = vmatpush.bf16.msra.mxu0 %v1127
    %1530 = vmatpush.bf16.msra.mxu0 %v1123
    %1531 = vmatpush.bf16.msra.mxu0 %v1119
    %1532 = vmatpush.bf16.msra.mxu0 %v1115
    %1533 = vmatpush.bf16.msra.mxu0 %v1111
    %1534 = vmatpush.bf16.msra.mxu0 %v1107
    %1535 = vmatpush.bf16.msra.mxu0 %v1103
    %1536 = vmatpush.bf16.msra.mxu0 %v1099
    %1537 = vmatmul.bf16.gmra.mxu0 %v382
    %v1538 = vpop.f32.mrf.mxu0
    %v1539 = vadd.f32 %v1525, %v1538
    %v1540 = vpop.f32.mrf.mxu0
    %v1541 = vadd.f32 %v1527, %v1540
    %1542 = vdwg.mxu0
    %1543 = vmatpush.bf16.msra.mxu0 %v1159
    %1544 = vmatpush.bf16.msra.mxu0 %v1155
    %1545 = vmatpush.bf16.msra.mxu0 %v1151
    %1546 = vmatpush.bf16.msra.mxu0 %v1147
    %1547 = vmatpush.bf16.msra.mxu0 %v1143
    %1548 = vmatpush.bf16.msra.mxu0 %v1139
    %1549 = vmatpush.bf16.msra.mxu0 %v1135
    %1550 = vmatpush.bf16.msra.mxu0 %v1131
    %1551 = vmatmul.bf16.gmra.mxu0 %v383
    %v1552 = vpop.f32.mrf.mxu0
    %v1553 = vadd.f32 %v1539, %v1552
    %v1554 = vpop.f32.mrf.mxu0
    %v1555 = vadd.f32 %v1541, %v1554
    %1556 = vdwg.mxu0
    %1557 = vmatpush.bf16.msra.mxu0 %v1191
    %1558 = vmatpush.bf16.msra.mxu0 %v1187
    %1559 = vmatpush.bf16.msra.mxu0 %v1183
    %1560 = vmatpush.bf16.msra.mxu0 %v1179
    %1561 = vmatpush.bf16.msra.mxu0 %v1175
    %1562 = vmatpush.bf16.msra.mxu0 %v1171
    %1563 = vmatpush.bf16.msra.mxu0 %v1167
    %1564 = vmatpush.bf16.msra.mxu0 %v1163
    %1565 = vmatmul.bf16.gmra.mxu0 %v384
    %v1566 = vpop.f32.mrf.mxu0
    %v1567 = vadd.f32 %v1553, %v1566
    %v1568 = vpop.f32.mrf.mxu0
    %v1569 = vadd.f32 %v1555, %v1568
    %1570 = vdwg.mxu0
    %1571 = vmatpush.bf16.msra.mxu0 %v1223
    %1572 = vmatpush.bf16.msra.mxu0 %v1219
    %1573 = vmatpush.bf16.msra.mxu0 %v1215
    %1574 = vmatpush.bf16.msra.mxu0 %v1211
    %1575 = vmatpush.bf16.msra.mxu0 %v1207
    %1576 = vmatpush.bf16.msra.mxu0 %v1203
    %1577 = vmatpush.bf16.msra.mxu0 %v1199
    %1578 = vmatpush.bf16.msra.mxu0 %v1195
    %1579 = vmatmul.bf16.gmra.mxu0 %v385
    %v1580 = vpop.f32.mrf.mxu0
    %v1581 = vadd.f32 %v1567, %v1580
    %v1582 = vpop.f32.mrf.mxu0
    %v1583 = vadd.f32 %v1569, %v1582
    %1584 = vdwg.mxu0
    %1585 = vmatpush.bf16.msra.mxu0 %v1255
    %1586 = vmatpush.bf16.msra.mxu0 %v1251
    %1587 = vmatpush.bf16.msra.mxu0 %v1247
    %1588 = vmatpush.bf16.msra.mxu0 %v1243
    %1589 = vmatpush.bf16.msra.mxu0 %v1239
    %1590 = vmatpush.bf16.msra.mxu0 %v1235
    %1591 = vmatpush.bf16.msra.mxu0 %v1231
    %1592 = vmatpush.bf16.msra.mxu0 %v1227
    %1593 = vmatmul.bf16.gmra.mxu0 %v386
    %v1594 = vpop.f32.mrf.mxu0
    %v1595 = vadd.f32 %v1581, %v1594
    %v1596 = vpop.f32.mrf.mxu0
    %v1597 = vadd.f32 %v1583, %v1596
    %1598 = vdwg.mxu0
    %1599 = vmatpush.bf16.msra.mxu0 %v1287
    %1600 = vmatpush.bf16.msra.mxu0 %v1283
    %1601 = vmatpush.bf16.msra.mxu0 %v1279
    %1602 = vmatpush.bf16.msra.mxu0 %v1275
    %1603 = vmatpush.bf16.msra.mxu0 %v1271
    %1604 = vmatpush.bf16.msra.mxu0 %v1267
    %1605 = vmatpush.bf16.msra.mxu0 %v1263
    %1606 = vmatpush.bf16.msra.mxu0 %v1259
    %1607 = vmatmul.bf16.gmra.mxu0 %v387
    %v1608 = vpop.f32.mrf.mxu0
    %v1609 = vadd.f32 %v1595, %v1608
    %v1610 = vpop.f32.mrf.mxu0
    %v1611 = vadd.f32 %v1597, %v1610
    %1612 = vdwg.mxu0
    %1613 = vmatpush.bf16.msra.mxu0 %v1096
    %1614 = vmatpush.bf16.msra.mxu0 %v1092
    %1615 = vmatpush.bf16.msra.mxu0 %v1088
    %1616 = vmatpush.bf16.msra.mxu0 %v1084
    %1617 = vmatpush.bf16.msra.mxu0 %v1080
    %1618 = vmatpush.bf16.msra.mxu0 %v1076
    %1619 = vmatpush.bf16.msra.mxu0 %v1072
    %1620 = vmatpush.bf16.msra.mxu0 %v1068
    %1621 = vmatmul.bf16.gmra.mxu0 %v381
    %v1622 = vpop.f32.mrf.mxu0
    %v1623 = vadd.f32 %v352, %v1622
    %v1624 = vpop.f32.mrf.mxu0
    %v1625 = vadd.f32 %v352, %v1624
    %1626 = vdwg.mxu0
    %1627 = vmatpush.bf16.msra.mxu0 %v1128
    %1628 = vmatpush.bf16.msra.mxu0 %v1124
    %1629 = vmatpush.bf16.msra.mxu0 %v1120
    %1630 = vmatpush.bf16.msra.mxu0 %v1116
    %1631 = vmatpush.bf16.msra.mxu0 %v1112
    %1632 = vmatpush.bf16.msra.mxu0 %v1108
    %1633 = vmatpush.bf16.msra.mxu0 %v1104
    %1634 = vmatpush.bf16.msra.mxu0 %v1100
    %1635 = vmatmul.bf16.gmra.mxu0 %v382
    %v1636 = vpop.f32.mrf.mxu0
    %v1637 = vadd.f32 %v1623, %v1636
    %v1638 = vpop.f32.mrf.mxu0
    %v1639 = vadd.f32 %v1625, %v1638
    %1640 = vdwg.mxu0
    %1641 = vmatpush.bf16.msra.mxu0 %v1160
    %1642 = vmatpush.bf16.msra.mxu0 %v1156
    %1643 = vmatpush.bf16.msra.mxu0 %v1152
    %1644 = vmatpush.bf16.msra.mxu0 %v1148
    %1645 = vmatpush.bf16.msra.mxu0 %v1144
    %1646 = vmatpush.bf16.msra.mxu0 %v1140
    %1647 = vmatpush.bf16.msra.mxu0 %v1136
    %1648 = vmatpush.bf16.msra.mxu0 %v1132
    %1649 = vmatmul.bf16.gmra.mxu0 %v383
    %v1650 = vpop.f32.mrf.mxu0
    %v1651 = vadd.f32 %v1637, %v1650
    %v1652 = vpop.f32.mrf.mxu0
    %v1653 = vadd.f32 %v1639, %v1652
    %1654 = vdwg.mxu0
    %1655 = vmatpush.bf16.msra.mxu0 %v1192
    %1656 = vmatpush.bf16.msra.mxu0 %v1188
    %1657 = vmatpush.bf16.msra.mxu0 %v1184
    %1658 = vmatpush.bf16.msra.mxu0 %v1180
    %1659 = vmatpush.bf16.msra.mxu0 %v1176
    %1660 = vmatpush.bf16.msra.mxu0 %v1172
    %1661 = vmatpush.bf16.msra.mxu0 %v1168
    %1662 = vmatpush.bf16.msra.mxu0 %v1164
    %1663 = vmatmul.bf16.gmra.mxu0 %v384
    %v1664 = vpop.f32.mrf.mxu0
    %v1665 = vadd.f32 %v1651, %v1664
    %v1666 = vpop.f32.mrf.mxu0
    %v1667 = vadd.f32 %v1653, %v1666
    %1668 = vdwg.mxu0
    %1669 = vmatpush.bf16.msra.mxu0 %v1224
    %1670 = vmatpush.bf16.msra.mxu0 %v1220
    %1671 = vmatpush.bf16.msra.mxu0 %v1216
    %1672 = vmatpush.bf16.msra.mxu0 %v1212
    %1673 = vmatpush.bf16.msra.mxu0 %v1208
    %1674 = vmatpush.bf16.msra.mxu0 %v1204
    %1675 = vmatpush.bf16.msra.mxu0 %v1200
    %1676 = vmatpush.bf16.msra.mxu0 %v1196
    %1677 = vmatmul.bf16.gmra.mxu0 %v385
    %v1678 = vpop.f32.mrf.mxu0
    %v1679 = vadd.f32 %v1665, %v1678
    %v1680 = vpop.f32.mrf.mxu0
    %v1681 = vadd.f32 %v1667, %v1680
    %1682 = vdwg.mxu0
    %1683 = vmatpush.bf16.msra.mxu0 %v1256
    %1684 = vmatpush.bf16.msra.mxu0 %v1252
    %1685 = vmatpush.bf16.msra.mxu0 %v1248
    %1686 = vmatpush.bf16.msra.mxu0 %v1244
    %1687 = vmatpush.bf16.msra.mxu0 %v1240
    %1688 = vmatpush.bf16.msra.mxu0 %v1236
    %1689 = vmatpush.bf16.msra.mxu0 %v1232
    %1690 = vmatpush.bf16.msra.mxu0 %v1228
    %1691 = vmatmul.bf16.gmra.mxu0 %v386
    %v1692 = vpop.f32.mrf.mxu0
    %v1693 = vadd.f32 %v1679, %v1692
    %v1694 = vpop.f32.mrf.mxu0
    %v1695 = vadd.f32 %v1681, %v1694
    %1696 = vdwg.mxu0
    %1697 = vmatpush.bf16.msra.mxu0 %v1288
    %1698 = vmatpush.bf16.msra.mxu0 %v1284
    %1699 = vmatpush.bf16.msra.mxu0 %v1280
    %1700 = vmatpush.bf16.msra.mxu0 %v1276
    %1701 = vmatpush.bf16.msra.mxu0 %v1272
    %1702 = vmatpush.bf16.msra.mxu0 %v1268
    %1703 = vmatpush.bf16.msra.mxu0 %v1264
    %1704 = vmatpush.bf16.msra.mxu0 %v1260
    %1705 = vmatmul.bf16.gmra.mxu0 %v387
    %v1706 = vpop.f32.mrf.mxu0
    %v1707 = vadd.f32 %v1693, %v1706
    %v1708 = vpop.f32.mrf.mxu0
    %v1709 = vadd.f32 %v1695, %v1708
    %1710 = vdwg.mxu0
    %1711 = vmatpush.bf16.msra.mxu0 %v1097
    %1712 = vmatpush.bf16.msra.mxu0 %v1093
    %1713 = vmatpush.bf16.msra.mxu0 %v1089
    %1714 = vmatpush.bf16.msra.mxu0 %v1085
    %1715 = vmatpush.bf16.msra.mxu0 %v1081
    %1716 = vmatpush.bf16.msra.mxu0 %v1077
    %1717 = vmatpush.bf16.msra.mxu0 %v1073
    %1718 = vmatpush.bf16.msra.mxu0 %v1069
    %1719 = vmatmul.bf16.gmra.mxu0 %v381
    %v1720 = vpop.f32.mrf.mxu0
    %v1721 = vadd.f32 %v353, %v1720
    %v1722 = vpop.f32.mrf.mxu0
    %v1723 = vadd.f32 %v353, %v1722
    %1724 = vdwg.mxu0
    %1725 = vmatpush.bf16.msra.mxu0 %v1129
    %1726 = vmatpush.bf16.msra.mxu0 %v1125
    %1727 = vmatpush.bf16.msra.mxu0 %v1121
    %1728 = vmatpush.bf16.msra.mxu0 %v1117
    %1729 = vmatpush.bf16.msra.mxu0 %v1113
    %1730 = vmatpush.bf16.msra.mxu0 %v1109
    %1731 = vmatpush.bf16.msra.mxu0 %v1105
    %1732 = vmatpush.bf16.msra.mxu0 %v1101
    %1733 = vmatmul.bf16.gmra.mxu0 %v382
    %v1734 = vpop.f32.mrf.mxu0
    %v1735 = vadd.f32 %v1721, %v1734
    %v1736 = vpop.f32.mrf.mxu0
    %v1737 = vadd.f32 %v1723, %v1736
    %1738 = vdwg.mxu0
    %1739 = vmatpush.bf16.msra.mxu0 %v1161
    %1740 = vmatpush.bf16.msra.mxu0 %v1157
    %1741 = vmatpush.bf16.msra.mxu0 %v1153
    %1742 = vmatpush.bf16.msra.mxu0 %v1149
    %1743 = vmatpush.bf16.msra.mxu0 %v1145
    %1744 = vmatpush.bf16.msra.mxu0 %v1141
    %1745 = vmatpush.bf16.msra.mxu0 %v1137
    %1746 = vmatpush.bf16.msra.mxu0 %v1133
    %1747 = vmatmul.bf16.gmra.mxu0 %v383
    %v1748 = vpop.f32.mrf.mxu0
    %v1749 = vadd.f32 %v1735, %v1748
    %v1750 = vpop.f32.mrf.mxu0
    %v1751 = vadd.f32 %v1737, %v1750
    %1752 = vdwg.mxu0
    %1753 = vmatpush.bf16.msra.mxu0 %v1193
    %1754 = vmatpush.bf16.msra.mxu0 %v1189
    %1755 = vmatpush.bf16.msra.mxu0 %v1185
    %1756 = vmatpush.bf16.msra.mxu0 %v1181
    %1757 = vmatpush.bf16.msra.mxu0 %v1177
    %1758 = vmatpush.bf16.msra.mxu0 %v1173
    %1759 = vmatpush.bf16.msra.mxu0 %v1169
    %1760 = vmatpush.bf16.msra.mxu0 %v1165
    %1761 = vmatmul.bf16.gmra.mxu0 %v384
    %v1762 = vpop.f32.mrf.mxu0
    %v1763 = vadd.f32 %v1749, %v1762
    %v1764 = vpop.f32.mrf.mxu0
    %v1765 = vadd.f32 %v1751, %v1764
    %1766 = vdwg.mxu0
    %1767 = vmatpush.bf16.msra.mxu0 %v1225
    %1768 = vmatpush.bf16.msra.mxu0 %v1221
    %1769 = vmatpush.bf16.msra.mxu0 %v1217
    %1770 = vmatpush.bf16.msra.mxu0 %v1213
    %1771 = vmatpush.bf16.msra.mxu0 %v1209
    %1772 = vmatpush.bf16.msra.mxu0 %v1205
    %1773 = vmatpush.bf16.msra.mxu0 %v1201
    %1774 = vmatpush.bf16.msra.mxu0 %v1197
    %1775 = vmatmul.bf16.gmra.mxu0 %v385
    %v1776 = vpop.f32.mrf.mxu0
    %v1777 = vadd.f32 %v1763, %v1776
    %v1778 = vpop.f32.mrf.mxu0
    %v1779 = vadd.f32 %v1765, %v1778
    %1780 = vdwg.mxu0
    %1781 = vmatpush.bf16.msra.mxu0 %v1257
    %1782 = vmatpush.bf16.msra.mxu0 %v1253
    %1783 = vmatpush.bf16.msra.mxu0 %v1249
    %1784 = vmatpush.bf16.msra.mxu0 %v1245
    %1785 = vmatpush.bf16.msra.mxu0 %v1241
    %1786 = vmatpush.bf16.msra.mxu0 %v1237
    %1787 = vmatpush.bf16.msra.mxu0 %v1233
    %1788 = vmatpush.bf16.msra.mxu0 %v1229
    %1789 = vmatmul.bf16.gmra.mxu0 %v386
    %v1790 = vpop.f32.mrf.mxu0
    %v1791 = vadd.f32 %v1777, %v1790
    %v1792 = vpop.f32.mrf.mxu0
    %v1793 = vadd.f32 %v1779, %v1792
    %1794 = vdwg.mxu0
    %1795 = vmatpush.bf16.msra.mxu0 %v1289
    %1796 = vmatpush.bf16.msra.mxu0 %v1285
    %1797 = vmatpush.bf16.msra.mxu0 %v1281
    %1798 = vmatpush.bf16.msra.mxu0 %v1277
    %1799 = vmatpush.bf16.msra.mxu0 %v1273
    %1800 = vmatpush.bf16.msra.mxu0 %v1269
    %1801 = vmatpush.bf16.msra.mxu0 %v1265
    %1802 = vmatpush.bf16.msra.mxu0 %v1261
    %1803 = vmatmul.bf16.gmra.mxu0 %v387
    %v1804 = vpop.f32.mrf.mxu0
    %v1805 = vadd.f32 %v1791, %v1804
    %v1806 = vpop.f32.mrf.mxu0
    %v1807 = vadd.f32 %v1793, %v1806
    %1808 = vdwg.mxu0
    %1809 = vmatpush.bf16.msra.mxu0 %v1098
    %1810 = vmatpush.bf16.msra.mxu0 %v1094
    %1811 = vmatpush.bf16.msra.mxu0 %v1090
    %1812 = vmatpush.bf16.msra.mxu0 %v1086
    %1813 = vmatpush.bf16.msra.mxu0 %v1082
    %1814 = vmatpush.bf16.msra.mxu0 %v1078
    %1815 = vmatpush.bf16.msra.mxu0 %v1074
    %1816 = vmatpush.bf16.msra.mxu0 %v1070
    %1817 = vmatmul.bf16.gmra.mxu0 %v381
    %v1818 = vpop.f32.mrf.mxu0
    %v1819 = vadd.f32 %v354, %v1818
    %v1820 = vpop.f32.mrf.mxu0
    %v1821 = vadd.f32 %v354, %v1820
    %1822 = vdwg.mxu0
    %1823 = vmatpush.bf16.msra.mxu0 %v1130
    %1824 = vmatpush.bf16.msra.mxu0 %v1126
    %1825 = vmatpush.bf16.msra.mxu0 %v1122
    %1826 = vmatpush.bf16.msra.mxu0 %v1118
    %1827 = vmatpush.bf16.msra.mxu0 %v1114
    %1828 = vmatpush.bf16.msra.mxu0 %v1110
    %1829 = vmatpush.bf16.msra.mxu0 %v1106
    %1830 = vmatpush.bf16.msra.mxu0 %v1102
    %1831 = vmatmul.bf16.gmra.mxu0 %v382
    %v1832 = vpop.f32.mrf.mxu0
    %v1833 = vadd.f32 %v1819, %v1832
    %v1834 = vpop.f32.mrf.mxu0
    %v1835 = vadd.f32 %v1821, %v1834
    %1836 = vdwg.mxu0
    %1837 = vmatpush.bf16.msra.mxu0 %v1162
    %1838 = vmatpush.bf16.msra.mxu0 %v1158
    %1839 = vmatpush.bf16.msra.mxu0 %v1154
    %1840 = vmatpush.bf16.msra.mxu0 %v1150
    %1841 = vmatpush.bf16.msra.mxu0 %v1146
    %1842 = vmatpush.bf16.msra.mxu0 %v1142
    %1843 = vmatpush.bf16.msra.mxu0 %v1138
    %1844 = vmatpush.bf16.msra.mxu0 %v1134
    %1845 = vmatmul.bf16.gmra.mxu0 %v383
    %v1846 = vpop.f32.mrf.mxu0
    %v1847 = vadd.f32 %v1833, %v1846
    %v1848 = vpop.f32.mrf.mxu0
    %v1849 = vadd.f32 %v1835, %v1848
    %1850 = vdwg.mxu0
    %1851 = vmatpush.bf16.msra.mxu0 %v1194
    %1852 = vmatpush.bf16.msra.mxu0 %v1190
    %1853 = vmatpush.bf16.msra.mxu0 %v1186
    %1854 = vmatpush.bf16.msra.mxu0 %v1182
    %1855 = vmatpush.bf16.msra.mxu0 %v1178
    %1856 = vmatpush.bf16.msra.mxu0 %v1174
    %1857 = vmatpush.bf16.msra.mxu0 %v1170
    %1858 = vmatpush.bf16.msra.mxu0 %v1166
    %1859 = vmatmul.bf16.gmra.mxu0 %v384
    %v1860 = vpop.f32.mrf.mxu0
    %v1861 = vadd.f32 %v1847, %v1860
    %v1862 = vpop.f32.mrf.mxu0
    %v1863 = vadd.f32 %v1849, %v1862
    %1864 = vdwg.mxu0
    %1865 = vmatpush.bf16.msra.mxu0 %v1226
    %1866 = vmatpush.bf16.msra.mxu0 %v1222
    %1867 = vmatpush.bf16.msra.mxu0 %v1218
    %1868 = vmatpush.bf16.msra.mxu0 %v1214
    %1869 = vmatpush.bf16.msra.mxu0 %v1210
    %1870 = vmatpush.bf16.msra.mxu0 %v1206
    %1871 = vmatpush.bf16.msra.mxu0 %v1202
    %1872 = vmatpush.bf16.msra.mxu0 %v1198
    %1873 = vmatmul.bf16.gmra.mxu0 %v385
    %v1874 = vpop.f32.mrf.mxu0
    %v1875 = vadd.f32 %v1861, %v1874
    %v1876 = vpop.f32.mrf.mxu0
    %v1877 = vadd.f32 %v1863, %v1876
    %1878 = vdwg.mxu0
    %1879 = vmatpush.bf16.msra.mxu0 %v1258
    %1880 = vmatpush.bf16.msra.mxu0 %v1254
    %1881 = vmatpush.bf16.msra.mxu0 %v1250
    %1882 = vmatpush.bf16.msra.mxu0 %v1246
    %1883 = vmatpush.bf16.msra.mxu0 %v1242
    %1884 = vmatpush.bf16.msra.mxu0 %v1238
    %1885 = vmatpush.bf16.msra.mxu0 %v1234
    %1886 = vmatpush.bf16.msra.mxu0 %v1230
    %1887 = vmatmul.bf16.gmra.mxu0 %v386
    %v1888 = vpop.f32.mrf.mxu0
    %v1889 = vadd.f32 %v1875, %v1888
    %v1890 = vpop.f32.mrf.mxu0
    %v1891 = vadd.f32 %v1877, %v1890
    %1892 = vdwg.mxu0
    %1893 = vmatpush.bf16.msra.mxu0 %v1290
    %1894 = vmatpush.bf16.msra.mxu0 %v1286
    %1895 = vmatpush.bf16.msra.mxu0 %v1282
    %1896 = vmatpush.bf16.msra.mxu0 %v1278
    %1897 = vmatpush.bf16.msra.mxu0 %v1274
    %1898 = vmatpush.bf16.msra.mxu0 %v1270
    %1899 = vmatpush.bf16.msra.mxu0 %v1266
    %1900 = vmatpush.bf16.msra.mxu0 %v1262
    %1901 = vmatmul.bf16.gmra.mxu0 %v387
    %v1902 = vpop.f32.mrf.mxu0
    %v1903 = vadd.f32 %v1889, %v1902
    %v1904 = vpop.f32.mrf.mxu0
    %v1905 = vadd.f32 %v1891, %v1904
    %1906 = vdwg.mxu0
    %v1907 = vmax.f32 %v1609, 0.0
    %v1908 = vmax.f32 %v1707, 0.0
    %v1909 = vmax.f32 %v1805, 0.0
    %v1910 = vmax.f32 %v1903, 0.0
    %v1911 = vmax.f32 %v1611, 0.0
    %v1912 = vmax.f32 %v1709, 0.0
    %v1913 = vmax.f32 %v1807, 0.0
    %v1914 = vmax.f32 %v1905, 0.0
    %v1915 = vpack.c.bf16 %v1911, %v1907
    %v1916 = vpack.c.bf16 %v1912, %v1908
    %v1917 = vpack.c.bf16 %v1913, %v1909
    %v1918 = vpack.c.bf16 %v1914, %v1910
    %v1919 = vld [vmem:[#allocation8] sm:$0xff]
    %v1920 = vld [vmem:[#allocation8 + $0x8] sm:$0xff]
    %v1921 = vld [vmem:[#allocation8 + $0x10] sm:$0xff]
    %v1922 = vld [vmem:[#allocation8 + $0x18] sm:$0xff]
    %v1923 = vld [vmem:[#allocation8 + $0x20] sm:$0xff]
    %v1924 = vld [vmem:[#allocation8 + $0x28] sm:$0xff]
    %v1925 = vld [vmem:[#allocation8 + $0x30] sm:$0xff]
    %v1926 = vld [vmem:[#allocation8 + $0x38] sm:$0xff]
    %v1927 = vld [vmem:[#allocation8 + $0x40] sm:$0xff]
    %v1928 = vld [vmem:[#allocation8 + $0x48] sm:$0xff]
    %v1929 = vld [vmem:[#allocation8 + $0x50] sm:$0xff]
    %v1930 = vld [vmem:[#allocation8 + $0x58] sm:$0xff]
    %v1931 = vld [vmem:[#allocation8 + $0x60] sm:$0xff]
    %v1932 = vld [vmem:[#allocation8 + $0x68] sm:$0xff]
    %v1933 = vld [vmem:[#allocation8 + $0x70] sm:$0xff]
    %v1934 = vld [vmem:[#allocation8 + $0x78] sm:$0xff]
    %v1935 = vld [vmem:[#allocation8 + $0x80] sm:$0xff]
    %v1936 = vld [vmem:[#allocation8 + $0x88] sm:$0xff]
    %v1937 = vld [vmem:[#allocation8 + $0x90] sm:$0xff]
    %v1938 = vld [vmem:[#allocation8 + $0x98] sm:$0xff]
    %v1939 = vld [vmem:[#allocation8 + $0xa0] sm:$0xff]
    %v1940 = vld [vmem:[#allocation8 + $0xa8] sm:$0xff]
    %v1941 = vld [vmem:[#allocation8 + $0xb0] sm:$0xff]
    %v1942 = vld [vmem:[#allocation8 + $0xb8] sm:$0xff]
    %v1943 = vld [vmem:[#allocation8 + $0xc0] sm:$0xff]
    %v1944 = vld [vmem:[#allocation8 + $0xc8] sm:$0xff]
    %v1945 = vld [vmem:[#allocation8 + $0xd0] sm:$0xff]
    %v1946 = vld [vmem:[#allocation8 + $0xd8] sm:$0xff]
    %v1947 = vld [vmem:[#allocation8 + $0xe0] sm:$0xff]
    %v1948 = vld [vmem:[#allocation8 + $0xe8] sm:$0xff]
    %v1949 = vld [vmem:[#allocation8 + $0xf0] sm:$0xff]
    %v1950 = vld [vmem:[#allocation8 + $0xf8] sm:$0xff]
    %v1951 = vld [vmem:[#allocation8 + $0x100] sm:$0xff]
    %v1952 = vld [vmem:[#allocation8 + $0x108] sm:$0xff]
    %v1953 = vld [vmem:[#allocation8 + $0x110] sm:$0xff]
    %v1954 = vld [vmem:[#allocation8 + $0x118] sm:$0xff]
    %v1955 = vld [vmem:[#allocation8 + $0x120] sm:$0xff]
    %v1956 = vld [vmem:[#allocation8 + $0x128] sm:$0xff]
    %v1957 = vld [vmem:[#allocation8 + $0x130] sm:$0xff]
    %v1958 = vld [vmem:[#allocation8 + $0x138] sm:$0xff]
    %v1959 = vld [vmem:[#allocation8 + $0x140] sm:$0xff]
    %v1960 = vld [vmem:[#allocation8 + $0x148] sm:$0xff]
    %v1961 = vld [vmem:[#allocation8 + $0x150] sm:$0xff]
    %v1962 = vld [vmem:[#allocation8 + $0x158] sm:$0xff]
    %v1963 = vld [vmem:[#allocation8 + $0x160] sm:$0xff]
    %v1964 = vld [vmem:[#allocation8 + $0x168] sm:$0xff]
    %v1965 = vld [vmem:[#allocation8 + $0x170] sm:$0xff]
    %v1966 = vld [vmem:[#allocation8 + $0x178] sm:$0xff]
    %v1967 = vld [vmem:[#allocation8 + $0x180] sm:$0xff]
    %v1968 = vld [vmem:[#allocation8 + $0x188] sm:$0xff]
    %v1969 = vld [vmem:[#allocation8 + $0x190] sm:$0xff]
    %v1970 = vld [vmem:[#allocation8 + $0x198] sm:$0xff]
    %v1971 = vld [vmem:[#allocation8 + $0x1a0] sm:$0xff]
    %v1972 = vld [vmem:[#allocation8 + $0x1a8] sm:$0xff]
    %v1973 = vld [vmem:[#allocation8 + $0x1b0] sm:$0xff]
    %v1974 = vld [vmem:[#allocation8 + $0x1b8] sm:$0xff]
    %v1975 = vld [vmem:[#allocation8 + $0x1c0] sm:$0xff]
    %v1976 = vld [vmem:[#allocation8 + $0x1c8] sm:$0xff]
    %v1977 = vld [vmem:[#allocation8 + $0x1d0] sm:$0xff]
    %v1978 = vld [vmem:[#allocation8 + $0x1d8] sm:$0xff]
    %v1979 = vld [vmem:[#allocation8 + $0x1e0] sm:$0xff]
    %v1980 = vld [vmem:[#allocation8 + $0x1e8] sm:$0xff]
    %v1981 = vld [vmem:[#allocation8 + $0x1f0] sm:$0xff]
    %v1982 = vld [vmem:[#allocation8 + $0x1f8] sm:$0xff]
    %v1983 = vld [vmem:[#allocation8 + $0x200] sm:$0xff]
    %v1984 = vld [vmem:[#allocation8 + $0x208] sm:$0xff]
    %v1985 = vld [vmem:[#allocation8 + $0x210] sm:$0xff]
    %v1986 = vld [vmem:[#allocation8 + $0x218] sm:$0xff]
    %v1987 = vld [vmem:[#allocation8 + $0x220] sm:$0xff]
    %v1988 = vld [vmem:[#allocation8 + $0x228] sm:$0xff]
    %v1989 = vld [vmem:[#allocation8 + $0x230] sm:$0xff]
    %v1990 = vld [vmem:[#allocation8 + $0x238] sm:$0xff]
    %v1991 = vld [vmem:[#allocation8 + $0x240] sm:$0xff]
    %v1992 = vld [vmem:[#allocation8 + $0x248] sm:$0xff]
    %v1993 = vld [vmem:[#allocation8 + $0x250] sm:$0xff]
    %v1994 = vld [vmem:[#allocation8 + $0x258] sm:$0xff]
    %v1995 = vld [vmem:[#allocation8 + $0x260] sm:$0xff]
    %v1996 = vld [vmem:[#allocation8 + $0x268] sm:$0xff]
    %v1997 = vld [vmem:[#allocation8 + $0x270] sm:$0xff]
    %v1998 = vld [vmem:[#allocation8 + $0x278] sm:$0xff]
    %v1999 = vld [vmem:[#allocation8 + $0x280] sm:$0xff]
    %v2000 = vld [vmem:[#allocation8 + $0x288] sm:$0xff]
    %v2001 = vld [vmem:[#allocation8 + $0x290] sm:$0xff]
    %v2002 = vld [vmem:[#allocation8 + $0x298] sm:$0xff]
    %v2003 = vld [vmem:[#allocation8 + $0x2a0] sm:$0xff]
    %v2004 = vld [vmem:[#allocation8 + $0x2a8] sm:$0xff]
    %v2005 = vld [vmem:[#allocation8 + $0x2b0] sm:$0xff]
    %v2006 = vld [vmem:[#allocation8 + $0x2b8] sm:$0xff]
    %v2007 = vld [vmem:[#allocation8 + $0x2c0] sm:$0xff]
    %v2008 = vld [vmem:[#allocation8 + $0x2c8] sm:$0xff]
    %v2009 = vld [vmem:[#allocation8 + $0x2d0] sm:$0xff]
    %v2010 = vld [vmem:[#allocation8 + $0x2d8] sm:$0xff]
    %v2011 = vld [vmem:[#allocation8 + $0x2e0] sm:$0xff]
    %v2012 = vld [vmem:[#allocation8 + $0x2e8] sm:$0xff]
    %v2013 = vld [vmem:[#allocation8 + $0x2f0] sm:$0xff]
    %v2014 = vld [vmem:[#allocation8 + $0x2f8] sm:$0xff]
    %v2015 = vld [vmem:[#allocation8 + $0x300] sm:$0xff]
    %v2016 = vld [vmem:[#allocation8 + $0x308] sm:$0xff]
    %v2017 = vld [vmem:[#allocation8 + $0x310] sm:$0xff]
    %v2018 = vld [vmem:[#allocation8 + $0x318] sm:$0xff]
    %v2019 = vld [vmem:[#allocation8 + $0x320] sm:$0xff]
    %v2020 = vld [vmem:[#allocation8 + $0x328] sm:$0xff]
    %v2021 = vld [vmem:[#allocation8 + $0x330] sm:$0xff]
    %v2022 = vld [vmem:[#allocation8 + $0x338] sm:$0xff]
    %v2023 = vld [vmem:[#allocation8 + $0x340] sm:$0xff]
    %v2024 = vld [vmem:[#allocation8 + $0x348] sm:$0xff]
    %v2025 = vld [vmem:[#allocation8 + $0x350] sm:$0xff]
    %v2026 = vld [vmem:[#allocation8 + $0x358] sm:$0xff]
    %v2027 = vld [vmem:[#allocation8 + $0x360] sm:$0xff]
    %v2028 = vld [vmem:[#allocation8 + $0x368] sm:$0xff]
    %v2029 = vld [vmem:[#allocation8 + $0x370] sm:$0xff]
    %v2030 = vld [vmem:[#allocation8 + $0x378] sm:$0xff]
    %v2031 = vld [vmem:[#allocation8 + $0x380] sm:$0xff]
    %v2032 = vld [vmem:[#allocation8 + $0x388] sm:$0xff]
    %v2033 = vld [vmem:[#allocation8 + $0x390] sm:$0xff]
    %v2034 = vld [vmem:[#allocation8 + $0x398] sm:$0xff]
    %v2035 = vld [vmem:[#allocation8 + $0x3a0] sm:$0xff]
    %v2036 = vld [vmem:[#allocation8 + $0x3a8] sm:$0xff]
    %v2037 = vld [vmem:[#allocation8 + $0x3b0] sm:$0xff]
    %v2038 = vld [vmem:[#allocation8 + $0x3b8] sm:$0xff]
    %v2039 = vld [vmem:[#allocation8 + $0x3c0] sm:$0xff]
    %v2040 = vld [vmem:[#allocation8 + $0x3c8] sm:$0xff]
    %v2041 = vld [vmem:[#allocation8 + $0x3d0] sm:$0xff]
    %v2042 = vld [vmem:[#allocation8 + $0x3d8] sm:$0xff]
    %v2043 = vld [vmem:[#allocation8 + $0x3e0] sm:$0xff]
    %v2044 = vld [vmem:[#allocation8 + $0x3e8] sm:$0xff]
    %v2045 = vld [vmem:[#allocation8 + $0x3f0] sm:$0xff]
    %v2046 = vld [vmem:[#allocation8 + $0x3f8] sm:$0xff]
    %v2047 = vld [vmem:[#allocation10] sm:$0xf]
    %v2049 = vperm.slane %v2047, 0
    %v2050 = vperm.slane %v2047, 1
    %v2051 = vperm.slane %v2047, 2
    %v2052 = vperm.slane %v2047, 3
    %v2185 = vunpack.c.l.b16 %v1919
    %v2186 = vunpack.c.h.b16 %v1919
    %v2187 = vunpack.c.l.b16 %v1920
    %v2188 = vunpack.c.h.b16 %v1920
    %v2189 = vunpack.c.l.b16 %v1921
    %v2190 = vunpack.c.h.b16 %v1921
    %v2191 = vunpack.c.l.b16 %v1922
    %v2192 = vunpack.c.h.b16 %v1922
    %v2193 = vunpack.c.l.b16 %v1923
    %v2194 = vunpack.c.h.b16 %v1923
    %v2195 = vunpack.c.l.b16 %v1924
    %v2196 = vunpack.c.h.b16 %v1924
    %v2197 = vunpack.c.l.b16 %v1925
    %v2198 = vunpack.c.h.b16 %v1925
    %v2199 = vunpack.c.l.b16 %v1926
    %v2200 = vunpack.c.h.b16 %v1926
    %v2201 = vunpack.c.l.b16 %v1927
    %v2202 = vunpack.c.h.b16 %v1927
    %v2203 = vunpack.c.l.b16 %v1928
    %v2204 = vunpack.c.h.b16 %v1928
    %v2205 = vunpack.c.l.b16 %v1929
    %v2206 = vunpack.c.h.b16 %v1929
    %v2207 = vunpack.c.l.b16 %v1930
    %v2208 = vunpack.c.h.b16 %v1930
    %v2209 = vunpack.c.l.b16 %v1931
    %v2210 = vunpack.c.h.b16 %v1931
    %v2211 = vunpack.c.l.b16 %v1932
    %v2212 = vunpack.c.h.b16 %v1932
    %v2213 = vunpack.c.l.b16 %v1933
    %v2214 = vunpack.c.h.b16 %v1933
    %v2215 = vunpack.c.l.b16 %v1934
    %v2216 = vunpack.c.h.b16 %v1934
    %v2217 = vunpack.c.l.b16 %v1935
    %v2218 = vunpack.c.h.b16 %v1935
    %v2219 = vunpack.c.l.b16 %v1936
    %v2220 = vunpack.c.h.b16 %v1936
    %v2221 = vunpack.c.l.b16 %v1937
    %v2222 = vunpack.c.h.b16 %v1937
    %v2223 = vunpack.c.l.b16 %v1938
    %v2224 = vunpack.c.h.b16 %v1938
    %v2225 = vunpack.c.l.b16 %v1939
    %v2226 = vunpack.c.h.b16 %v1939
    %v2227 = vunpack.c.l.b16 %v1940
    %v2228 = vunpack.c.h.b16 %v1940
    %v2229 = vunpack.c.l.b16 %v1941
    %v2230 = vunpack.c.h.b16 %v1941
    %v2231 = vunpack.c.l.b16 %v1942
    %v2232 = vunpack.c.h.b16 %v1942
    %v2233 = vunpack.c.l.b16 %v1943
    %v2234 = vunpack.c.h.b16 %v1943
    %v2235 = vunpack.c.l.b16 %v1944
    %v2236 = vunpack.c.h.b16 %v1944
    %v2237 = vunpack.c.l.b16 %v1945
    %v2238 = vunpack.c.h.b16 %v1945
    %v2239 = vunpack.c.l.b16 %v1946
    %v2240 = vunpack.c.h.b16 %v1946
    %v2241 = vunpack.c.l.b16 %v1947
    %v2242 = vunpack.c.h.b16 %v1947
    %v2243 = vunpack.c.l.b16 %v1948
    %v2244 = vunpack.c.h.b16 %v1948
    %v2245 = vunpack.c.l.b16 %v1949
    %v2246 = vunpack.c.h.b16 %v1949
    %v2247 = vunpack.c.l.b16 %v1950
    %v2248 = vunpack.c.h.b16 %v1950
    %v2249 = vunpack.c.l.b16 %v1951
    %v2250 = vunpack.c.h.b16 %v1951
    %v2251 = vunpack.c.l.b16 %v1952
    %v2252 = vunpack.c.h.b16 %v1952
    %v2253 = vunpack.c.l.b16 %v1953
    %v2254 = vunpack.c.h.b16 %v1953
    %v2255 = vunpack.c.l.b16 %v1954
    %v2256 = vunpack.c.h.b16 %v1954
    %v2257 = vunpack.c.l.b16 %v1955
    %v2258 = vunpack.c.h.b16 %v1955
    %v2259 = vunpack.c.l.b16 %v1956
    %v2260 = vunpack.c.h.b16 %v1956
    %v2261 = vunpack.c.l.b16 %v1957
    %v2262 = vunpack.c.h.b16 %v1957
    %v2263 = vunpack.c.l.b16 %v1958
    %v2264 = vunpack.c.h.b16 %v1958
    %v2265 = vunpack.c.l.b16 %v1959
    %v2266 = vunpack.c.h.b16 %v1959
    %v2267 = vunpack.c.l.b16 %v1960
    %v2268 = vunpack.c.h.b16 %v1960
    %v2269 = vunpack.c.l.b16 %v1961
    %v2270 = vunpack.c.h.b16 %v1961
    %v2271 = vunpack.c.l.b16 %v1962
    %v2272 = vunpack.c.h.b16 %v1962
    %v2273 = vunpack.c.l.b16 %v1963
    %v2274 = vunpack.c.h.b16 %v1963
    %v2275 = vunpack.c.l.b16 %v1964
    %v2276 = vunpack.c.h.b16 %v1964
    %v2277 = vunpack.c.l.b16 %v1965
    %v2278 = vunpack.c.h.b16 %v1965
    %v2279 = vunpack.c.l.b16 %v1966
    %v2280 = vunpack.c.h.b16 %v1966
    %v2281 = vunpack.c.l.b16 %v1967
    %v2282 = vunpack.c.h.b16 %v1967
    %v2283 = vunpack.c.l.b16 %v1968
    %v2284 = vunpack.c.h.b16 %v1968
    %v2285 = vunpack.c.l.b16 %v1969
    %v2286 = vunpack.c.h.b16 %v1969
    %v2287 = vunpack.c.l.b16 %v1970
    %v2288 = vunpack.c.h.b16 %v1970
    %v2289 = vunpack.c.l.b16 %v1971
    %v2290 = vunpack.c.h.b16 %v1971
    %v2291 = vunpack.c.l.b16 %v1972
    %v2292 = vunpack.c.h.b16 %v1972
    %v2293 = vunpack.c.l.b16 %v1973
    %v2294 = vunpack.c.h.b16 %v1973
    %v2295 = vunpack.c.l.b16 %v1974
    %v2296 = vunpack.c.h.b16 %v1974
    %v2297 = vunpack.c.l.b16 %v1975
    %v2298 = vunpack.c.h.b16 %v1975
    %v2299 = vunpack.c.l.b16 %v1976
    %v2300 = vunpack.c.h.b16 %v1976
    %v2301 = vunpack.c.l.b16 %v1977
    %v2302 = vunpack.c.h.b16 %v1977
    %v2303 = vunpack.c.l.b16 %v1978
    %v2304 = vunpack.c.h.b16 %v1978
    %v2305 = vunpack.c.l.b16 %v1979
    %v2306 = vunpack.c.h.b16 %v1979
    %v2307 = vunpack.c.l.b16 %v1980
    %v2308 = vunpack.c.h.b16 %v1980
    %v2309 = vunpack.c.l.b16 %v1981
    %v2310 = vunpack.c.h.b16 %v1981
    %v2311 = vunpack.c.l.b16 %v1982
    %v2312 = vunpack.c.h.b16 %v1982
    %v2313 = vunpack.c.l.b16 %v1983
    %v2314 = vunpack.c.h.b16 %v1983
    %v2315 = vunpack.c.l.b16 %v1984
    %v2316 = vunpack.c.h.b16 %v1984
    %v2317 = vunpack.c.l.b16 %v1985
    %v2318 = vunpack.c.h.b16 %v1985
    %v2319 = vunpack.c.l.b16 %v1986
    %v2320 = vunpack.c.h.b16 %v1986
    %v2321 = vunpack.c.l.b16 %v1987
    %v2322 = vunpack.c.h.b16 %v1987
    %v2323 = vunpack.c.l.b16 %v1988
    %v2324 = vunpack.c.h.b16 %v1988
    %v2325 = vunpack.c.l.b16 %v1989
    %v2326 = vunpack.c.h.b16 %v1989
    %v2327 = vunpack.c.l.b16 %v1990
    %v2328 = vunpack.c.h.b16 %v1990
    %v2329 = vunpack.c.l.b16 %v1991
    %v2330 = vunpack.c.h.b16 %v1991
    %v2331 = vunpack.c.l.b16 %v1992
    %v2332 = vunpack.c.h.b16 %v1992
    %v2333 = vunpack.c.l.b16 %v1993
    %v2334 = vunpack.c.h.b16 %v1993
    %v2335 = vunpack.c.l.b16 %v1994
    %v2336 = vunpack.c.h.b16 %v1994
    %v2337 = vunpack.c.l.b16 %v1995
    %v2338 = vunpack.c.h.b16 %v1995
    %v2339 = vunpack.c.l.b16 %v1996
    %v2340 = vunpack.c.h.b16 %v1996
    %v2341 = vunpack.c.l.b16 %v1997
    %v2342 = vunpack.c.h.b16 %v1997
    %v2343 = vunpack.c.l.b16 %v1998
    %v2344 = vunpack.c.h.b16 %v1998
    %v2345 = vunpack.c.l.b16 %v1999
    %v2346 = vunpack.c.h.b16 %v1999
    %v2347 = vunpack.c.l.b16 %v2000
    %v2348 = vunpack.c.h.b16 %v2000
    %v2349 = vunpack.c.l.b16 %v2001
    %v2350 = vunpack.c.h.b16 %v2001
    %v2351 = vunpack.c.l.b16 %v2002
    %v2352 = vunpack.c.h.b16 %v2002
    %v2353 = vunpack.c.l.b16 %v2003
    %v2354 = vunpack.c.h.b16 %v2003
    %v2355 = vunpack.c.l.b16 %v2004
    %v2356 = vunpack.c.h.b16 %v2004
    %v2357 = vunpack.c.l.b16 %v2005
    %v2358 = vunpack.c.h.b16 %v2005
    %v2359 = vunpack.c.l.b16 %v2006
    %v2360 = vunpack.c.h.b16 %v2006
    %v2361 = vunpack.c.l.b16 %v2007
    %v2362 = vunpack.c.h.b16 %v2007
    %v2363 = vunpack.c.l.b16 %v2008
    %v2364 = vunpack.c.h.b16 %v2008
    %v2365 = vunpack.c.l.b16 %v2009
    %v2366 = vunpack.c.h.b16 %v2009
    %v2367 = vunpack.c.l.b16 %v2010
    %v2368 = vunpack.c.h.b16 %v2010
    %v2369 = vunpack.c.l.b16 %v2011
    %v2370 = vunpack.c.h.b16 %v2011
    %v2371 = vunpack.c.l.b16 %v2012
    %v2372 = vunpack.c.h.b16 %v2012
    %v2373 = vunpack.c.l.b16 %v2013
    %v2374 = vunpack.c.h.b16 %v2013
    %v2375 = vunpack.c.l.b16 %v2014
    %v2376 = vunpack.c.h.b16 %v2014
    %v2377 = vunpack.c.l.b16 %v2015
    %v2378 = vunpack.c.h.b16 %v2015
    %v2379 = vunpack.c.l.b16 %v2016
    %v2380 = vunpack.c.h.b16 %v2016
    %v2381 = vunpack.c.l.b16 %v2017
    %v2382 = vunpack.c.h.b16 %v2017
    %v2383 = vunpack.c.l.b16 %v2018
    %v2384 = vunpack.c.h.b16 %v2018
    %v2385 = vunpack.c.l.b16 %v2019
    %v2386 = vunpack.c.h.b16 %v2019
    %v2387 = vunpack.c.l.b16 %v2020
    %v2388 = vunpack.c.h.b16 %v2020
    %v2389 = vunpack.c.l.b16 %v2021
    %v2390 = vunpack.c.h.b16 %v2021
    %v2391 = vunpack.c.l.b16 %v2022
    %v2392 = vunpack.c.h.b16 %v2022
    %v2393 = vunpack.c.l.b16 %v2023
    %v2394 = vunpack.c.h.b16 %v2023
    %v2395 = vunpack.c.l.b16 %v2024
    %v2396 = vunpack.c.h.b16 %v2024
    %v2397 = vunpack.c.l.b16 %v2025
    %v2398 = vunpack.c.h.b16 %v2025
    %v2399 = vunpack.c.l.b16 %v2026
    %v2400 = vunpack.c.h.b16 %v2026
    %v2401 = vunpack.c.l.b16 %v2027
    %v2402 = vunpack.c.h.b16 %v2027
    %v2403 = vunpack.c.l.b16 %v2028
    %v2404 = vunpack.c.h.b16 %v2028
    %v2405 = vunpack.c.l.b16 %v2029
    %v2406 = vunpack.c.h.b16 %v2029
    %v2407 = vunpack.c.l.b16 %v2030
    %v2408 = vunpack.c.h.b16 %v2030
    %v2409 = vunpack.c.l.b16 %v2031
    %v2410 = vunpack.c.h.b16 %v2031
    %v2411 = vunpack.c.l.b16 %v2032
    %v2412 = vunpack.c.h.b16 %v2032
    %v2413 = vunpack.c.l.b16 %v2033
    %v2414 = vunpack.c.h.b16 %v2033
    %v2415 = vunpack.c.l.b16 %v2034
    %v2416 = vunpack.c.h.b16 %v2034
    %v2417 = vunpack.c.l.b16 %v2035
    %v2418 = vunpack.c.h.b16 %v2035
    %v2419 = vunpack.c.l.b16 %v2036
    %v2420 = vunpack.c.h.b16 %v2036
    %v2421 = vunpack.c.l.b16 %v2037
    %v2422 = vunpack.c.h.b16 %v2037
    %v2423 = vunpack.c.l.b16 %v2038
    %v2424 = vunpack.c.h.b16 %v2038
    %v2425 = vunpack.c.l.b16 %v2039
    %v2426 = vunpack.c.h.b16 %v2039
    %v2427 = vunpack.c.l.b16 %v2040
    %v2428 = vunpack.c.h.b16 %v2040
    %v2429 = vunpack.c.l.b16 %v2041
    %v2430 = vunpack.c.h.b16 %v2041
    %v2431 = vunpack.c.l.b16 %v2042
    %v2432 = vunpack.c.h.b16 %v2042
    %v2433 = vunpack.c.l.b16 %v2043
    %v2434 = vunpack.c.h.b16 %v2043
    %v2435 = vunpack.c.l.b16 %v2044
    %v2436 = vunpack.c.h.b16 %v2044
    %v2437 = vunpack.c.l.b16 %v2045
    %v2438 = vunpack.c.h.b16 %v2045
    %v2439 = vunpack.c.l.b16 %v2046
    %v2440 = vunpack.c.h.b16 %v2046
    %v2441 = vpack.c.b16 %v2189, %v2185
    %v2442 = vpack.c.b16 %v2190, %v2186
    %v2443 = vpack.c.b16 %v2191, %v2187
    %v2444 = vpack.c.b16 %v2192, %v2188
    %v2445 = vpack.c.b16 %v2197, %v2193
    %v2446 = vpack.c.b16 %v2198, %v2194
    %v2447 = vpack.c.b16 %v2199, %v2195
    %v2448 = vpack.c.b16 %v2200, %v2196
    %v2449 = vpack.c.b16 %v2205, %v2201
    %v2450 = vpack.c.b16 %v2206, %v2202
    %v2451 = vpack.c.b16 %v2207, %v2203
    %v2452 = vpack.c.b16 %v2208, %v2204
    %v2453 = vpack.c.b16 %v2213, %v2209
    %v2454 = vpack.c.b16 %v2214, %v2210
    %v2455 = vpack.c.b16 %v2215, %v2211
    %v2456 = vpack.c.b16 %v2216, %v2212
    %v2457 = vpack.c.b16 %v2221, %v2217
    %v2458 = vpack.c.b16 %v2222, %v2218
    %v2459 = vpack.c.b16 %v2223, %v2219
    %v2460 = vpack.c.b16 %v2224, %v2220
    %v2461 = vpack.c.b16 %v2229, %v2225
    %v2462 = vpack.c.b16 %v2230, %v2226
    %v2463 = vpack.c.b16 %v2231, %v2227
    %v2464 = vpack.c.b16 %v2232, %v2228
    %v2465 = vpack.c.b16 %v2237, %v2233
    %v2466 = vpack.c.b16 %v2238, %v2234
    %v2467 = vpack.c.b16 %v2239, %v2235
    %v2468 = vpack.c.b16 %v2240, %v2236
    %v2469 = vpack.c.b16 %v2245, %v2241
    %v2470 = vpack.c.b16 %v2246, %v2242
    %v2471 = vpack.c.b16 %v2247, %v2243
    %v2472 = vpack.c.b16 %v2248, %v2244
    %v2473 = vpack.c.b16 %v2253, %v2249
    %v2474 = vpack.c.b16 %v2254, %v2250
    %v2475 = vpack.c.b16 %v2255, %v2251
    %v2476 = vpack.c.b16 %v2256, %v2252
    %v2477 = vpack.c.b16 %v2261, %v2257
    %v2478 = vpack.c.b16 %v2262, %v2258
    %v2479 = vpack.c.b16 %v2263, %v2259
    %v2480 = vpack.c.b16 %v2264, %v2260
    %v2481 = vpack.c.b16 %v2269, %v2265
    %v2482 = vpack.c.b16 %v2270, %v2266
    %v2483 = vpack.c.b16 %v2271, %v2267
    %v2484 = vpack.c.b16 %v2272, %v2268
    %v2485 = vpack.c.b16 %v2277, %v2273
    %v2486 = vpack.c.b16 %v2278, %v2274
    %v2487 = vpack.c.b16 %v2279, %v2275
    %v2488 = vpack.c.b16 %v2280, %v2276
    %v2489 = vpack.c.b16 %v2285, %v2281
    %v2490 = vpack.c.b16 %v2286, %v2282
    %v2491 = vpack.c.b16 %v2287, %v2283
    %v2492 = vpack.c.b16 %v2288, %v2284
    %v2493 = vpack.c.b16 %v2293, %v2289
    %v2494 = vpack.c.b16 %v2294, %v2290
    %v2495 = vpack.c.b16 %v2295, %v2291
    %v2496 = vpack.c.b16 %v2296, %v2292
    %v2497 = vpack.c.b16 %v2301, %v2297
    %v2498 = vpack.c.b16 %v2302, %v2298
    %v2499 = vpack.c.b16 %v2303, %v2299
    %v2500 = vpack.c.b16 %v2304, %v2300
    %v2501 = vpack.c.b16 %v2309, %v2305
    %v2502 = vpack.c.b16 %v2310, %v2306
    %v2503 = vpack.c.b16 %v2311, %v2307
    %v2504 = vpack.c.b16 %v2312, %v2308
    %v2505 = vpack.c.b16 %v2317, %v2313
    %v2506 = vpack.c.b16 %v2318, %v2314
    %v2507 = vpack.c.b16 %v2319, %v2315
    %v2508 = vpack.c.b16 %v2320, %v2316
    %v2509 = vpack.c.b16 %v2325, %v2321
    %v2510 = vpack.c.b16 %v2326, %v2322
    %v2511 = vpack.c.b16 %v2327, %v2323
    %v2512 = vpack.c.b16 %v2328, %v2324
    %v2513 = vpack.c.b16 %v2333, %v2329
    %v2514 = vpack.c.b16 %v2334, %v2330
    %v2515 = vpack.c.b16 %v2335, %v2331
    %v2516 = vpack.c.b16 %v2336, %v2332
    %v2517 = vpack.c.b16 %v2341, %v2337
    %v2518 = vpack.c.b16 %v2342, %v2338
    %v2519 = vpack.c.b16 %v2343, %v2339
    %v2520 = vpack.c.b16 %v2344, %v2340
    %v2521 = vpack.c.b16 %v2349, %v2345
    %v2522 = vpack.c.b16 %v2350, %v2346
    %v2523 = vpack.c.b16 %v2351, %v2347
    %v2524 = vpack.c.b16 %v2352, %v2348
    %v2525 = vpack.c.b16 %v2357, %v2353
    %v2526 = vpack.c.b16 %v2358, %v2354
    %v2527 = vpack.c.b16 %v2359, %v2355
    %v2528 = vpack.c.b16 %v2360, %v2356
    %v2529 = vpack.c.b16 %v2365, %v2361
    %v2530 = vpack.c.b16 %v2366, %v2362
    %v2531 = vpack.c.b16 %v2367, %v2363
    %v2532 = vpack.c.b16 %v2368, %v2364
    %v2533 = vpack.c.b16 %v2373, %v2369
    %v2534 = vpack.c.b16 %v2374, %v2370
    %v2535 = vpack.c.b16 %v2375, %v2371
    %v2536 = vpack.c.b16 %v2376, %v2372
    %v2537 = vpack.c.b16 %v2381, %v2377
    %v2538 = vpack.c.b16 %v2382, %v2378
    %v2539 = vpack.c.b16 %v2383, %v2379
    %v2540 = vpack.c.b16 %v2384, %v2380
    %v2541 = vpack.c.b16 %v2389, %v2385
    %v2542 = vpack.c.b16 %v2390, %v2386
    %v2543 = vpack.c.b16 %v2391, %v2387
    %v2544 = vpack.c.b16 %v2392, %v2388
    %v2545 = vpack.c.b16 %v2397, %v2393
    %v2546 = vpack.c.b16 %v2398, %v2394
    %v2547 = vpack.c.b16 %v2399, %v2395
    %v2548 = vpack.c.b16 %v2400, %v2396
    %v2549 = vpack.c.b16 %v2405, %v2401
    %v2550 = vpack.c.b16 %v2406, %v2402
    %v2551 = vpack.c.b16 %v2407, %v2403
    %v2552 = vpack.c.b16 %v2408, %v2404
    %v2553 = vpack.c.b16 %v2413, %v2409
    %v2554 = vpack.c.b16 %v2414, %v2410
    %v2555 = vpack.c.b16 %v2415, %v2411
    %v2556 = vpack.c.b16 %v2416, %v2412
    %v2557 = vpack.c.b16 %v2421, %v2417
    %v2558 = vpack.c.b16 %v2422, %v2418
    %v2559 = vpack.c.b16 %v2423, %v2419
    %v2560 = vpack.c.b16 %v2424, %v2420
    %v2561 = vpack.c.b16 %v2429, %v2425
    %v2562 = vpack.c.b16 %v2430, %v2426
    %v2563 = vpack.c.b16 %v2431, %v2427
    %v2564 = vpack.c.b16 %v2432, %v2428
    %v2565 = vpack.c.b16 %v2437, %v2433
    %v2566 = vpack.c.b16 %v2438, %v2434
    %v2567 = vpack.c.b16 %v2439, %v2435
    %v2568 = vpack.c.b16 %v2440, %v2436
    %2697 = vmatpush.bf16.msra.mxu0 %v2469
    %2698 = vmatpush.bf16.msra.mxu0 %v2465
    %2699 = vmatpush.bf16.msra.mxu0 %v2461
    %2700 = vmatpush.bf16.msra.mxu0 %v2457
    %2701 = vmatpush.bf16.msra.mxu0 %v2453
    %2702 = vmatpush.bf16.msra.mxu0 %v2449
    %2703 = vmatpush.bf16.msra.mxu0 %v2445
    %2704 = vmatpush.bf16.msra.mxu0 %v2441
    %2705 = vmatmul.bf16.gmra.mxu0 %v1915
    %v2706 = vpop.f32.mrf.mxu0
    %v2707 = vadd.f32 %v2049, %v2706
    %v2708 = vpop.f32.mrf.mxu0
    %v2709 = vadd.f32 %v2049, %v2708
    %2710 = vdwg.mxu0
    %2711 = vmatpush.bf16.msra.mxu0 %v2501
    %2712 = vmatpush.bf16.msra.mxu0 %v2497
    %2713 = vmatpush.bf16.msra.mxu0 %v2493
    %2714 = vmatpush.bf16.msra.mxu0 %v2489
    %2715 = vmatpush.bf16.msra.mxu0 %v2485
    %2716 = vmatpush.bf16.msra.mxu0 %v2481
    %2717 = vmatpush.bf16.msra.mxu0 %v2477
    %2718 = vmatpush.bf16.msra.mxu0 %v2473
    %2719 = vmatmul.bf16.gmra.mxu0 %v1916
    %v2720 = vpop.f32.mrf.mxu0
    %v2721 = vadd.f32 %v2707, %v2720
    %v2722 = vpop.f32.mrf.mxu0
    %v2723 = vadd.f32 %v2709, %v2722
    %2724 = vdwg.mxu0
    %2725 = vmatpush.bf16.msra.mxu0 %v2533
    %2726 = vmatpush.bf16.msra.mxu0 %v2529
    %2727 = vmatpush.bf16.msra.mxu0 %v2525
    %2728 = vmatpush.bf16.msra.mxu0 %v2521
    %2729 = vmatpush.bf16.msra.mxu0 %v2517
    %2730 = vmatpush.bf16.msra.mxu0 %v2513
    %2731 = vmatpush.bf16.msra.mxu0 %v2509
    %2732 = vmatpush.bf16.msra.mxu0 %v2505
    %2733 = vmatmul.bf16.gmra.mxu0 %v1917
    %v2734 = vpop.f32.mrf.mxu0
    %v2735 = vadd.f32 %v2721, %v2734
    %v2736 = vpop.f32.mrf.mxu0
    %v2737 = vadd.f32 %v2723, %v2736
    %2738 = vdwg.mxu0
    %2739 = vmatpush.bf16.msra.mxu0 %v2565
    %2740 = vmatpush.bf16.msra.mxu0 %v2561
    %2741 = vmatpush.bf16.msra.mxu0 %v2557
    %2742 = vmatpush.bf16.msra.mxu0 %v2553
    %2743 = vmatpush.bf16.msra.mxu0 %v2549
    %2744 = vmatpush.bf16.msra.mxu0 %v2545
    %2745 = vmatpush.bf16.msra.mxu0 %v2541
    %2746 = vmatpush.bf16.msra.mxu0 %v2537
    %2747 = vmatmul.bf16.gmra.mxu0 %v1918
    %v2748 = vpop.f32.mrf.mxu0
    %v2749 = vadd.f32 %v2735, %v2748
    %v2750 = vpop.f32.mrf.mxu0
    %v2751 = vadd.f32 %v2737, %v2750
    %2752 = vdwg.mxu0
    %2753 = vmatpush.bf16.msra.mxu0 %v2470
    %2754 = vmatpush.bf16.msra.mxu0 %v2466
    %2755 = vmatpush.bf16.msra.mxu0 %v2462
    %2756 = vmatpush.bf16.msra.mxu0 %v2458
    %2757 = vmatpush.bf16.msra.mxu0 %v2454
    %2758 = vmatpush.bf16.msra.mxu0 %v2450
    %2759 = vmatpush.bf16.msra.mxu0 %v2446
    %2760 = vmatpush.bf16.msra.mxu0 %v2442
    %2761 = vmatmul.bf16.gmra.mxu0 %v1915
    %v2762 = vpop.f32.mrf.mxu0
    %v2763 = vadd.f32 %v2050, %v2762
    %v2764 = vpop.f32.mrf.mxu0
    %v2765 = vadd.f32 %v2050, %v2764
    %2766 = vdwg.mxu0
    %2767 = vmatpush.bf16.msra.mxu0 %v2502
    %2768 = vmatpush.bf16.msra.mxu0 %v2498
    %2769 = vmatpush.bf16.msra.mxu0 %v2494
    %2770 = vmatpush.bf16.msra.mxu0 %v2490
    %2771 = vmatpush.bf16.msra.mxu0 %v2486
    %2772 = vmatpush.bf16.msra.mxu0 %v2482
    %2773 = vmatpush.bf16.msra.mxu0 %v2478
    %2774 = vmatpush.bf16.msra.mxu0 %v2474
    %2775 = vmatmul.bf16.gmra.mxu0 %v1916
    %v2776 = vpop.f32.mrf.mxu0
    %v2777 = vadd.f32 %v2763, %v2776
    %v2778 = vpop.f32.mrf.mxu0
    %v2779 = vadd.f32 %v2765, %v2778
    %2780 = vdwg.mxu0
    %2781 = vmatpush.bf16.msra.mxu0 %v2534
    %2782 = vmatpush.bf16.msra.mxu0 %v2530
    %2783 = vmatpush.bf16.msra.mxu0 %v2526
    %2784 = vmatpush.bf16.msra.mxu0 %v2522
    %2785 = vmatpush.bf16.msra.mxu0 %v2518
    %2786 = vmatpush.bf16.msra.mxu0 %v2514
    %2787 = vmatpush.bf16.msra.mxu0 %v2510
    %2788 = vmatpush.bf16.msra.mxu0 %v2506
    %2789 = vmatmul.bf16.gmra.mxu0 %v1917
    %v2790 = vpop.f32.mrf.mxu0
    %v2791 = vadd.f32 %v2777, %v2790
    %v2792 = vpop.f32.mrf.mxu0
    %v2793 = vadd.f32 %v2779, %v2792
    %2794 = vdwg.mxu0
    %2795 = vmatpush.bf16.msra.mxu0 %v2566
    %2796 = vmatpush.bf16.msra.mxu0 %v2562
    %2797 = vmatpush.bf16.msra.mxu0 %v2558
    %2798 = vmatpush.bf16.msra.mxu0 %v2554
    %2799 = vmatpush.bf16.msra.mxu0 %v2550
    %2800 = vmatpush.bf16.msra.mxu0 %v2546
    %2801 = vmatpush.bf16.msra.mxu0 %v2542
    %2802 = vmatpush.bf16.msra.mxu0 %v2538
    %2803 = vmatmul.bf16.gmra.mxu0 %v1918
    %v2804 = vpop.f32.mrf.mxu0
    %v2805 = vadd.f32 %v2791, %v2804
    %v2806 = vpop.f32.mrf.mxu0
    %v2807 = vadd.f32 %v2793, %v2806
    %2808 = vdwg.mxu0
    %2809 = vmatpush.bf16.msra.mxu0 %v2471
    %2810 = vmatpush.bf16.msra.mxu0 %v2467
    %2811 = vmatpush.bf16.msra.mxu0 %v2463
    %2812 = vmatpush.bf16.msra.mxu0 %v2459
    %2813 = vmatpush.bf16.msra.mxu0 %v2455
    %2814 = vmatpush.bf16.msra.mxu0 %v2451
    %2815 = vmatpush.bf16.msra.mxu0 %v2447
    %2816 = vmatpush.bf16.msra.mxu0 %v2443
    %2817 = vmatmul.bf16.gmra.mxu0 %v1915
    %v2818 = vpop.f32.mrf.mxu0
    %v2819 = vadd.f32 %v2051, %v2818
    %v2820 = vpop.f32.mrf.mxu0
    %v2821 = vadd.f32 %v2051, %v2820
    %2822 = vdwg.mxu0
    %2823 = vmatpush.bf16.msra.mxu0 %v2503
    %2824 = vmatpush.bf16.msra.mxu0 %v2499
    %2825 = vmatpush.bf16.msra.mxu0 %v2495
    %2826 = vmatpush.bf16.msra.mxu0 %v2491
    %2827 = vmatpush.bf16.msra.mxu0 %v2487
    %2828 = vmatpush.bf16.msra.mxu0 %v2483
    %2829 = vmatpush.bf16.msra.mxu0 %v2479
    %2830 = vmatpush.bf16.msra.mxu0 %v2475
    %2831 = vmatmul.bf16.gmra.mxu0 %v1916
    %v2832 = vpop.f32.mrf.mxu0
    %v2833 = vadd.f32 %v2819, %v2832
    %v2834 = vpop.f32.mrf.mxu0
    %v2835 = vadd.f32 %v2821, %v2834
    %2836 = vdwg.mxu0
    %2837 = vmatpush.bf16.msra.mxu0 %v2535
    %2838 = vmatpush.bf16.msra.mxu0 %v2531
    %2839 = vmatpush.bf16.msra.mxu0 %v2527
    %2840 = vmatpush.bf16.msra.mxu0 %v2523
    %2841 = vmatpush.bf16.msra.mxu0 %v2519
    %2842 = vmatpush.bf16.msra.mxu0 %v2515
    %2843 = vmatpush.bf16.msra.mxu0 %v2511
    %2844 = vmatpush.bf16.msra.mxu0 %v2507
    %2845 = vmatmul.bf16.gmra.mxu0 %v1917
    %v2846 = vpop.f32.mrf.mxu0
    %v2847 = vadd.f32 %v2833, %v2846
    %v2848 = vpop.f32.mrf.mxu0
    %v2849 = vadd.f32 %v2835, %v2848
    %2850 = vdwg.mxu0
    %2851 = vmatpush.bf16.msra.mxu0 %v2567
    %2852 = vmatpush.bf16.msra.mxu0 %v2563
    %2853 = vmatpush.bf16.msra.mxu0 %v2559
    %2854 = vmatpush.bf16.msra.mxu0 %v2555
    %2855 = vmatpush.bf16.msra.mxu0 %v2551
    %2856 = vmatpush.bf16.msra.mxu0 %v2547
    %2857 = vmatpush.bf16.msra.mxu0 %v2543
    %2858 = vmatpush.bf16.msra.mxu0 %v2539
    %2859 = vmatmul.bf16.gmra.mxu0 %v1918
    %v2860 = vpop.f32.mrf.mxu0
    %v2861 = vadd.f32 %v2847, %v2860
    %v2862 = vpop.f32.mrf.mxu0
    %v2863 = vadd.f32 %v2849, %v2862
    %2864 = vdwg.mxu0
    %2865 = vmatpush.bf16.msra.mxu0 %v2472
    %2866 = vmatpush.bf16.msra.mxu0 %v2468
    %2867 = vmatpush.bf16.msra.mxu0 %v2464
    %2868 = vmatpush.bf16.msra.mxu0 %v2460
    %2869 = vmatpush.bf16.msra.mxu0 %v2456
    %2870 = vmatpush.bf16.msra.mxu0 %v2452
    %2871 = vmatpush.bf16.msra.mxu0 %v2448
    %2872 = vmatpush.bf16.msra.mxu0 %v2444
    %2873 = vmatmul.bf16.gmra.mxu0 %v1915
    %v2874 = vpop.f32.mrf.mxu0
    %v2875 = vadd.f32 %v2052, %v2874
    %v2876 = vpop.f32.mrf.mxu0
    %v2877 = vadd.f32 %v2052, %v2876
    %2878 = vdwg.mxu0
    %2879 = vmatpush.bf16.msra.mxu0 %v2504
    %2880 = vmatpush.bf16.msra.mxu0 %v2500
    %2881 = vmatpush.bf16.msra.mxu0 %v2496
    %2882 = vmatpush.bf16.msra.mxu0 %v2492
    %2883 = vmatpush.bf16.msra.mxu0 %v2488
    %2884 = vmatpush.bf16.msra.mxu0 %v2484
    %2885 = vmatpush.bf16.msra.mxu0 %v2480
    %2886 = vmatpush.bf16.msra.mxu0 %v2476
    %2887 = vmatmul.bf16.gmra.mxu0 %v1916
    %v2888 = vpop.f32.mrf.mxu0
    %v2889 = vadd.f32 %v2875, %v2888
    %v2890 = vpop.f32.mrf.mxu0
    %v2891 = vadd.f32 %v2877, %v2890
    %2892 = vdwg.mxu0
    %2893 = vmatpush.bf16.msra.mxu0 %v2536
    %2894 = vmatpush.bf16.msra.mxu0 %v2532
    %2895 = vmatpush.bf16.msra.mxu0 %v2528
    %2896 = vmatpush.bf16.msra.mxu0 %v2524
    %2897 = vmatpush.bf16.msra.mxu0 %v2520
    %2898 = vmatpush.bf16.msra.mxu0 %v2516
    %2899 = vmatpush.bf16.msra.mxu0 %v2512
    %2900 = vmatpush.bf16.msra.mxu0 %v2508
    %2901 = vmatmul.bf16.gmra.mxu0 %v1917
    %v2902 = vpop.f32.mrf.mxu0
    %v2903 = vadd.f32 %v2889, %v2902
    %v2904 = vpop.f32.mrf.mxu0
    %v2905 = vadd.f32 %v2891, %v2904
    %2906 = vdwg.mxu0
    %2907 = vmatpush.bf16.msra.mxu0 %v2568
    %2908 = vmatpush.bf16.msra.mxu0 %v2564
    %2909 = vmatpush.bf16.msra.mxu0 %v2560
    %2910 = vmatpush.bf16.msra.mxu0 %v2556
    %2911 = vmatpush.bf16.msra.mxu0 %v2552
    %2912 = vmatpush.bf16.msra.mxu0 %v2548
    %2913 = vmatpush.bf16.msra.mxu0 %v2544
    %2914 = vmatpush.bf16.msra.mxu0 %v2540
    %2915 = vmatmul.bf16.gmra.mxu0 %v1918
    %v2916 = vpop.f32.mrf.mxu0
    %v2917 = vadd.f32 %v2903, %v2916
    %v2918 = vpop.f32.mrf.mxu0
    %v2919 = vadd.f32 %v2905, %v2918
    %2920 = vdwg.mxu0
    %v2921 = vmax.f32 %v2749, 0.0
    %v2922 = vmax.f32 %v2805, 0.0
    %v2923 = vmax.f32 %v2861, 0.0
    %v2924 = vmax.f32 %v2917, 0.0
    %v2925 = vmax.f32 %v2751, 0.0
    %v2926 = vmax.f32 %v2807, 0.0
    %v2927 = vmax.f32 %v2863, 0.0
    %v2928 = vmax.f32 %v2919, 0.0
    %v2929 = vpack.c.bf16 %v2925, %v2921
    %v2930 = vpack.c.bf16 %v2926, %v2922
    %v2931 = vpack.c.bf16 %v2927, %v2923
    %v2932 = vpack.c.bf16 %v2928, %v2924
    %v2933 = vld [vmem:[#allocation11] sm:$0xf]
    %v2934 = vld [vmem:[#allocation11 + $0x4] sm:$0xf]
    %v2935 = vld [vmem:[#allocation11 + $0x8] sm:$0xf]
    %v2936 = vld [vmem:[#allocation11 + $0xc] sm:$0xf]
    %v2937 = vld [vmem:[#allocation11 + $0x10] sm:$0xf]
    %v2938 = vld [vmem:[#allocation11 + $0x14] sm:$0xf]
    %v2939 = vld [vmem:[#allocation11 + $0x18] sm:$0xf]
    %v2940 = vld [vmem:[#allocation11 + $0x1c] sm:$0xf]
    %v2941 = vld [vmem:[#allocation11 + $0x20] sm:$0xf]
    %v2942 = vld [vmem:[#allocation11 + $0x24] sm:$0xf]
    %v2943 = vld [vmem:[#allocation11 + $0x28] sm:$0xf]
    %v2944 = vld [vmem:[#allocation11 + $0x2c] sm:$0xf]
    %v2945 = vld [vmem:[#allocation11 + $0x30] sm:$0xf]
    %v2946 = vld [vmem:[#allocation11 + $0x34] sm:$0xf]
    %v2947 = vld [vmem:[#allocation11 + $0x38] sm:$0xf]
    %v2948 = vld [vmem:[#allocation11 + $0x3c] sm:$0xf]
    %v2949 = vld [vmem:[#allocation11 + $0x40] sm:$0xf]
    %v2950 = vld [vmem:[#allocation11 + $0x44] sm:$0xf]
    %v2951 = vld [vmem:[#allocation11 + $0x48] sm:$0xf]
    %v2952 = vld [vmem:[#allocation11 + $0x4c] sm:$0xf]
    %v2953 = vld [vmem:[#allocation11 + $0x50] sm:$0xf]
    %v2954 = vld [vmem:[#allocation11 + $0x54] sm:$0xf]
    %v2955 = vld [vmem:[#allocation11 + $0x58] sm:$0xf]
    %v2956 = vld [vmem:[#allocation11 + $0x5c] sm:$0xf]
    %v2957 = vld [vmem:[#allocation11 + $0x60] sm:$0xf]
    %v2958 = vld [vmem:[#allocation11 + $0x64] sm:$0xf]
    %v2959 = vld [vmem:[#allocation11 + $0x68] sm:$0xf]
    %v2960 = vld [vmem:[#allocation11 + $0x6c] sm:$0xf]
    %v2961 = vld [vmem:[#allocation11 + $0x70] sm:$0xf]
    %v2962 = vld [vmem:[#allocation11 + $0x74] sm:$0xf]
    %v2963 = vld [vmem:[#allocation11 + $0x78] sm:$0xf]
    %v2964 = vld [vmem:[#allocation11 + $0x7c] sm:$0xf]
    %v2965 = vld [vmem:[#allocation11 + $0x80] sm:$0xf]
    %v2966 = vld [vmem:[#allocation11 + $0x84] sm:$0xf]
    %v2967 = vld [vmem:[#allocation11 + $0x88] sm:$0xf]
    %v2968 = vld [vmem:[#allocation11 + $0x8c] sm:$0xf]
    %v2969 = vld [vmem:[#allocation11 + $0x90] sm:$0xf]
    %v2970 = vld [vmem:[#allocation11 + $0x94] sm:$0xf]
    %v2971 = vld [vmem:[#allocation11 + $0x98] sm:$0xf]
    %v2972 = vld [vmem:[#allocation11 + $0x9c] sm:$0xf]
    %v2973 = vld [vmem:[#allocation11 + $0xa0] sm:$0xf]
    %v2974 = vld [vmem:[#allocation11 + $0xa4] sm:$0xf]
    %v2975 = vld [vmem:[#allocation11 + $0xa8] sm:$0xf]
    %v2976 = vld [vmem:[#allocation11 + $0xac] sm:$0xf]
    %v2977 = vld [vmem:[#allocation11 + $0xb0] sm:$0xf]
    %v2978 = vld [vmem:[#allocation11 + $0xb4] sm:$0xf]
    %v2979 = vld [vmem:[#allocation11 + $0xb8] sm:$0xf]
    %v2980 = vld [vmem:[#allocation11 + $0xbc] sm:$0xf]
    %v2981 = vld [vmem:[#allocation11 + $0xc0] sm:$0xf]
    %v2982 = vld [vmem:[#allocation11 + $0xc4] sm:$0xf]
    %v2983 = vld [vmem:[#allocation11 + $0xc8] sm:$0xf]
    %v2984 = vld [vmem:[#allocation11 + $0xcc] sm:$0xf]
    %v2985 = vld [vmem:[#allocation11 + $0xd0] sm:$0xf]
    %v2986 = vld [vmem:[#allocation11 + $0xd4] sm:$0xf]
    %v2987 = vld [vmem:[#allocation11 + $0xd8] sm:$0xf]
    %v2988 = vld [vmem:[#allocation11 + $0xdc] sm:$0xf]
    %v2989 = vld [vmem:[#allocation11 + $0xe0] sm:$0xf]
    %v2990 = vld [vmem:[#allocation11 + $0xe4] sm:$0xf]
    %v2991 = vld [vmem:[#allocation11 + $0xe8] sm:$0xf]
    %v2992 = vld [vmem:[#allocation11 + $0xec] sm:$0xf]
    %v2993 = vld [vmem:[#allocation11 + $0xf0] sm:$0xf]
    %v2994 = vld [vmem:[#allocation11 + $0xf4] sm:$0xf]
    %v2995 = vld [vmem:[#allocation11 + $0xf8] sm:$0xf]
    %v2996 = vld [vmem:[#allocation11 + $0xfc] sm:$0xf]
    %v2997 = vld [vmem:[%s6] sm:$0x1]
    %v2999 = vperm.slane %v2997, 0
    %v3065 = vunpack.c.l.b16 %v2933
    %v3066 = vunpack.c.l.b16 %v2934
    %v3067 = vunpack.c.l.b16 %v2935
    %v3068 = vunpack.c.l.b16 %v2936
    %v3069 = vunpack.c.l.b16 %v2937
    %v3070 = vunpack.c.l.b16 %v2938
    %v3071 = vunpack.c.l.b16 %v2939
    %v3072 = vunpack.c.l.b16 %v2940
    %v3073 = vunpack.c.l.b16 %v2941
    %v3074 = vunpack.c.l.b16 %v2942
    %v3075 = vunpack.c.l.b16 %v2943
    %v3076 = vunpack.c.l.b16 %v2944
    %v3077 = vunpack.c.l.b16 %v2945
    %v3078 = vunpack.c.l.b16 %v2946
    %v3079 = vunpack.c.l.b16 %v2947
    %v3080 = vunpack.c.l.b16 %v2948
    %v3081 = vunpack.c.l.b16 %v2949
    %v3082 = vunpack.c.l.b16 %v2950
    %v3083 = vunpack.c.l.b16 %v2951
    %v3084 = vunpack.c.l.b16 %v2952
    %v3085 = vunpack.c.l.b16 %v2953
    %v3086 = vunpack.c.l.b16 %v2954
    %v3087 = vunpack.c.l.b16 %v2955
    %v3088 = vunpack.c.l.b16 %v2956
    %v3089 = vunpack.c.l.b16 %v2957
    %v3090 = vunpack.c.l.b16 %v2958
    %v3091 = vunpack.c.l.b16 %v2959
    %v3092 = vunpack.c.l.b16 %v2960
    %v3093 = vunpack.c.l.b16 %v2961
    %v3094 = vunpack.c.l.b16 %v2962
    %v3095 = vunpack.c.l.b16 %v2963
    %v3096 = vunpack.c.l.b16 %v2964
    %v3097 = vunpack.c.l.b16 %v2965
    %v3098 = vunpack.c.l.b16 %v2966
    %v3099 = vunpack.c.l.b16 %v2967
    %v3100 = vunpack.c.l.b16 %v2968
    %v3101 = vunpack.c.l.b16 %v2969
    %v3102 = vunpack.c.l.b16 %v2970
    %v3103 = vunpack.c.l.b16 %v2971
    %v3104 = vunpack.c.l.b16 %v2972
    %v3105 = vunpack.c.l.b16 %v2973
    %v3106 = vunpack.c.l.b16 %v2974
    %v3107 = vunpack.c.l.b16 %v2975
    %v3108 = vunpack.c.l.b16 %v2976
    %v3109 = vunpack.c.l.b16 %v2977
    %v3110 = vunpack.c.l.b16 %v2978
    %v3111 = vunpack.c.l.b16 %v2979
    %v3112 = vunpack.c.l.b16 %v2980
    %v3113 = vunpack.c.l.b16 %v2981
    %v3114 = vunpack.c.l.b16 %v2982
    %v3115 = vunpack.c.l.b16 %v2983
    %v3116 = vunpack.c.l.b16 %v2984
    %v3117 = vunpack.c.l.b16 %v2985
    %v3118 = vunpack.c.l.b16 %v2986
    %v3119 = vunpack.c.l.b16 %v2987
    %v3120 = vunpack.c.l.b16 %v2988
    %v3121 = vunpack.c.l.b16 %v2989
    %v3122 = vunpack.c.l.b16 %v2990
    %v3123 = vunpack.c.l.b16 %v2991
    %v3124 = vunpack.c.l.b16 %v2992
    %v3125 = vunpack.c.l.b16 %v2993
    %v3126 = vunpack.c.l.b16 %v2994
    %v3127 = vunpack.c.l.b16 %v2995
    %v3128 = vunpack.c.l.b16 %v2996
    %v3129 = vpack.c.b16 %v3066, %v3065
    %v3130 = vpack.c.b16 %v3068, %v3067
    %v3131 = vpack.c.b16 %v3070, %v3069
    %v3132 = vpack.c.b16 %v3072, %v3071
    %v3133 = vpack.c.b16 %v3074, %v3073
    %v3134 = vpack.c.b16 %v3076, %v3075
    %v3135 = vpack.c.b16 %v3078, %v3077
    %v3136 = vpack.c.b16 %v3080, %v3079
    %v3137 = vpack.c.b16 %v3082, %v3081
    %v3138 = vpack.c.b16 %v3084, %v3083
    %v3139 = vpack.c.b16 %v3086, %v3085
    %v3140 = vpack.c.b16 %v3088, %v3087
    %v3141 = vpack.c.b16 %v3090, %v3089
    %v3142 = vpack.c.b16 %v3092, %v3091
    %v3143 = vpack.c.b16 %v3094, %v3093
    %v3144 = vpack.c.b16 %v3096, %v3095
    %v3145 = vpack.c.b16 %v3098, %v3097
    %v3146 = vpack.c.b16 %v3100, %v3099
    %v3147 = vpack.c.b16 %v3102, %v3101
    %v3148 = vpack.c.b16 %v3104, %v3103
    %v3149 = vpack.c.b16 %v3106, %v3105
    %v3150 = vpack.c.b16 %v3108, %v3107
    %v3151 = vpack.c.b16 %v3110, %v3109
    %v3152 = vpack.c.b16 %v3112, %v3111
    %v3153 = vpack.c.b16 %v3114, %v3113
    %v3154 = vpack.c.b16 %v3116, %v3115
    %v3155 = vpack.c.b16 %v3118, %v3117
    %v3156 = vpack.c.b16 %v3120, %v3119
    %v3157 = vpack.c.b16 %v3122, %v3121
    %v3158 = vpack.c.b16 %v3124, %v3123
    %v3159 = vpack.c.b16 %v3126, %v3125
    %v3160 = vpack.c.b16 %v3128, %v3127
    %3193 = vmatpush.bf16.msra.mxu0 %v3136
    %3194 = vmatpush.bf16.msra.mxu0 %v3135
    %3195 = vmatpush.bf16.msra.mxu0 %v3134
    %3196 = vmatpush.bf16.msra.mxu0 %v3133
    %3197 = vmatpush.bf16.msra.mxu0 %v3132
    %3198 = vmatpush.bf16.msra.mxu0 %v3131
    %3199 = vmatpush.bf16.msra.mxu0 %v3130
    %3200 = vmatpush.bf16.msra.mxu0 %v3129
    %3201 = vmatmul.bf16.gmra.mxu0 %v2929
    %v3202 = vpop.f32.mrf.mxu0
    %v3203 = vadd.f32 %v2999, %v3202
    %v3204 = vpop.f32.mrf.mxu0
    %v3205 = vadd.f32 %v2999, %v3204
    %3206 = vdwg.mxu0
    %3207 = vmatpush.bf16.msra.mxu0 %v3144
    %3208 = vmatpush.bf16.msra.mxu0 %v3143
    %3209 = vmatpush.bf16.msra.mxu0 %v3142
    %3210 = vmatpush.bf16.msra.mxu0 %v3141
    %3211 = vmatpush.bf16.msra.mxu0 %v3140
    %3212 = vmatpush.bf16.msra.mxu0 %v3139
    %3213 = vmatpush.bf16.msra.mxu0 %v3138
    %3214 = vmatpush.bf16.msra.mxu0 %v3137
    %3215 = vmatmul.bf16.gmra.mxu0 %v2930
    %v3216 = vpop.f32.mrf.mxu0
    %v3217 = vadd.f32 %v3203, %v3216
    %v3218 = vpop.f32.mrf.mxu0
    %v3219 = vadd.f32 %v3205, %v3218
    %3220 = vdwg.mxu0
    %3221 = vmatpush.bf16.msra.mxu0 %v3152
    %3222 = vmatpush.bf16.msra.mxu0 %v3151
    %3223 = vmatpush.bf16.msra.mxu0 %v3150
    %3224 = vmatpush.bf16.msra.mxu0 %v3149
    %3225 = vmatpush.bf16.msra.mxu0 %v3148
    %3226 = vmatpush.bf16.msra.mxu0 %v3147
    %3227 = vmatpush.bf16.msra.mxu0 %v3146
    %3228 = vmatpush.bf16.msra.mxu0 %v3145
    %3229 = vmatmul.bf16.gmra.mxu0 %v2931
    %v3230 = vpop.f32.mrf.mxu0
    %v3231 = vadd.f32 %v3217, %v3230
    %v3232 = vpop.f32.mrf.mxu0
    %v3233 = vadd.f32 %v3219, %v3232
    %3234 = vdwg.mxu0
    %3235 = vmatpush.bf16.msra.mxu0 %v3160
    %3236 = vmatpush.bf16.msra.mxu0 %v3159
    %3237 = vmatpush.bf16.msra.mxu0 %v3158
    %3238 = vmatpush.bf16.msra.mxu0 %v3157
    %3239 = vmatpush.bf16.msra.mxu0 %v3156
    %3240 = vmatpush.bf16.msra.mxu0 %v3155
    %3241 = vmatpush.bf16.msra.mxu0 %v3154
    %3242 = vmatpush.bf16.msra.mxu0 %v3153
    %3243 = vmatmul.bf16.gmra.mxu0 %v2932
    %v3244 = vpop.f32.mrf.mxu0
    %v3245 = vadd.f32 %v3231, %v3244
    %v3246 = vpop.f32.mrf.mxu0
    %v3247 = vadd.f32 %v3233, %v3246
    %3248 = vdwg.mxu0
    %3249 = vst [vmem:[#allocation13] sm:$0xff] %v3245
    %3250 = vst [vmem:[#allocation13 + $0x8] sm:$0xff] %v3247
    // Predicated region
    $region54: #{tpu_custom_call.1} parent=1 // pred_check
      _
    $region55: #{tpu_custom_call.1} parent=1 // pred_check_branch
      %3252 = sbr.rel (0) target = $region57
    $region56: #{tpu_custom_call.1} parent=1 // pred_region
      %3254 = vsyncadd [#allocation4], 0
      %s3255 = sshll.u32 [#allocation13], 4
      %s3256 = int_to_ptr.vmem [resolvable:$true] %s3255
      %s3257 = sshll.u32 %s7, 4
      %s3258 = int_to_ptr.hbm [resolvable:$true] %s3257
      %3263 = dma.vmem_to_hbm [thread:$0]  %s3256, 256, %s3258, [#allocation4], 128, 128, 8
    $region57: #{tpu_custom_call.1} parent=1 // pred_fallthru
      _
    // Predicated region
    $region58: #{tpu_custom_call.1} parent=1 // pred_check
      _
    $region59: #{tpu_custom_call.1} parent=1 // pred_check_branch
      %3265 = sbr.rel (0) target = $region61
    $region60: #{tpu_custom_call.1} parent=1 // pred_region
      %3267 = dma.done [#allocation4], 256
    $region61: #{tpu_custom_call.1} parent=1 // pred_fallthru
      _
    %3268 = vsyncpa [#allocation3], 1
    %3269 = vsyncpa [#allocation6], 1
    %3270 = vsyncpa [#allocation9], 1
    %3271 = vsyncpa [#allocation12], 1
    %3272 = vsyncpa [#allocation4], 1

</llo_original>
